<compile_context>
chip_gen: v5e
topology: v5e:2x2
jax: 0.10.0
libtpu: 0.0.40
codegen_flags: <defaults>
</compile_context>

<pallas_src>
import jax
import jax.numpy as jnp
from jax.experimental import pallas as pl
from jax.experimental.pallas import tpu as pltpu

_SUBLANE = 8
_LANE = 128


def _round_up(v, m):
    return ((v + m - 1) // m) * m


# ----------------------------- Pallas kernel ------------------------------ #
def polya_tree_kernel(x_ref, lo_ref, hi_ref, logb_ref, out_ref, acc_ref):
    """Select-and-accumulate over nodes, deferred reduction.

    x_ref    : (tile_n, dim_pad)   streamed batch tile
    lo_ref   : (n_betas, dim_pad)  node lower bounds (resident)
    hi_ref   : (n_betas, dim_pad)  node upper bounds (resident)
    logb_ref : (n_betas, dim_pad)  log(beta samples) (resident, 0 in pad lanes)
    out_ref  : (8, dim_pad)        per-parallel-slice partial sums (written once)
    acc_ref  : (tile_n, dim_pad)   VMEM scratch, per-element running partials
    """
    t = pl.program_id(1)

    @pl.when(t == 0)
    def _init():
        acc_ref[...] = jnp.zeros_like(acc_ref)

    x = x_ref[...]                                     # (tile_n, dim_pad) f32
    nb = lo_ref.shape[0]                               # 2**L - 1, small, unrolled

    contrib = jnp.zeros_like(x)
    for node in range(nb):
        lo = lo_ref[node:node + 1, :]                  # (1, dim_pad)
        hi = hi_ref[node:node + 1, :]
        lb = logb_ref[node:node + 1, :]
        inside = jnp.logical_and(x >= lo, x <= hi)
        contrib = contrib + jnp.where(inside, lb, 0.0)  # pure VPU select + add

    acc_ref[...] += contrib                            # no reduction in hot loop

    @pl.when(t == pl.num_programs(1) - 1)
    def _finalize():
        tn, dp = acc_ref.shape
        # Fold the batch axis down to 8 sublanes with plain vector adds
        # (static, sublane-aligned slices -> no XLU reduce, no masked stores).
        partial = jnp.zeros((_SUBLANE, dp), jnp.float32)
        for s in range(tn // _SUBLANE):
            partial = partial + acc_ref[s * _SUBLANE:(s + 1) * _SUBLANE, :]
        out_ref[...] = partial


def polya_tree_loglik(x, lowers, uppers, log_samples, *, tile_n=1024,
                      num_parallel=2):
    n, dim = x.shape
    nb = lowers.shape[0]

    dim_pad = _round_up(dim, _LANE)
    # shrink the batch tile when n is small so padding stays minimal
    tile_n = max(_SUBLANE,
                 min(tile_n, _round_up(pl.cdiv(n, num_parallel), _SUBLANE)))
    num_tiles = pl.cdiv(n, num_parallel * tile_n)      # steps per parallel slice
    n_pad = num_parallel * num_tiles * tile_n

    # Batch padding uses a sentinel outside [0,1] (never inside any interval);
    # dim padding of log_samples is 0 so padded lanes contribute nothing.
    x_p = jnp.full((n_pad, dim_pad), 2.0, jnp.float32)
    x_p = x_p.at[:n, :dim].set(x.astype(jnp.float32))
    lo_p = jnp.zeros((nb, dim_pad), jnp.float32).at[:, :dim].set(lowers)
    hi_p = jnp.ones((nb, dim_pad), jnp.float32).at[:, :dim].set(uppers)
    lb_p = jnp.zeros((nb, dim_pad), jnp.float32).at[:, :dim].set(log_samples)

    grid = (num_parallel, num_tiles)

    out = pl.pallas_call(
        polya_tree_kernel,
        out_shape=jax.ShapeDtypeStruct((num_parallel * _SUBLANE, dim_pad),
                                       jnp.float32),
        grid_spec=pltpu.PrefetchScalarGridSpec(
            num_scalar_prefetch=0,
            grid=grid,
            in_specs=[
                pl.BlockSpec((tile_n, dim_pad),
                             lambda p, t: (p * num_tiles + t, 0)),   # streamed x
                pl.BlockSpec((nb, dim_pad), lambda p, t: (0, 0)),    # lowers
                pl.BlockSpec((nb, dim_pad), lambda p, t: (0, 0)),    # uppers
                pl.BlockSpec((nb, dim_pad), lambda p, t: (0, 0)),    # log samples
            ],
            out_specs=pl.BlockSpec((_SUBLANE, dim_pad), lambda p, t: (p, 0)),
            scratch_shapes=[pltpu.VMEM((tile_n, dim_pad), jnp.float32)],
        ),
        compiler_params=pltpu.CompilerParams(
            dimension_semantics=("parallel", "arbitrary"),
            vmem_limit_bytes=32 << 20,
        ),
    )(x_p, lo_p, hi_p, lb_p)
    # tiny final reduce of (num_parallel*8, dim_pad) partials in plain XLA
    return jnp.sum(out)


# ------------------------------- glue JAX --------------------------------- #
def build_intervals(samples):
    """Tree.get_intervals: per-node [lower, upper] from beta splits.

    samples: (n_betas, dim). Node 0 = [0,1]; children recursion exactly as in
    the reference Tree class (right-child upper uses the same
    lower + beta*len + (1-beta)*len formula to match reference rounding).
    """
    nb, dim = samples.shape
    lowers = [None] * nb
    uppers = [None] * nb
    lowers[0] = jnp.zeros((dim,), jnp.float32)
    uppers[0] = jnp.ones((dim,), jnp.float32)
    for n in range(1, nb):
        p = (n - 1) // 2
        beta = samples[p]
        length = uppers[p] - lowers[p]
        split = lowers[p] + beta * length
        if n == 2 * p + 1:                      # left child
            lowers[n] = lowers[p]
            uppers[n] = split
        else:                                   # right child
            lowers[n] = split
            uppers[n] = lowers[p] + beta * length + (1.0 - beta) * length
    return jnp.stack(lowers, axis=0), jnp.stack(uppers, axis=0)


class PolyaTreePallas:
    """Deterministic re-implementation of PolyaTree.forward."""

    def __init__(self, L, dim, key):
        self.L = L
        self.dim = dim
        self.n_betas = 2 ** L - 1
        k1, k2 = jax.random.split(key)
        # deterministic parameter init (> 0, valid Beta concentrations)
        self.shapes = 1.0 + jax.random.uniform(k1, (self.n_betas, dim),
                                               dtype=jnp.float32)
        self.scales = 1.0 + jax.random.uniform(k2, (self.n_betas, dim),
                                               dtype=jnp.float32)

    def forward(self, x, sample_key, *, tile_n=1024, num_parallel=2):
        samples = jax.random.beta(sample_key, self.shapes, self.scales,
                                  dtype=jnp.float32)
        lowers, uppers = build_intervals(samples)
        # guard against log(0) if a beta sample underflows
        log_samples = jnp.log(jnp.maximum(samples, 1e-30))
        return polya_tree_loglik(x.astype(jnp.float32), lowers, uppers,
                                 log_samples, tile_n=tile_n,
                                 num_parallel=num_parallel)

    # TODO(synk): kl() of the reference is not part of forward; not implemented.


# --------------------------------- main ------------------------------------ #
if __name__ == "__main__":
    L = 3          # -> n_betas = 7
    dim = 16
    n = 1000
    key = jax.random.PRNGKey(0)
    k_param, k_sample, k_x = jax.random.split(key, 3)

    x = jax.random.uniform(k_x, (n, dim), dtype=jnp.float32)   # in [0, 1]

    model = PolyaTreePallas(L, dim, k_param)
    loglik = model.forward(x, k_sample)
    loglik = jax.block_until_ready(loglik)

    # pure-JAX reference check of the hot path
    samples = jax.random.beta(k_sample, model.shapes, model.scales,
                              dtype=jnp.float32)
    lo_ref, hi_ref = build_intervals(samples)
    within = jnp.logical_and(x[:, None, :] >= lo_ref[None],
                             x[:, None, :] <= hi_ref[None])
    a_s = within.astype(jnp.float32).sum(0)                    # (n_betas, dim)
    ref = jnp.sum(a_s * jnp.log(jnp.maximum(samples, 1e-30)))
    assert jnp.allclose(loglik, ref, rtol=1e-4, atol=1e-2), (loglik, ref)

    print("KERNEL_OK")
</pallas_src>

<mosaic_0001>
module attributes {stable_mosaic.version = 11 : i64} {
  func.func @polya_tree_kernel(%arg0: i32, %arg1: i32, %arg2: memref<504x128xf32, #tpu.memory_space<vmem>>, %arg3: memref<7x128xf32, #tpu.memory_space<vmem>>, %arg4: memref<7x128xf32, #tpu.memory_space<vmem>>, %arg5: memref<7x128xf32, #tpu.memory_space<vmem>>, %arg6: memref<8x128xf32, #tpu.memory_space<vmem>>, %arg7: memref<504x128xf32, #tpu.memory_space<vmem>>) attributes {dimension_semantics = [#tpu.dimension_semantics<parallel>, #tpu.dimension_semantics<arbitrary>], iteration_bounds = array<i64: 2, 1>, scalar_prefetch = 0 : i64, scratch_operands = 1 : i64, tpu.core_type = #tpu.core_type<tc>, window_params = [{transform_indices = @transform_0, window_bounds = array<i64: 504, 128>}, {pipeline_mode = #tpu.pipeline_mode<synchronous>, transform_indices = @transform_1, window_bounds = array<i64: 7, 128>}, {pipeline_mode = #tpu.pipeline_mode<synchronous>, transform_indices = @transform_2, window_bounds = array<i64: 7, 128>}, {pipeline_mode = #tpu.pipeline_mode<synchronous>, transform_indices = @transform_3, window_bounds = array<i64: 7, 128>}, {transform_indices = @transform_4, window_bounds = array<i64: 8, 128>}]} {
    %c0_i32 = arith.constant 0 : i32
    %0 = arith.cmpi eq, %arg1, %c0_i32 : i32
    %1 = arith.extui %0 : i1 to i32
    %c0_i32_0 = arith.constant 0 : i32
    %2 = arith.cmpi ne, %1, %c0_i32_0 : i32
    scf.if %2 {
      %cst_51 = arith.constant 0.000000e+00 : f32
      %102 = vector.broadcast %cst_51 : f32 to vector<504x128xf32>
      %c0_52 = arith.constant 0 : index
      %c0_53 = arith.constant 0 : index
      %103 = vector.load %arg7[%c0_52, %c0_53] : memref<504x128xf32, #tpu.memory_space<vmem>>, vector<504x128xf32>
      tpu.vector_store %arg7[%c0_52, %c0_53], %102 {strides = array<i32>} : memref<504x128xf32, #tpu.memory_space<vmem>>, vector<504x128xf32>,
    } else {
    }
    %c0 = arith.constant 0 : index
    %c0_1 = arith.constant 0 : index
    %3 = vector.load %arg2[%c0, %c0_1] : memref<504x128xf32, #tpu.memory_space<vmem>>, vector<504x128xf32>
    %cst = arith.constant 0.000000e+00 : f32
    %4 = vector.broadcast %cst : f32 to vector<504x128xf32>
    %c0_2 = arith.constant 0 : index
    %c0_3 = arith.constant 0 : index
    %5 = vector.load %arg3[%c0_2, %c0_3] : memref<7x128xf32, #tpu.memory_space<vmem>>, vector<1x128xf32>
    %c0_4 = arith.constant 0 : index
    %c0_5 = arith.constant 0 : index
    %6 = vector.load %arg4[%c0_4, %c0_5] : memref<7x128xf32, #tpu.memory_space<vmem>>, vector<1x128xf32>
    %c0_6 = arith.constant 0 : index
    %c0_7 = arith.constant 0 : index
    %7 = vector.load %arg5[%c0_6, %c0_7] : memref<7x128xf32, #tpu.memory_space<vmem>>, vector<1x128xf32>
    %8 = vector.broadcast %5 : vector<1x128xf32> to vector<504x128xf32>
    %9 = arith.cmpf oge, %3, %8 : vector<504x128xf32>
    %10 = vector.broadcast %6 : vector<1x128xf32> to vector<504x128xf32>
    %11 = arith.cmpf ole, %3, %10 : vector<504x128xf32>
    %12 = arith.andi %9, %11 : vector<504x128xi1>
    %cst_8 = arith.constant 0.000000e+00 : f32
    %13 = vector.shape_cast %7 : vector<1x128xf32> to vector<1x128xf32>
    %14 = vector.broadcast %13 : vector<1x128xf32> to vector<504x128xf32>
    %15 = vector.broadcast %cst_8 : f32 to vector<504x128xf32>
    %16 = arith.select %12, %14, %15 : vector<504x128xi1>, vector<504x128xf32>
    %17 = arith.addf %4, %16 : vector<504x128xf32>
    %c1 = arith.constant 1 : index
    %c0_9 = arith.constant 0 : index
    %18 = vector.load %arg3[%c1, %c0_9] : memref<7x128xf32, #tpu.memory_space<vmem>>, vector<1x128xf32>
    %c1_10 = arith.constant 1 : index
    %c0_11 = arith.constant 0 : index
    %19 = vector.load %arg4[%c1_10, %c0_11] : memref<7x128xf32, #tpu.memory_space<vmem>>, vector<1x128xf32>
    %c1_12 = arith.constant 1 : index
    %c0_13 = arith.constant 0 : index
    %20 = vector.load %arg5[%c1_12, %c0_13] : memref<7x128xf32, #tpu.memory_space<vmem>>, vector<1x128xf32>
    %21 = vector.broadcast %18 : vector<1x128xf32> to vector<504x128xf32>
    %22 = arith.cmpf oge, %3, %21 : vector<504x128xf32>
    %23 = vector.broadcast %19 : vector<1x128xf32> to vector<504x128xf32>
    %24 = arith.cmpf ole, %3, %23 : vector<504x128xf32>
    %25 = arith.andi %22, %24 : vector<504x128xi1>
    %cst_14 = arith.constant 0.000000e+00 : f32
    %26 = vector.shape_cast %20 : vector<1x128xf32> to vector<1x128xf32>
    %27 = vector.broadcast %26 : vector<1x128xf32> to vector<504x128xf32>
    %28 = vector.broadcast %cst_14 : f32 to vector<504x128xf32>
    %29 = arith.select %25, %27, %28 : vector<504x128xi1>, vector<504x128xf32>
    %30 = arith.addf %17, %29 : vector<504x128xf32>
    %c2 = arith.constant 2 : index
    %c0_15 = arith.constant 0 : index
    %31 = vector.load %arg3[%c2, %c0_15] : memref<7x128xf32, #tpu.memory_space<vmem>>, vector<1x128xf32>
    %c2_16 = arith.constant 2 : index
    %c0_17 = arith.constant 0 : index
    %32 = vector.load %arg4[%c2_16, %c0_17] : memref<7x128xf32, #tpu.memory_space<vmem>>, vector<1x128xf32>
    %c2_18 = arith.constant 2 : index
    %c0_19 = arith.constant 0 : index
    %33 = vector.load %arg5[%c2_18, %c0_19] : memref<7x128xf32, #tpu.memory_space<vmem>>, vector<1x128xf32>
    %34 = vector.broadcast %31 : vector<1x128xf32> to vector<504x128xf32>
    %35 = arith.cmpf oge, %3, %34 : vector<504x128xf32>
    %36 = vector.broadcast %32 : vector<1x128xf32> to vector<504x128xf32>
    %37 = arith.cmpf ole, %3, %36 : vector<504x128xf32>
    %38 = arith.andi %35, %37 : vector<504x128xi1>
    %cst_20 = arith.constant 0.000000e+00 : f32
    %39 = vector.shape_cast %33 : vector<1x128xf32> to vector<1x128xf32>
    %40 = vector.broadcast %39 : vector<1x128xf32> to vector<504x128xf32>
    %41 = vector.broadcast %cst_20 : f32 to vector<504x128xf32>
    %42 = arith.select %38, %40, %41 : vector<504x128xi1>, vector<504x128xf32>
    %43 = arith.addf %30, %42 : vector<504x128xf32>
    %c3 = arith.constant 3 : index
    %c0_21 = arith.constant 0 : index
    %44 = vector.load %arg3[%c3, %c0_21] : memref<7x128xf32, #tpu.memory_space<vmem>>, vector<1x128xf32>
    %c3_22 = arith.constant 3 : index
    %c0_23 = arith.constant 0 : index
    %45 = vector.load %arg4[%c3_22, %c0_23] : memref<7x128xf32, #tpu.memory_space<vmem>>, vector<1x128xf32>
    %c3_24 = arith.constant 3 : index
    %c0_25 = arith.constant 0 : index
    %46 = vector.load %arg5[%c3_24, %c0_25] : memref<7x128xf32, #tpu.memory_space<vmem>>, vector<1x128xf32>
    %47 = vector.broadcast %44 : vector<1x128xf32> to vector<504x128xf32>
    %48 = arith.cmpf oge, %3, %47 : vector<504x128xf32>
    %49 = vector.broadcast %45 : vector<1x128xf32> to vector<504x128xf32>
    %50 = arith.cmpf ole, %3, %49 : vector<504x128xf32>
    %51 = arith.andi %48, %50 : vector<504x128xi1>
    %cst_26 = arith.constant 0.000000e+00 : f32
    %52 = vector.shape_cast %46 : vector<1x128xf32> to vector<1x128xf32>
    %53 = vector.broadcast %52 : vector<1x128xf32> to vector<504x128xf32>
    %54 = vector.broadcast %cst_26 : f32 to vector<504x128xf32>
    %55 = arith.select %51, %53, %54 : vector<504x128xi1>, vector<504x128xf32>
    %56 = arith.addf %43, %55 : vector<504x128xf32>
    %c4 = arith.constant 4 : index
    %c0_27 = arith.constant 0 : index
    %57 = vector.load %arg3[%c4, %c0_27] : memref<7x128xf32, #tpu.memory_space<vmem>>, vector<1x128xf32>
    %c4_28 = arith.constant 4 : index
    %c0_29 = arith.constant 0 : index
    %58 = vector.load %arg4[%c4_28, %c0_29] : memref<7x128xf32, #tpu.memory_space<vmem>>, vector<1x128xf32>
    %c4_30 = arith.constant 4 : index
    %c0_31 = arith.constant 0 : index
    %59 = vector.load %arg5[%c4_30, %c0_31] : memref<7x128xf32, #tpu.memory_space<vmem>>, vector<1x128xf32>
    %60 = vector.broadcast %57 : vector<1x128xf32> to vector<504x128xf32>
    %61 = arith.cmpf oge, %3, %60 : vector<504x128xf32>
    %62 = vector.broadcast %58 : vector<1x128xf32> to vector<504x128xf32>
    %63 = arith.cmpf ole, %3, %62 : vector<504x128xf32>
    %64 = arith.andi %61, %63 : vector<504x128xi1>
    %cst_32 = arith.constant 0.000000e+00 : f32
    %65 = vector.shape_cast %59 : vector<1x128xf32> to vector<1x128xf32>
    %66 = vector.broadcast %65 : vector<1x128xf32> to vector<504x128xf32>
    %67 = vector.broadcast %cst_32 : f32 to vector<504x128xf32>
    %68 = arith.select %64, %66, %67 : vector<504x128xi1>, vector<504x128xf32>
    %69 = arith.addf %56, %68 : vector<504x128xf32>
    %c5 = arith.constant 5 : index
    %c0_33 = arith.constant 0 : index
    %70 = vector.load %arg3[%c5, %c0_33] : memref<7x128xf32, #tpu.memory_space<vmem>>, vector<1x128xf32>
    %c5_34 = arith.constant 5 : index
    %c0_35 = arith.constant 0 : index
    %71 = vector.load %arg4[%c5_34, %c0_35] : memref<7x128xf32, #tpu.memory_space<vmem>>, vector<1x128xf32>
    %c5_36 = arith.constant 5 : index
    %c0_37 = arith.constant 0 : index
    %72 = vector.load %arg5[%c5_36, %c0_37] : memref<7x128xf32, #tpu.memory_space<vmem>>, vector<1x128xf32>
    %73 = vector.broadcast %70 : vector<1x128xf32> to vector<504x128xf32>
    %74 = arith.cmpf oge, %3, %73 : vector<504x128xf32>
    %75 = vector.broadcast %71 : vector<1x128xf32> to vector<504x128xf32>
    %76 = arith.cmpf ole, %3, %75 : vector<504x128xf32>
    %77 = arith.andi %74, %76 : vector<504x128xi1>
    %cst_38 = arith.constant 0.000000e+00 : f32
    %78 = vector.shape_cast %72 : vector<1x128xf32> to vector<1x128xf32>
    %79 = vector.broadcast %78 : vector<1x128xf32> to vector<504x128xf32>
    %80 = vector.broadcast %cst_38 : f32 to vector<504x128xf32>
    %81 = arith.select %77, %79, %80 : vector<504x128xi1>, vector<504x128xf32>
    %82 = arith.addf %69, %81 : vector<504x128xf32>
    %c6 = arith.constant 6 : index
    %c0_39 = arith.constant 0 : index
    %83 = vector.load %arg3[%c6, %c0_39] : memref<7x128xf32, #tpu.memory_space<vmem>>, vector<1x128xf32>
    %c6_40 = arith.constant 6 : index
    %c0_41 = arith.constant 0 : index
    %84 = vector.load %arg4[%c6_40, %c0_41] : memref<7x128xf32, #tpu.memory_space<vmem>>, vector<1x128xf32>
    %c6_42 = arith.constant 6 : index
    %c0_43 = arith.constant 0 : index
    %85 = vector.load %arg5[%c6_42, %c0_43] : memref<7x128xf32, #tpu.memory_space<vmem>>, vector<1x128xf32>
    %86 = vector.broadcast %83 : vector<1x128xf32> to vector<504x128xf32>
    %87 = arith.cmpf oge, %3, %86 : vector<504x128xf32>
    %88 = vector.broadcast %84 : vector<1x128xf32> to vector<504x128xf32>
    %89 = arith.cmpf ole, %3, %88 : vector<504x128xf32>
    %90 = arith.andi %87, %89 : vector<504x128xi1>
    %cst_44 = arith.constant 0.000000e+00 : f32
    %91 = vector.shape_cast %85 : vector<1x128xf32> to vector<1x128xf32>
    %92 = vector.broadcast %91 : vector<1x128xf32> to vector<504x128xf32>
    %93 = vector.broadcast %cst_44 : f32 to vector<504x128xf32>
    %94 = arith.select %90, %92, %93 : vector<504x128xi1>, vector<504x128xf32>
    %95 = arith.addf %82, %94 : vector<504x128xf32>
    %c0_45 = arith.constant 0 : index
    %c0_46 = arith.constant 0 : index
    %96 = vector.load %arg7[%c0_45, %c0_46] : memref<504x128xf32, #tpu.memory_space<vmem>>, vector<504x128xf32>
    %97 = arith.addf %96, %95 : vector<504x128xf32>
    %c0_47 = arith.constant 0 : index
    %c0_48 = arith.constant 0 : index
    %98 = vector.load %arg7[%c0_47, %c0_48] : memref<504x128xf32, #tpu.memory_space<vmem>>, vector<504x128xf32>
    tpu.vector_store %arg7[%c0_47, %c0_48], %97 {strides = array<i32>} : memref<504x128xf32, #tpu.memory_space<vmem>>, vector<504x128xf32>,
    %c0_i32_49 = arith.constant 0 : i32
    %99 = arith.cmpi eq, %arg1, %c0_i32_49 : i32
    %100 = arith.extui %99 : i1 to i32
    %c0_i32_50 = arith.constant 0 : i32
    %101 = arith.cmpi ne, %100, %c0_i32_50 : i32
    scf.if %101 {
      %cst_51 = arith.constant 0.000000e+00 : f32
      %102 = vector.broadcast %cst_51 : f32 to vector<8x128xf32>
      %c0_52 = arith.constant 0 : index
      %c0_53 = arith.constant 0 : index
      %103 = vector.load %arg7[%c0_52, %c0_53] : memref<504x128xf32, #tpu.memory_space<vmem>>, vector<8x128xf32>
      %104 = arith.addf %102, %103 : vector<8x128xf32>
      %c8 = arith.constant 8 : index
      %c0_54 = arith.constant 0 : index
      %105 = vector.load %arg7[%c8, %c0_54] : memref<504x128xf32, #tpu.memory_space<vmem>>, vector<8x128xf32>
      %106 = arith.addf %104, %105 : vector<8x128xf32>
      %c16 = arith.constant 16 : index
      %c0_55 = arith.constant 0 : index
      %107 = vector.load %arg7[%c16, %c0_55] : memref<504x128xf32, #tpu.memory_space<vmem>>, vector<8x128xf32>
      %108 = arith.addf %106, %107 : vector<8x128xf32>
      %c24 = arith.constant 24 : index
      %c0_56 = arith.constant 0 : index
      %109 = vector.load %arg7[%c24, %c0_56] : memref<504x128xf32, #tpu.memory_space<vmem>>, vector<8x128xf32>
      %110 = arith.addf %108, %109 : vector<8x128xf32>
      %c32 = arith.constant 32 : index
      %c0_57 = arith.constant 0 : index
      %111 = vector.load %arg7[%c32, %c0_57] : memref<504x128xf32, #tpu.memory_space<vmem>>, vector<8x128xf32>
      %112 = arith.addf %110, %111 : vector<8x128xf32>
      %c40 = arith.constant 40 : index
      %c0_58 = arith.constant 0 : index
      %113 = vector.load %arg7[%c40, %c0_58] : memref<504x128xf32, #tpu.memory_space<vmem>>, vector<8x128xf32>
      %114 = arith.addf %112, %113 : vector<8x128xf32>
      %c48 = arith.constant 48 : index
      %c0_59 = arith.constant 0 : index
      %115 = vector.load %arg7[%c48, %c0_59] : memref<504x128xf32, #tpu.memory_space<vmem>>, vector<8x128xf32>
      %116 = arith.addf %114, %115 : vector<8x128xf32>
      %c56 = arith.constant 56 : index
      %c0_60 = arith.constant 0 : index
      %117 = vector.load %arg7[%c56, %c0_60] : memref<504x128xf32, #tpu.memory_space<vmem>>, vector<8x128xf32>
      %118 = arith.addf %116, %117 : vector<8x128xf32>
      %c64 = arith.constant 64 : index
      %c0_61 = arith.constant 0 : index
      %119 = vector.load %arg7[%c64, %c0_61] : memref<504x128xf32, #tpu.memory_space<vmem>>, vector<8x128xf32>
      %120 = arith.addf %118, %119 : vector<8x128xf32>
      %c72 = arith.constant 72 : index
      %c0_62 = arith.constant 0 : index
      %121 = vector.load %arg7[%c72, %c0_62] : memref<504x128xf32, #tpu.memory_space<vmem>>, vector<8x128xf32>
      %122 = arith.addf %120, %121 : vector<8x128xf32>
      %c80 = arith.constant 80 : index
      %c0_63 = arith.constant 0 : index
      %123 = vector.load %arg7[%c80, %c0_63] : memref<504x128xf32, #tpu.memory_space<vmem>>, vector<8x128xf32>
      %124 = arith.addf %122, %123 : vector<8x128xf32>
      %c88 = arith.constant 88 : index
      %c0_64 = arith.constant 0 : index
      %125 = vector.load %arg7[%c88, %c0_64] : memref<504x128xf32, #tpu.memory_space<vmem>>, vector<8x128xf32>
      %126 = arith.addf %124, %125 : vector<8x128xf32>
      %c96 = arith.constant 96 : index
      %c0_65 = arith.constant 0 : index
      %127 = vector.load %arg7[%c96, %c0_65] : memref<504x128xf32, #tpu.memory_space<vmem>>, vector<8x128xf32>
      %128 = arith.addf %126, %127 : vector<8x128xf32>
      %c104 = arith.constant 104 : index
      %c0_66 = arith.constant 0 : index
      %129 = vector.load %arg7[%c104, %c0_66] : memref<504x128xf32, #tpu.memory_space<vmem>>, vector<8x128xf32>
      %130 = arith.addf %128, %129 : vector<8x128xf32>
      %c112 = arith.constant 112 : index
      %c0_67 = arith.constant 0 : index
      %131 = vector.load %arg7[%c112, %c0_67] : memref<504x128xf32, #tpu.memory_space<vmem>>, vector<8x128xf32>
      %132 = arith.addf %130, %131 : vector<8x128xf32>
      %c120 = arith.constant 120 : index
      %c0_68 = arith.constant 0 : index
      %133 = vector.load %arg7[%c120, %c0_68] : memref<504x128xf32, #tpu.memory_space<vmem>>, vector<8x128xf32>
      %134 = arith.addf %132, %133 : vector<8x128xf32>
      %c128 = arith.constant 128 : index
      %c0_69 = arith.constant 0 : index
      %135 = vector.load %arg7[%c128, %c0_69] : memref<504x128xf32, #tpu.memory_space<vmem>>, vector<8x128xf32>
      %136 = arith.addf %134, %135 : vector<8x128xf32>
      %c136 = arith.constant 136 : index
      %c0_70 = arith.constant 0 : index
      %137 = vector.load %arg7[%c136, %c0_70] : memref<504x128xf32, #tpu.memory_space<vmem>>, vector<8x128xf32>
      %138 = arith.addf %136, %137 : vector<8x128xf32>
      %c144 = arith.constant 144 : index
      %c0_71 = arith.constant 0 : index
      %139 = vector.load %arg7[%c144, %c0_71] : memref<504x128xf32, #tpu.memory_space<vmem>>, vector<8x128xf32>
      %140 = arith.addf %138, %139 : vector<8x128xf32>
      %c152 = arith.constant 152 : index
      %c0_72 = arith.constant 0 : index
      %141 = vector.load %arg7[%c152, %c0_72] : memref<504x128xf32, #tpu.memory_space<vmem>>, vector<8x128xf32>
      %142 = arith.addf %140, %141 : vector<8x128xf32>
      %c160 = arith.constant 160 : index
      %c0_73 = arith.constant 0 : index
      %143 = vector.load %arg7[%c160, %c0_73] : memref<504x128xf32, #tpu.memory_space<vmem>>, vector<8x128xf32>
      %144 = arith.addf %142, %143 : vector<8x128xf32>
      %c168 = arith.constant 168 : index
      %c0_74 = arith.constant 0 : index
      %145 = vector.load %arg7[%c168, %c0_74] : memref<504x128xf32, #tpu.memory_space<vmem>>, vector<8x128xf32>
      %146 = arith.addf %144, %145 : vector<8x128xf32>
      %c176 = arith.constant 176 : index
      %c0_75 = arith.constant 0 : index
      %147 = vector.load %arg7[%c176, %c0_75] : memref<504x128xf32, #tpu.memory_space<vmem>>, vector<8x128xf32>
      %148 = arith.addf %146, %147 : vector<8x128xf32>
      %c184 = arith.constant 184 : index
      %c0_76 = arith.constant 0 : index
      %149 = vector.load %arg7[%c184, %c0_76] : memref<504x128xf32, #tpu.memory_space<vmem>>, vector<8x128xf32>
      %150 = arith.addf %148, %149 : vector<8x128xf32>
      %c192 = arith.constant 192 : index
      %c0_77 = arith.constant 0 : index
      %151 = vector.load %arg7[%c192, %c0_77] : memref<504x128xf32, #tpu.memory_space<vmem>>, vector<8x128xf32>
      %152 = arith.addf %150, %151 : vector<8x128xf32>
      %c200 = arith.constant 200 : index
      %c0_78 = arith.constant 0 : index
      %153 = vector.load %arg7[%c200, %c0_78] : memref<504x128xf32, #tpu.memory_space<vmem>>, vector<8x128xf32>
      %154 = arith.addf %152, %153 : vector<8x128xf32>
      %c208 = arith.constant 208 : index
      %c0_79 = arith.constant 0 : index
      %155 = vector.load %arg7[%c208, %c0_79] : memref<504x128xf32, #tpu.memory_space<vmem>>, vector<8x128xf32>
      %156 = arith.addf %154, %155 : vector<8x128xf32>
      %c216 = arith.constant 216 : index
      %c0_80 = arith.constant 0 : index
      %157 = vector.load %arg7[%c216, %c0_80] : memref<504x128xf32, #tpu.memory_space<vmem>>, vector<8x128xf32>
      %158 = arith.addf %156, %157 : vector<8x128xf32>
      %c224 = arith.constant 224 : index
      %c0_81 = arith.constant 0 : index
      %159 = vector.load %arg7[%c224, %c0_81] : memref<504x128xf32, #tpu.memory_space<vmem>>, vector<8x128xf32>
      %160 = arith.addf %158, %159 : vector<8x128xf32>
      %c232 = arith.constant 232 : index
      %c0_82 = arith.constant 0 : index
      %161 = vector.load %arg7[%c232, %c0_82] : memref<504x128xf32, #tpu.memory_space<vmem>>, vector<8x128xf32>
      %162 = arith.addf %160, %161 : vector<8x128xf32>
      %c240 = arith.constant 240 : index
      %c0_83 = arith.constant 0 : index
      %163 = vector.load %arg7[%c240, %c0_83] : memref<504x128xf32, #tpu.memory_space<vmem>>, vector<8x128xf32>
      %164 = arith.addf %162, %163 : vector<8x128xf32>
      %c248 = arith.constant 248 : index
      %c0_84 = arith.constant 0 : index
      %165 = vector.load %arg7[%c248, %c0_84] : memref<504x128xf32, #tpu.memory_space<vmem>>, vector<8x128xf32>
      %166 = arith.addf %164, %165 : vector<8x128xf32>
      %c256 = arith.constant 256 : index
      %c0_85 = arith.constant 0 : index
      %167 = vector.load %arg7[%c256, %c0_85] : memref<504x128xf32, #tpu.memory_space<vmem>>, vector<8x128xf32>
      %168 = arith.addf %166, %167 : vector<8x128xf32>
      %c264 = arith.constant 264 : index
      %c0_86 = arith.constant 0 : index
      %169 = vector.load %arg7[%c264, %c0_86] : memref<504x128xf32, #tpu.memory_space<vmem>>, vector<8x128xf32>
      %170 = arith.addf %168, %169 : vector<8x128xf32>
      %c272 = arith.constant 272 : index
      %c0_87 = arith.constant 0 : index
      %171 = vector.load %arg7[%c272, %c0_87] : memref<504x128xf32, #tpu.memory_space<vmem>>, vector<8x128xf32>
      %172 = arith.addf %170, %171 : vector<8x128xf32>
      %c280 = arith.constant 280 : index
      %c0_88 = arith.constant 0 : index
      %173 = vector.load %arg7[%c280, %c0_88] : memref<504x128xf32, #tpu.memory_space<vmem>>, vector<8x128xf32>
      %174 = arith.addf %172, %173 : vector<8x128xf32>
      %c288 = arith.constant 288 : index
      %c0_89 = arith.constant 0 : index
      %175 = vector.load %arg7[%c288, %c0_89] : memref<504x128xf32, #tpu.memory_space<vmem>>, vector<8x128xf32>
      %176 = arith.addf %174, %175 : vector<8x128xf32>
      %c296 = arith.constant 296 : index
      %c0_90 = arith.constant 0 : index
      %177 = vector.load %arg7[%c296, %c0_90] : memref<504x128xf32, #tpu.memory_space<vmem>>, vector<8x128xf32>
      %178 = arith.addf %176, %177 : vector<8x128xf32>
      %c304 = arith.constant 304 : index
      %c0_91 = arith.constant 0 : index
      %179 = vector.load %arg7[%c304, %c0_91] : memref<504x128xf32, #tpu.memory_space<vmem>>, vector<8x128xf32>
      %180 = arith.addf %178, %179 : vector<8x128xf32>
      %c312 = arith.constant 312 : index
      %c0_92 = arith.constant 0 : index
      %181 = vector.load %arg7[%c312, %c0_92] : memref<504x128xf32, #tpu.memory_space<vmem>>, vector<8x128xf32>
      %182 = arith.addf %180, %181 : vector<8x128xf32>
      %c320 = arith.constant 320 : index
      %c0_93 = arith.constant 0 : index
      %183 = vector.load %arg7[%c320, %c0_93] : memref<504x128xf32, #tpu.memory_space<vmem>>, vector<8x128xf32>
      %184 = arith.addf %182, %183 : vector<8x128xf32>
      %c328 = arith.constant 328 : index
      %c0_94 = arith.constant 0 : index
      %185 = vector.load %arg7[%c328, %c0_94] : memref<504x128xf32, #tpu.memory_space<vmem>>, vector<8x128xf32>
      %186 = arith.addf %184, %185 : vector<8x128xf32>
      %c336 = arith.constant 336 : index
      %c0_95 = arith.constant 0 : index
      %187 = vector.load %arg7[%c336, %c0_95] : memref<504x128xf32, #tpu.memory_space<vmem>>, vector<8x128xf32>
      %188 = arith.addf %186, %187 : vector<8x128xf32>
      %c344 = arith.constant 344 : index
      %c0_96 = arith.constant 0 : index
      %189 = vector.load %arg7[%c344, %c0_96] : memref<504x128xf32, #tpu.memory_space<vmem>>, vector<8x128xf32>
      %190 = arith.addf %188, %189 : vector<8x128xf32>
      %c352 = arith.constant 352 : index
      %c0_97 = arith.constant 0 : index
      %191 = vector.load %arg7[%c352, %c0_97] : memref<504x128xf32, #tpu.memory_space<vmem>>, vector<8x128xf32>
      %192 = arith.addf %190, %191 : vector<8x128xf32>
      %c360 = arith.constant 360 : index
      %c0_98 = arith.constant 0 : index
      %193 = vector.load %arg7[%c360, %c0_98] : memref<504x128xf32, #tpu.memory_space<vmem>>, vector<8x128xf32>
      %194 = arith.addf %192, %193 : vector<8x128xf32>
      %c368 = arith.constant 368 : index
      %c0_99 = arith.constant 0 : index
      %195 = vector.load %arg7[%c368, %c0_99] : memref<504x128xf32, #tpu.memory_space<vmem>>, vector<8x128xf32>
      %196 = arith.addf %194, %195 : vector<8x128xf32>
      %c376 = arith.constant 376 : index
      %c0_100 = arith.constant 0 : index
      %197 = vector.load %arg7[%c376, %c0_100] : memref<504x128xf32, #tpu.memory_space<vmem>>, vector<8x128xf32>
      %198 = arith.addf %196, %197 : vector<8x128xf32>
      %c384 = arith.constant 384 : index
      %c0_101 = arith.constant 0 : index
      %199 = vector.load %arg7[%c384, %c0_101] : memref<504x128xf32, #tpu.memory_space<vmem>>, vector<8x128xf32>
      %200 = arith.addf %198, %199 : vector<8x128xf32>
      %c392 = arith.constant 392 : index
      %c0_102 = arith.constant 0 : index
      %201 = vector.load %arg7[%c392, %c0_102] : memref<504x128xf32, #tpu.memory_space<vmem>>, vector<8x128xf32>
      %202 = arith.addf %200, %201 : vector<8x128xf32>
      %c400 = arith.constant 400 : index
      %c0_103 = arith.constant 0 : index
      %203 = vector.load %arg7[%c400, %c0_103] : memref<504x128xf32, #tpu.memory_space<vmem>>, vector<8x128xf32>
      %204 = arith.addf %202, %203 : vector<8x128xf32>
      %c408 = arith.constant 408 : index
      %c0_104 = arith.constant 0 : index
      %205 = vector.load %arg7[%c408, %c0_104] : memref<504x128xf32, #tpu.memory_space<vmem>>, vector<8x128xf32>
      %206 = arith.addf %204, %205 : vector<8x128xf32>
      %c416 = arith.constant 416 : index
      %c0_105 = arith.constant 0 : index
      %207 = vector.load %arg7[%c416, %c0_105] : memref<504x128xf32, #tpu.memory_space<vmem>>, vector<8x128xf32>
      %208 = arith.addf %206, %207 : vector<8x128xf32>
      %c424 = arith.constant 424 : index
      %c0_106 = arith.constant 0 : index
      %209 = vector.load %arg7[%c424, %c0_106] : memref<504x128xf32, #tpu.memory_space<vmem>>, vector<8x128xf32>
      %210 = arith.addf %208, %209 : vector<8x128xf32>
      %c432 = arith.constant 432 : index
      %c0_107 = arith.constant 0 : index
      %211 = vector.load %arg7[%c432, %c0_107] : memref<504x128xf32, #tpu.memory_space<vmem>>, vector<8x128xf32>
      %212 = arith.addf %210, %211 : vector<8x128xf32>
      %c440 = arith.constant 440 : index
      %c0_108 = arith.constant 0 : index
      %213 = vector.load %arg7[%c440, %c0_108] : memref<504x128xf32, #tpu.memory_space<vmem>>, vector<8x128xf32>
      %214 = arith.addf %212, %213 : vector<8x128xf32>
      %c448 = arith.constant 448 : index
      %c0_109 = arith.constant 0 : index
      %215 = vector.load %arg7[%c448, %c0_109] : memref<504x128xf32, #tpu.memory_space<vmem>>, vector<8x128xf32>
      %216 = arith.addf %214, %215 : vector<8x128xf32>
      %c456 = arith.constant 456 : index
      %c0_110 = arith.constant 0 : index
      %217 = vector.load %arg7[%c456, %c0_110] : memref<504x128xf32, #tpu.memory_space<vmem>>, vector<8x128xf32>
      %218 = arith.addf %216, %217 : vector<8x128xf32>
      %c464 = arith.constant 464 : index
      %c0_111 = arith.constant 0 : index
      %219 = vector.load %arg7[%c464, %c0_111] : memref<504x128xf32, #tpu.memory_space<vmem>>, vector<8x128xf32>
      %220 = arith.addf %218, %219 : vector<8x128xf32>
      %c472 = arith.constant 472 : index
      %c0_112 = arith.constant 0 : index
      %221 = vector.load %arg7[%c472, %c0_112] : memref<504x128xf32, #tpu.memory_space<vmem>>, vector<8x128xf32>
      %222 = arith.addf %220, %221 : vector<8x128xf32>
      %c480 = arith.constant 480 : index
      %c0_113 = arith.constant 0 : index
      %223 = vector.load %arg7[%c480, %c0_113] : memref<504x128xf32, #tpu.memory_space<vmem>>, vector<8x128xf32>
      %224 = arith.addf %222, %223 : vector<8x128xf32>
      %c488 = arith.constant 488 : index
      %c0_114 = arith.constant 0 : index
      %225 = vector.load %arg7[%c488, %c0_114] : memref<504x128xf32, #tpu.memory_space<vmem>>, vector<8x128xf32>
      %226 = arith.addf %224, %225 : vector<8x128xf32>
      %c496 = arith.constant 496 : index
      %c0_115 = arith.constant 0 : index
      %227 = vector.load %arg7[%c496, %c0_115] : memref<504x128xf32, #tpu.memory_space<vmem>>, vector<8x128xf32>
      %228 = arith.addf %226, %227 : vector<8x128xf32>
      %c0_116 = arith.constant 0 : index
      %c0_117 = arith.constant 0 : index
      %229 = vector.load %arg6[%c0_116, %c0_117] : memref<8x128xf32, #tpu.memory_space<vmem>>, vector<8x128xf32>
      tpu.vector_store %arg6[%c0_116, %c0_117], %228 {strides = array<i32>} : memref<8x128xf32, #tpu.memory_space<vmem>>, vector<8x128xf32>,
    } else {
    }
    return
  }
  func.func @transform_0(%arg0: i32, %arg1: i32) -> (i32, i32) {
    %c1_i32 = arith.constant 1 : i32
    %0 = arith.muli %arg0, %c1_i32 : i32
    %1 = arith.addi %0, %arg1 : i32
    %c0_i32 = arith.constant 0 : i32
    %c0_i32_0 = arith.constant 0 : i32
    return %1, %c0_i32 : i32, i32
  }
  func.func @transform_1(%arg0: i32, %arg1: i32) -> (i32, i32) {
    %c0_i32 = arith.constant 0 : i32
    %c0_i32_0 = arith.constant 0 : i32
    %c0_i32_1 = arith.constant 0 : i32
    return %c0_i32, %c0_i32_0 : i32, i32
  }
  func.func @transform_2(%arg0: i32, %arg1: i32) -> (i32, i32) {
    %c0_i32 = arith.constant 0 : i32
    %c0_i32_0 = arith.constant 0 : i32
    %c0_i32_1 = arith.constant 0 : i32
    return %c0_i32, %c0_i32_0 : i32, i32
  }
  func.func @transform_3(%arg0: i32, %arg1: i32) -> (i32, i32) {
    %c0_i32 = arith.constant 0 : i32
    %c0_i32_0 = arith.constant 0 : i32
    %c0_i32_1 = arith.constant 0 : i32
    return %c0_i32, %c0_i32_0 : i32, i32
  }
  func.func @transform_4(%arg0: i32, %arg1: i32) -> (i32, i32) {
    %c0_i32 = arith.constant 0 : i32
    %c0_i32_0 = arith.constant 0 : i32
    return %arg0, %c0_i32 : i32, i32
  }
}

</mosaic_0001>

<llo_original>
// kernel: tpu_custom_call.1
$region0: #{tpu_custom_call.1}
  #allocation0 [shape = 'u32[]', space=smem, size = 0x4, offset = 0x4, fixed_abs, tag = 'smem constant byte address 0x4 - core index']
  #allocation1 [shape = 'u32[72,128]{1,0:T(1,128)}', space=vmem, size = 0x9000, scoped, tag = 'internal scratch']
  #allocation2 [shape = 'f32[504,128]{1,0:T(8,128)}', space=vmem, size = 0x3f000, scoped, tag = 'scratch operand']
  %s0 = inlined_call_operand.hbm [shape: f32[1008,128], index: 0, kind: input, shape index: {}]
  %s1 = inlined_call_operand.hbm [shape: f32[7,128], index: 1, kind: input, shape index: {}]
  %s2 = inlined_call_operand.hbm [shape: f32[7,128], index: 2, kind: input, shape index: {}]
  %s3 = inlined_call_operand.hbm [shape: f32[7,128], index: 3, kind: input, shape index: {}]
  %s4 = inlined_call_operand.hbm [shape: f32[16,128], index: 4, kind: output, shape index: {}]
  %s5 = sld [smem:[#allocation0]]
  $region73: #{tpu_custom_call.1} parent=0
    _
  %s7 = ssub.s32 1, %s5
  %s8 = scalar_select 0, %s7, %s5
  $region1: #{tpu_custom_call.1} parent=0
    #allocation3 [shape = 'u8[516096]{0}', space=vmem, size = 0x7e000, scoped, tag = 'input window, operand 0']
    #allocation4 [shape = 's32[2]{0}', space=sflag, size = 0x8, scoped, tag = 'scoped memory for tpu_custom_call.1']
    #allocation5 [shape = 's32[2]{0}', space=sflag, size = 0x8, scoped, tag = 'scoped memory for tpu_custom_call.1']
    #allocation6 [shape = 'u8[4096]{0}', space=vmem, size = 0x1000, scoped, tag = 'input window, operand 1, single buffered']
    #allocation7 [shape = 's32[1]{0}', space=sflag, size = 0x4, scoped, tag = 'scoped memory for tpu_custom_call.1']
    #allocation8 [shape = 'u8[4096]{0}', space=vmem, size = 0x1000, scoped, tag = 'input window, operand 2, single buffered']
    #allocation9 [shape = 'u8[4096]{0}', space=vmem, size = 0x1000, scoped, tag = 'input window, operand 3, single buffered']
    #allocation10 [shape = 's32[1]{0}', space=sflag, size = 0x4, scoped, tag = 'scoped memory for tpu_custom_call.1']
    #allocation11 [shape = 'u8[8192]{0}', space=vmem, size = 0x2000, scoped, tag = 'output window, operand 0']
    %9 = vsyncpa [#allocation4], 0
    %s10 = scalar_lea.sflag [#allocation4], 1
    %11 = vsyncpa %s10, 0
    %12 = vsyncpa [#allocation7], 0
    %13 = vsyncpa [#allocation10], 0
    %14 = vsyncpa [#allocation5], 0
    %s15 = scalar_lea.sflag [#allocation5], 1
    %16 = vsyncpa %s15, 0
    loop: start=0, step=1, limit=4
    $region2: #{tpu_custom_call.1} parent=1 // loop_pre_header
      _
    $region3: #{tpu_custom_call.1} parent=1 // loop_header
      %s18 = sphi 0, %s22
      %p19 = scmp.ge.s32.totalorder %s18, 4
      %s25 = sphi 0, %s37
      %s26 = sphi 0, %s33
      %s27 = sphi 0, %s25
      %s28 = sphi 0, %s26
      %s29 = sphi 0, %s27
      %s30 = sphi 0, %s28
      %s42 = sphi 0, %s44
      %s45 = sphi 0, %s42
      %s46 = sphi 0, %s45
      %s62 = sphi 0, %s46
      %s66 = sphi 0, %s66
      %s68 = sphi 0, %s66
      %s69 = sphi 0, %s68
      %s83 = sphi 0, %s69
      %s87 = sphi 0, %s87
      %s89 = sphi 0, %s87
      %s90 = sphi 0, %s89
      %s104 = sphi 0, %s90
      %s108 = sphi 0, %s108
      %s110 = sphi 0, %s108
      %s111 = sphi 0, %s110
      %s125 = sphi 0, %s111
      %s131 = sphi 0, %s133
      %s134 = sphi 0, %s131
      %s135 = sphi 0, %s134
      %s151 = sphi 0, %s135
    $region4: #{tpu_custom_call.1} parent=1 // loop_header_branch
      %21 = sbr.rel (%p19) target = $region8
    $region5: #{tpu_custom_call.1} parent=1 // loop_body
      %s23 = ssub.s32 %s18, 1
      %s24 = ssub.s32 %s18, 2
      %s31 = sadd.s32 1, %s26
      %p32 = scmp.ge.s32.totalorder %s31, 1
      %s33 = scalar_select %p32, 0, %s31
      %s34 = sadd.s32 1, %s25
      %s35 = scalar_select %p32, %s34, %s25
      %p36 = scmp.ge.s32.totalorder %s35, 2
      %s37 = scalar_select %p36, 0, %s35
      %s38 = sadd.s32 %s25, %s26
      %s39 = sadd.s32 %s37, %s33
      %s40 = ssub.s32 %s38, %s39
      %p41 = scmp.eq.s32.totalorder %s40, 0
      %s43 = sadd.s32 %s42, 1
      %s44 = scalar_select %p41, %s42, %s43
      %p47 = pneg %p41
      %p48 = scmp.eq.s32.totalorder %s18, 1
      %p49 = por %p47, %p48
      %p50 = scmp.ne.s32.totalorder %s42, %s45
      %p51 = scmp.eq.s32.totalorder %s18, 0
      %p52 = por %p50, %p51
      %p53 = scmp.ne.s32.totalorder %s42, %s45
      %p54 = scmp.eq.s32.totalorder %s23, 1
      %p55 = por %p53, %p54
      %p56 = scmp.ne.s32.totalorder %s45, %s46
      %p57 = scmp.eq.s32.totalorder %s23, 0
      %p58 = por %p56, %p57
      %p59 = scmp.ne.s32.totalorder %s45, %s46
      %p60 = scmp.eq.s32.totalorder %s24, 1
      %p61 = por %p59, %p60
      %p63 = scmp.ne.s32.totalorder %s46, %s62
      %p64 = scmp.eq.s32.totalorder %s24, 0
      %p65 = por %p63, %p64
      %s67 = sadd.s32 %s66, 1
      %p70 = scmp.eq.s32.totalorder %s18, 1
      %p71 = scmp.ne.s32.totalorder %s66, %s68
      %p72 = scmp.eq.s32.totalorder %s18, 0
      %p73 = por %p71, %p72
      %p74 = scmp.ne.s32.totalorder %s66, %s68
      %p75 = scmp.eq.s32.totalorder %s23, 1
      %p76 = por %p74, %p75
      %p77 = scmp.ne.s32.totalorder %s68, %s69
      %p78 = scmp.eq.s32.totalorder %s23, 0
      %p79 = por %p77, %p78
      %p80 = scmp.ne.s32.totalorder %s68, %s69
      %p81 = scmp.eq.s32.totalorder %s24, 1
      %p82 = por %p80, %p81
      %p84 = scmp.ne.s32.totalorder %s69, %s83
      %p85 = scmp.eq.s32.totalorder %s24, 0
      %p86 = por %p84, %p85
      %s88 = sadd.s32 %s87, 1
      %p91 = scmp.eq.s32.totalorder %s18, 1
      %p92 = scmp.ne.s32.totalorder %s87, %s89
      %p93 = scmp.eq.s32.totalorder %s18, 0
      %p94 = por %p92, %p93
      %p95 = scmp.ne.s32.totalorder %s87, %s89
      %p96 = scmp.eq.s32.totalorder %s23, 1
      %p97 = por %p95, %p96
      %p98 = scmp.ne.s32.totalorder %s89, %s90
      %p99 = scmp.eq.s32.totalorder %s23, 0
      %p100 = por %p98, %p99
      %p101 = scmp.ne.s32.totalorder %s89, %s90
      %p102 = scmp.eq.s32.totalorder %s24, 1
      %p103 = por %p101, %p102
      %p105 = scmp.ne.s32.totalorder %s90, %s104
      %p106 = scmp.eq.s32.totalorder %s24, 0
      %p107 = por %p105, %p106
      %s109 = sadd.s32 %s108, 1
      %p112 = scmp.eq.s32.totalorder %s18, 1
      %p113 = scmp.ne.s32.totalorder %s108, %s110
      %p114 = scmp.eq.s32.totalorder %s18, 0
      %p115 = por %p113, %p114
      %p116 = scmp.ne.s32.totalorder %s108, %s110
      %p117 = scmp.eq.s32.totalorder %s23, 1
      %p118 = por %p116, %p117
      %p119 = scmp.ne.s32.totalorder %s110, %s111
      %p120 = scmp.eq.s32.totalorder %s23, 0
      %p121 = por %p119, %p120
      %p122 = scmp.ne.s32.totalorder %s110, %s111
      %p123 = scmp.eq.s32.totalorder %s24, 1
      %p124 = por %p122, %p123
      %p126 = scmp.ne.s32.totalorder %s111, %s125
      %p127 = scmp.eq.s32.totalorder %s24, 0
      %p128 = por %p126, %p127
      %s129 = ssub.s32 %s25, %s37
      %p130 = scmp.eq.s32.totalorder %s129, 0
      %s132 = sadd.s32 %s131, 1
      %s133 = scalar_select %p130, %s131, %s132
      %p136 = pneg %p130
      %p137 = scmp.eq.s32.totalorder %s18, 1
      %p138 = por %p136, %p137
      %p139 = scmp.ne.s32.totalorder %s131, %s134
      %p140 = scmp.eq.s32.totalorder %s18, 0
      %p141 = por %p139, %p140
      %p142 = scmp.ne.s32.totalorder %s131, %s134
      %p143 = scmp.eq.s32.totalorder %s23, 1
      %p144 = por %p142, %p143
      %p145 = scmp.ne.s32.totalorder %s134, %s135
      %p146 = scmp.eq.s32.totalorder %s23, 0
      %p147 = por %p145, %p146
      %p148 = scmp.ne.s32.totalorder %s134, %s135
      %p149 = scmp.eq.s32.totalorder %s24, 1
      %p150 = por %p148, %p149
      %p152 = scmp.ne.s32.totalorder %s135, %s151
      %p153 = scmp.eq.s32.totalorder %s24, 0
      %p154 = por %p152, %p153
      %p155 = scmp.le.s32.totalorder 1, %s18
      %p156 = scmp.lt.s32.totalorder %s18, 3
      %p157 = pnand %p155, %p156
      %p158 = pneg %p157
      // Predicated region
      $region9: #{tpu_custom_call.1} parent=5 // pred_check
        _
      $region10: #{tpu_custom_call.1} parent=5 // pred_check_branch
        %160 = sbr.rel (%p157) target = $region12
      $region11: #{tpu_custom_call.1} parent=5 // pred_region
        %s161 = ssub.s32 %s18, 1
        // Predicated region
        $region13: #{tpu_custom_call.1} parent=11 // pred_check
          %p162 = pneg %p79
        $region14: #{tpu_custom_call.1} parent=11 // pred_check_branch
          %164 = sbr.rel (%p162) target = $region16
        $region15: #{tpu_custom_call.1} parent=11 // pred_region
          %166 = vsyncadd [#allocation7], 0
          %s168 = sshll.u32 %s1, 4
          %s169 = int_to_ptr.hbm [resolvable:$true] %s168
          %s170 = sshll.u32 [#allocation6], 4
          %s171 = int_to_ptr.vmem [resolvable:$true] %s170
          %173 = dma.hbm_to_vmem [thread:$0]  %s169, 128, %s171, [#allocation7]
        $region16: #{tpu_custom_call.1} parent=11 // pred_fallthru
          _
        // Predicated region
        $region17: #{tpu_custom_call.1} parent=11 // pred_check
          %p174 = pneg %p100
        $region18: #{tpu_custom_call.1} parent=11 // pred_check_branch
          %176 = sbr.rel (%p174) target = $region20
        $region19: #{tpu_custom_call.1} parent=11 // pred_region
          %178 = vsyncadd [#allocation7], 0
          %s180 = sshll.u32 %s2, 4
          %s181 = int_to_ptr.hbm [resolvable:$true] %s180
          %s182 = sshll.u32 [#allocation8], 4
          %s183 = int_to_ptr.vmem [resolvable:$true] %s182
          %185 = dma.hbm_to_vmem [thread:$0]  %s181, 128, %s183, [#allocation7]
        $region20: #{tpu_custom_call.1} parent=11 // pred_fallthru
          _
        // Predicated region
        $region21: #{tpu_custom_call.1} parent=11 // pred_check
          %p186 = pneg %p121
        $region22: #{tpu_custom_call.1} parent=11 // pred_check_branch
          %188 = sbr.rel (%p186) target = $region24
        $region23: #{tpu_custom_call.1} parent=11 // pred_region
          %190 = vsyncadd [#allocation10], 0
          %s192 = sshll.u32 %s3, 4
          %s193 = int_to_ptr.hbm [resolvable:$true] %s192
          %s194 = sshll.u32 [#allocation9], 4
          %s195 = int_to_ptr.vmem [resolvable:$true] %s194
          %197 = dma.hbm_to_vmem [thread:$0]  %s193, 128, %s195, [#allocation10]
        $region24: #{tpu_custom_call.1} parent=11 // pred_fallthru
          _
      $region12: #{tpu_custom_call.1} parent=5 // pred_fallthru
        _
      %p198 = scmp.lt.s32.totalorder %s18, 2
      // Predicated region
      $region25: #{tpu_custom_call.1} parent=5 // pred_check
        %p199 = pneg %p198
      $region26: #{tpu_custom_call.1} parent=5 // pred_check_branch
        %201 = sbr.rel (%p199) target = $region28
      $region27: #{tpu_custom_call.1} parent=5 // pred_region
        // Predicated region
        $region29: #{tpu_custom_call.1} parent=27 // pred_check
          %p202 = pneg %p52
        $region30: #{tpu_custom_call.1} parent=27 // pred_check_branch
          %204 = sbr.rel (%p202) target = $region32
        $region31: #{tpu_custom_call.1} parent=27 // pred_region
          %s205 = sand.u32 %s42, 1
          %s206 = scalar_lea.sflag [#allocation4], %s205
          %s207 = sand.u32 %s42, 1
          %s208 = smul.addr %s207, 504
          %s209 = scalar_lea.vmem [#allocation3], %s208
          %s210 = sadd.s32 %s25, %s26
          %s211 = smul.u32 63, %s210
          %213 = vsyncadd %s206, 0
          %s214 = smul.addr %s211, 8
          %s215 = scalar_lea.hbm %s0, %s214
          %s216 = sshll.u32 %s215, 4
          %s217 = int_to_ptr.hbm [resolvable:$true] %s216
          %s218 = sshll.u32 %s209, 4
          %s219 = int_to_ptr.vmem [resolvable:$true] %s218
          %224 = dma.hbm_to_vmem [thread:$0]  %s217, 8064, %s219, %s206, 128, 128, 8
        $region32: #{tpu_custom_call.1} parent=27 // pred_fallthru
          _
      $region28: #{tpu_custom_call.1} parent=5 // pred_fallthru
        _
      %p225 = scmp.le.s32.totalorder 1, %s18
      %p226 = scmp.lt.s32.totalorder %s18, 3
      %p227 = pnand %p225, %p226
      %p228 = pneg %p227
      // Predicated region
      $region33: #{tpu_custom_call.1} parent=5 // pred_check
        _
      $region34: #{tpu_custom_call.1} parent=5 // pred_check_branch
        %230 = sbr.rel (%p227) target = $region36
      $region35: #{tpu_custom_call.1} parent=5 // pred_region
        %s231 = ssub.s32 %s18, 1
        %s232 = sand.u32 %s45, 1
        %s233 = scalar_lea.sflag [#allocation4], %s232
        %s234 = sand.u32 %s45, 1
        %s235 = smul.addr %s234, 504
        %s236 = scalar_lea.vmem [#allocation3], %s235
        // Predicated region
        $region37: #{tpu_custom_call.1} parent=35 // pred_check
          %p237 = pneg %p58
        $region38: #{tpu_custom_call.1} parent=35 // pred_check_branch
          %239 = sbr.rel (%p237) target = $region40
        $region39: #{tpu_custom_call.1} parent=35 // pred_region
          %241 = dma.done %s233, 8064
        $region40: #{tpu_custom_call.1} parent=35 // pred_fallthru
          _
        // Predicated region
        $region41: #{tpu_custom_call.1} parent=35 // pred_check
          %p242 = pneg %p79
        $region42: #{tpu_custom_call.1} parent=35 // pred_check_branch
          %244 = sbr.rel (%p242) target = $region44
        $region43: #{tpu_custom_call.1} parent=35 // pred_region
          %246 = dma.done [#allocation7], 128
        $region44: #{tpu_custom_call.1} parent=35 // pred_fallthru
          _
        // Predicated region
        $region45: #{tpu_custom_call.1} parent=35 // pred_check
          %p247 = pneg %p100
        $region46: #{tpu_custom_call.1} parent=35 // pred_check_branch
          %249 = sbr.rel (%p247) target = $region48
        $region47: #{tpu_custom_call.1} parent=35 // pred_region
          %251 = dma.done [#allocation7], 128
        $region48: #{tpu_custom_call.1} parent=35 // pred_fallthru
          _
        // Predicated region
        $region49: #{tpu_custom_call.1} parent=35 // pred_check
          %p252 = pneg %p121
        $region50: #{tpu_custom_call.1} parent=35 // pred_check_branch
          %254 = sbr.rel (%p252) target = $region52
        $region51: #{tpu_custom_call.1} parent=35 // pred_region
          %256 = dma.done [#allocation10], 128
        $region52: #{tpu_custom_call.1} parent=35 // pred_fallthru
          _
        %s257 = sand.u32 %s45, 1
        %s258 = scalar_lea.sflag [#allocation4], %s257
        %s259 = sand.u32 %s45, 1
        %s260 = smul.addr %s259, 504
        %s261 = scalar_lea.vmem [#allocation3], %s260
        %p262 = pneg %p58
        %p263 = pneg %p55
        %p264 = pneg %p79
        %p265 = pneg %p76
        %p266 = pneg %p100
        %p267 = pneg %p97
        %p268 = pneg %p121
        %p269 = pneg %p118
        %p270 = pneg %p147
        %p271 = pneg %p144
        %s272 = sand.u32 %s134, 1
        %s273 = scalar_lea.sflag [#allocation5], %s272
        %s274 = sand.u32 %s134, 1
        %s275 = smul.addr %s274, 8
        %s276 = scalar_lea.vmem [#allocation11], %s275
        %s277 = sadd.s32 %s27, %s28
        %s278 = smul.u32 63, %s277
        %p279 = scmp.eq.s32.totalorder %s28, 0
        // Predicated region
        $region53: #{tpu_custom_call.1} parent=35 // pred_check
          %p280 = pneg %p279
        $region54: #{tpu_custom_call.1} parent=35 // pred_check_branch
          %282 = sbr.rel (%p280) target = $region56
        $region55: #{tpu_custom_call.1} parent=35 // pred_region
          %283 = vst [vmem:[#allocation2] sm:$0xff] 0.0
          %284 = vst [vmem:[#allocation2 + $0x8] sm:$0xff] 0.0
          %285 = vst [vmem:[#allocation2 + $0x10] sm:$0xff] 0.0
          %286 = vst [vmem:[#allocation2 + $0x18] sm:$0xff] 0.0
          %287 = vst [vmem:[#allocation2 + $0x20] sm:$0xff] 0.0
          %288 = vst [vmem:[#allocation2 + $0x28] sm:$0xff] 0.0
          %289 = vst [vmem:[#allocation2 + $0x30] sm:$0xff] 0.0
          %290 = vst [vmem:[#allocation2 + $0x38] sm:$0xff] 0.0
          %291 = vst [vmem:[#allocation2 + $0x40] sm:$0xff] 0.0
          %292 = vst [vmem:[#allocation2 + $0x48] sm:$0xff] 0.0
          %293 = vst [vmem:[#allocation2 + $0x50] sm:$0xff] 0.0
          %294 = vst [vmem:[#allocation2 + $0x58] sm:$0xff] 0.0
          %295 = vst [vmem:[#allocation2 + $0x60] sm:$0xff] 0.0
          %296 = vst [vmem:[#allocation2 + $0x68] sm:$0xff] 0.0
          %297 = vst [vmem:[#allocation2 + $0x70] sm:$0xff] 0.0
          %298 = vst [vmem:[#allocation2 + $0x78] sm:$0xff] 0.0
          %299 = vst [vmem:[#allocation2 + $0x80] sm:$0xff] 0.0
          %300 = vst [vmem:[#allocation2 + $0x88] sm:$0xff] 0.0
          %301 = vst [vmem:[#allocation2 + $0x90] sm:$0xff] 0.0
          %302 = vst [vmem:[#allocation2 + $0x98] sm:$0xff] 0.0
          %303 = vst [vmem:[#allocation2 + $0xa0] sm:$0xff] 0.0
          %304 = vst [vmem:[#allocation2 + $0xa8] sm:$0xff] 0.0
          %305 = vst [vmem:[#allocation2 + $0xb0] sm:$0xff] 0.0
          %306 = vst [vmem:[#allocation2 + $0xb8] sm:$0xff] 0.0
          %307 = vst [vmem:[#allocation2 + $0xc0] sm:$0xff] 0.0
          %308 = vst [vmem:[#allocation2 + $0xc8] sm:$0xff] 0.0
          %309 = vst [vmem:[#allocation2 + $0xd0] sm:$0xff] 0.0
          %310 = vst [vmem:[#allocation2 + $0xd8] sm:$0xff] 0.0
          %311 = vst [vmem:[#allocation2 + $0xe0] sm:$0xff] 0.0
          %312 = vst [vmem:[#allocation2 + $0xe8] sm:$0xff] 0.0
          %313 = vst [vmem:[#allocation2 + $0xf0] sm:$0xff] 0.0
          %314 = vst [vmem:[#allocation2 + $0xf8] sm:$0xff] 0.0
          %315 = vst [vmem:[#allocation2 + $0x100] sm:$0xff] 0.0
          %316 = vst [vmem:[#allocation2 + $0x108] sm:$0xff] 0.0
          %317 = vst [vmem:[#allocation2 + $0x110] sm:$0xff] 0.0
          %318 = vst [vmem:[#allocation2 + $0x118] sm:$0xff] 0.0
          %319 = vst [vmem:[#allocation2 + $0x120] sm:$0xff] 0.0
          %320 = vst [vmem:[#allocation2 + $0x128] sm:$0xff] 0.0
          %321 = vst [vmem:[#allocation2 + $0x130] sm:$0xff] 0.0
          %322 = vst [vmem:[#allocation2 + $0x138] sm:$0xff] 0.0
          %323 = vst [vmem:[#allocation2 + $0x140] sm:$0xff] 0.0
          %324 = vst [vmem:[#allocation2 + $0x148] sm:$0xff] 0.0
          %325 = vst [vmem:[#allocation2 + $0x150] sm:$0xff] 0.0
          %326 = vst [vmem:[#allocation2 + $0x158] sm:$0xff] 0.0
          %327 = vst [vmem:[#allocation2 + $0x160] sm:$0xff] 0.0
          %328 = vst [vmem:[#allocation2 + $0x168] sm:$0xff] 0.0
          %329 = vst [vmem:[#allocation2 + $0x170] sm:$0xff] 0.0
          %330 = vst [vmem:[#allocation2 + $0x178] sm:$0xff] 0.0
          %331 = vst [vmem:[#allocation2 + $0x180] sm:$0xff] 0.0
          %332 = vst [vmem:[#allocation2 + $0x188] sm:$0xff] 0.0
          %333 = vst [vmem:[#allocation2 + $0x190] sm:$0xff] 0.0
          %334 = vst [vmem:[#allocation2 + $0x198] sm:$0xff] 0.0
          %335 = vst [vmem:[#allocation2 + $0x1a0] sm:$0xff] 0.0
          %336 = vst [vmem:[#allocation2 + $0x1a8] sm:$0xff] 0.0
          %337 = vst [vmem:[#allocation2 + $0x1b0] sm:$0xff] 0.0
          %338 = vst [vmem:[#allocation2 + $0x1b8] sm:$0xff] 0.0
          %339 = vst [vmem:[#allocation2 + $0x1c0] sm:$0xff] 0.0
          %340 = vst [vmem:[#allocation2 + $0x1c8] sm:$0xff] 0.0
          %341 = vst [vmem:[#allocation2 + $0x1d0] sm:$0xff] 0.0
          %342 = vst [vmem:[#allocation2 + $0x1d8] sm:$0xff] 0.0
          %343 = vst [vmem:[#allocation2 + $0x1e0] sm:$0xff] 0.0
          %344 = vst [vmem:[#allocation2 + $0x1e8] sm:$0xff] 0.0
          %345 = vst [vmem:[#allocation2 + $0x1f0] sm:$0xff] 0.0
        $region56: #{tpu_custom_call.1} parent=35 // pred_fallthru
          _
        %v346 = vld [vmem:[%s236] sm:$0xff]
        %v347 = vld [vmem:[%s236 + $0x8] sm:$0xff]
        %v348 = vld [vmem:[%s236 + $0x10] sm:$0xff]
        %v349 = vld [vmem:[%s236 + $0x18] sm:$0xff]
        %v350 = vld [vmem:[%s236 + $0x20] sm:$0xff]
        %v351 = vld [vmem:[%s236 + $0x28] sm:$0xff]
        %v352 = vld [vmem:[%s236 + $0x30] sm:$0xff]
        %v353 = vld [vmem:[%s236 + $0x38] sm:$0xff]
        %v354 = vld [vmem:[%s236 + $0x40] sm:$0xff]
        %v355 = vld [vmem:[%s236 + $0x48] sm:$0xff]
        %v356 = vld [vmem:[%s236 + $0x50] sm:$0xff]
        %v357 = vld [vmem:[%s236 + $0x58] sm:$0xff]
        %v358 = vld [vmem:[%s236 + $0x60] sm:$0xff]
        %v359 = vld [vmem:[%s236 + $0x68] sm:$0xff]
        %v360 = vld [vmem:[%s236 + $0x70] sm:$0xff]
        %v361 = vld [vmem:[%s236 + $0x78] sm:$0xff]
        %v362 = vld [vmem:[%s236 + $0x80] sm:$0xff]
        %v363 = vld [vmem:[%s236 + $0x88] sm:$0xff]
        %v364 = vld [vmem:[%s236 + $0x90] sm:$0xff]
        %v365 = vld [vmem:[%s236 + $0x98] sm:$0xff]
        %v366 = vld [vmem:[%s236 + $0xa0] sm:$0xff]
        %v367 = vld [vmem:[%s236 + $0xa8] sm:$0xff]
        %v368 = vld [vmem:[%s236 + $0xb0] sm:$0xff]
        %v369 = vld [vmem:[%s236 + $0xb8] sm:$0xff]
        %v370 = vld [vmem:[%s236 + $0xc0] sm:$0xff]
        %v371 = vld [vmem:[%s236 + $0xc8] sm:$0xff]
        %v372 = vld [vmem:[%s236 + $0xd0] sm:$0xff]
        %v373 = vld [vmem:[%s236 + $0xd8] sm:$0xff]
        %v374 = vld [vmem:[%s236 + $0xe0] sm:$0xff]
        %v375 = vld [vmem:[%s236 + $0xe8] sm:$0xff]
        %v376 = vld [vmem:[%s236 + $0xf0] sm:$0xff]
        %v377 = vld [vmem:[%s236 + $0xf8] sm:$0xff]
        %v378 = vld [vmem:[%s236 + $0x100] sm:$0xff]
        %v379 = vld [vmem:[%s236 + $0x108] sm:$0xff]
        %v380 = vld [vmem:[%s236 + $0x110] sm:$0xff]
        %v381 = vld [vmem:[%s236 + $0x118] sm:$0xff]
        %v382 = vld [vmem:[%s236 + $0x120] sm:$0xff]
        %v383 = vld [vmem:[%s236 + $0x128] sm:$0xff]
        %v384 = vld [vmem:[%s236 + $0x130] sm:$0xff]
        %v385 = vld [vmem:[%s236 + $0x138] sm:$0xff]
        %v386 = vld [vmem:[%s236 + $0x140] sm:$0xff]
        %v387 = vld [vmem:[%s236 + $0x148] sm:$0xff]
        %v388 = vld [vmem:[%s236 + $0x150] sm:$0xff]
        %v389 = vld [vmem:[%s236 + $0x158] sm:$0xff]
        %v390 = vld [vmem:[%s236 + $0x160] sm:$0xff]
        %v391 = vld [vmem:[%s236 + $0x168] sm:$0xff]
        %v392 = vld [vmem:[%s236 + $0x170] sm:$0xff]
        %v393 = vld [vmem:[%s236 + $0x178] sm:$0xff]
        %v394 = vld [vmem:[%s236 + $0x180] sm:$0xff]
        %v395 = vld [vmem:[%s236 + $0x188] sm:$0xff]
        %v396 = vld [vmem:[%s236 + $0x190] sm:$0xff]
        %v397 = vld [vmem:[%s236 + $0x198] sm:$0xff]
        %v398 = vld [vmem:[%s236 + $0x1a0] sm:$0xff]
        %v399 = vld [vmem:[%s236 + $0x1a8] sm:$0xff]
        %v400 = vld [vmem:[%s236 + $0x1b0] sm:$0xff]
        %v401 = vld [vmem:[%s236 + $0x1b8] sm:$0xff]
        %v402 = vld [vmem:[%s236 + $0x1c0] sm:$0xff]
        %v403 = vld [vmem:[%s236 + $0x1c8] sm:$0xff]
        %v404 = vld [vmem:[%s236 + $0x1d0] sm:$0xff]
        %v405 = vld [vmem:[%s236 + $0x1d8] sm:$0xff]
        %v406 = vld [vmem:[%s236 + $0x1e0] sm:$0xff]
        %v407 = vld [vmem:[%s236 + $0x1e8] sm:$0xff]
        %v408 = vld [vmem:[%s236 + $0x1f0] sm:$0xff]
        %v409 = vld [vmem:[#allocation6] sm:$0x1]
        %v410 = vld [vmem:[#allocation8] sm:$0x1]
        %v411 = vld [vmem:[#allocation9] sm:$0x1]
        %v412 = vperm.slane %v409, 0
        %vm413 = vcmp.ge.f32.partialorder %v346, %v412
        %vm414 = vcmp.ge.f32.partialorder %v347, %v412
        %vm415 = vcmp.ge.f32.partialorder %v348, %v412
        %vm416 = vcmp.ge.f32.partialorder %v349, %v412
        %vm417 = vcmp.ge.f32.partialorder %v350, %v412
        %vm418 = vcmp.ge.f32.partialorder %v351, %v412
        %vm419 = vcmp.ge.f32.partialorder %v352, %v412
        %vm420 = vcmp.ge.f32.partialorder %v353, %v412
        %vm421 = vcmp.ge.f32.partialorder %v354, %v412
        %vm422 = vcmp.ge.f32.partialorder %v355, %v412
        %vm423 = vcmp.ge.f32.partialorder %v356, %v412
        %vm424 = vcmp.ge.f32.partialorder %v357, %v412
        %vm425 = vcmp.ge.f32.partialorder %v358, %v412
        %vm426 = vcmp.ge.f32.partialorder %v359, %v412
        %vm427 = vcmp.ge.f32.partialorder %v360, %v412
        %vm428 = vcmp.ge.f32.partialorder %v361, %v412
        %vm429 = vcmp.ge.f32.partialorder %v362, %v412
        %vm430 = vcmp.ge.f32.partialorder %v363, %v412
        %vm431 = vcmp.ge.f32.partialorder %v364, %v412
        %vm432 = vcmp.ge.f32.partialorder %v365, %v412
        %vm433 = vcmp.ge.f32.partialorder %v366, %v412
        %vm434 = vcmp.ge.f32.partialorder %v367, %v412
        %vm435 = vcmp.ge.f32.partialorder %v368, %v412
        %vm436 = vcmp.ge.f32.partialorder %v369, %v412
        %vm437 = vcmp.ge.f32.partialorder %v370, %v412
        %vm438 = vcmp.ge.f32.partialorder %v371, %v412
        %vm439 = vcmp.ge.f32.partialorder %v372, %v412
        %vm440 = vcmp.ge.f32.partialorder %v373, %v412
        %vm441 = vcmp.ge.f32.partialorder %v374, %v412
        %vm442 = vcmp.ge.f32.partialorder %v375, %v412
        %vm443 = vcmp.ge.f32.partialorder %v376, %v412
        %vm444 = vcmp.ge.f32.partialorder %v377, %v412
        %vm445 = vcmp.ge.f32.partialorder %v378, %v412
        %vm446 = vcmp.ge.f32.partialorder %v379, %v412
        %vm447 = vcmp.ge.f32.partialorder %v380, %v412
        %vm448 = vcmp.ge.f32.partialorder %v381, %v412
        %vm449 = vcmp.ge.f32.partialorder %v382, %v412
        %vm450 = vcmp.ge.f32.partialorder %v383, %v412
        %vm451 = vcmp.ge.f32.partialorder %v384, %v412
        %vm452 = vcmp.ge.f32.partialorder %v385, %v412
        %vm453 = vcmp.ge.f32.partialorder %v386, %v412
        %vm454 = vcmp.ge.f32.partialorder %v387, %v412
        %vm455 = vcmp.ge.f32.partialorder %v388, %v412
        %vm456 = vcmp.ge.f32.partialorder %v389, %v412
        %vm457 = vcmp.ge.f32.partialorder %v390, %v412
        %vm458 = vcmp.ge.f32.partialorder %v391, %v412
        %vm459 = vcmp.ge.f32.partialorder %v392, %v412
        %vm460 = vcmp.ge.f32.partialorder %v393, %v412
        %vm461 = vcmp.ge.f32.partialorder %v394, %v412
        %vm462 = vcmp.ge.f32.partialorder %v395, %v412
        %vm463 = vcmp.ge.f32.partialorder %v396, %v412
        %vm464 = vcmp.ge.f32.partialorder %v397, %v412
        %vm465 = vcmp.ge.f32.partialorder %v398, %v412
        %vm466 = vcmp.ge.f32.partialorder %v399, %v412
        %vm467 = vcmp.ge.f32.partialorder %v400, %v412
        %vm468 = vcmp.ge.f32.partialorder %v401, %v412
        %vm469 = vcmp.ge.f32.partialorder %v402, %v412
        %vm470 = vcmp.ge.f32.partialorder %v403, %v412
        %vm471 = vcmp.ge.f32.partialorder %v404, %v412
        %vm472 = vcmp.ge.f32.partialorder %v405, %v412
        %vm473 = vcmp.ge.f32.partialorder %v406, %v412
        %vm474 = vcmp.ge.f32.partialorder %v407, %v412
        %vm475 = vcmp.ge.f32.partialorder %v408, %v412
        %v476 = vperm.slane %v410, 0
        %vm477 = vcmp.le.f32.partialorder %v346, %v476
        %vm478 = vcmp.le.f32.partialorder %v347, %v476
        %vm479 = vcmp.le.f32.partialorder %v348, %v476
        %vm480 = vcmp.le.f32.partialorder %v349, %v476
        %vm481 = vcmp.le.f32.partialorder %v350, %v476
        %vm482 = vcmp.le.f32.partialorder %v351, %v476
        %vm483 = vcmp.le.f32.partialorder %v352, %v476
        %vm484 = vcmp.le.f32.partialorder %v353, %v476
        %vm485 = vcmp.le.f32.partialorder %v354, %v476
        %vm486 = vcmp.le.f32.partialorder %v355, %v476
        %vm487 = vcmp.le.f32.partialorder %v356, %v476
        %vm488 = vcmp.le.f32.partialorder %v357, %v476
        %vm489 = vcmp.le.f32.partialorder %v358, %v476
        %vm490 = vcmp.le.f32.partialorder %v359, %v476
        %vm491 = vcmp.le.f32.partialorder %v360, %v476
        %vm492 = vcmp.le.f32.partialorder %v361, %v476
        %vm493 = vcmp.le.f32.partialorder %v362, %v476
        %vm494 = vcmp.le.f32.partialorder %v363, %v476
        %vm495 = vcmp.le.f32.partialorder %v364, %v476
        %vm496 = vcmp.le.f32.partialorder %v365, %v476
        %vm497 = vcmp.le.f32.partialorder %v366, %v476
        %vm498 = vcmp.le.f32.partialorder %v367, %v476
        %vm499 = vcmp.le.f32.partialorder %v368, %v476
        %vm500 = vcmp.le.f32.partialorder %v369, %v476
        %vm501 = vcmp.le.f32.partialorder %v370, %v476
        %vm502 = vcmp.le.f32.partialorder %v371, %v476
        %vm503 = vcmp.le.f32.partialorder %v372, %v476
        %vm504 = vcmp.le.f32.partialorder %v373, %v476
        %vm505 = vcmp.le.f32.partialorder %v374, %v476
        %vm506 = vcmp.le.f32.partialorder %v375, %v476
        %vm507 = vcmp.le.f32.partialorder %v376, %v476
        %vm508 = vcmp.le.f32.partialorder %v377, %v476
        %vm509 = vcmp.le.f32.partialorder %v378, %v476
        %vm510 = vcmp.le.f32.partialorder %v379, %v476
        %vm511 = vcmp.le.f32.partialorder %v380, %v476
        %vm512 = vcmp.le.f32.partialorder %v381, %v476
        %vm513 = vcmp.le.f32.partialorder %v382, %v476
        %vm514 = vcmp.le.f32.partialorder %v383, %v476
        %vm515 = vcmp.le.f32.partialorder %v384, %v476
        %vm516 = vcmp.le.f32.partialorder %v385, %v476
        %vm517 = vcmp.le.f32.partialorder %v386, %v476
        %vm518 = vcmp.le.f32.partialorder %v387, %v476
        %vm519 = vcmp.le.f32.partialorder %v388, %v476
        %vm520 = vcmp.le.f32.partialorder %v389, %v476
        %vm521 = vcmp.le.f32.partialorder %v390, %v476
        %vm522 = vcmp.le.f32.partialorder %v391, %v476
        %vm523 = vcmp.le.f32.partialorder %v392, %v476
        %vm524 = vcmp.le.f32.partialorder %v393, %v476
        %vm525 = vcmp.le.f32.partialorder %v394, %v476
        %vm526 = vcmp.le.f32.partialorder %v395, %v476
        %vm527 = vcmp.le.f32.partialorder %v396, %v476
        %vm528 = vcmp.le.f32.partialorder %v397, %v476
        %vm529 = vcmp.le.f32.partialorder %v398, %v476
        %vm530 = vcmp.le.f32.partialorder %v399, %v476
        %vm531 = vcmp.le.f32.partialorder %v400, %v476
        %vm532 = vcmp.le.f32.partialorder %v401, %v476
        %vm533 = vcmp.le.f32.partialorder %v402, %v476
        %vm534 = vcmp.le.f32.partialorder %v403, %v476
        %vm535 = vcmp.le.f32.partialorder %v404, %v476
        %vm536 = vcmp.le.f32.partialorder %v405, %v476
        %vm537 = vcmp.le.f32.partialorder %v406, %v476
        %vm538 = vcmp.le.f32.partialorder %v407, %v476
        %vm539 = vcmp.le.f32.partialorder %v408, %v476
        %vm540 = vmand %vm413, %vm477
        %vm541 = vmand %vm414, %vm478
        %vm542 = vmand %vm415, %vm479
        %vm543 = vmand %vm416, %vm480
        %vm544 = vmand %vm417, %vm481
        %vm545 = vmand %vm418, %vm482
        %vm546 = vmand %vm419, %vm483
        %vm547 = vmand %vm420, %vm484
        %vm548 = vmand %vm421, %vm485
        %vm549 = vmand %vm422, %vm486
        %vm550 = vmand %vm423, %vm487
        %vm551 = vmand %vm424, %vm488
        %vm552 = vmand %vm425, %vm489
        %vm553 = vmand %vm426, %vm490
        %vm554 = vmand %vm427, %vm491
        %vm555 = vmand %vm428, %vm492
        %vm556 = vmand %vm429, %vm493
        %vm557 = vmand %vm430, %vm494
        %vm558 = vmand %vm431, %vm495
        %vm559 = vmand %vm432, %vm496
        %vm560 = vmand %vm433, %vm497
        %vm561 = vmand %vm434, %vm498
        %vm562 = vmand %vm435, %vm499
        %vm563 = vmand %vm436, %vm500
        %vm564 = vmand %vm437, %vm501
        %vm565 = vmand %vm438, %vm502
        %vm566 = vmand %vm439, %vm503
        %vm567 = vmand %vm440, %vm504
        %vm568 = vmand %vm441, %vm505
        %vm569 = vmand %vm442, %vm506
        %vm570 = vmand %vm443, %vm507
        %vm571 = vmand %vm444, %vm508
        %vm572 = vmand %vm445, %vm509
        %vm573 = vmand %vm446, %vm510
        %vm574 = vmand %vm447, %vm511
        %vm575 = vmand %vm448, %vm512
        %vm576 = vmand %vm449, %vm513
        %vm577 = vmand %vm450, %vm514
        %vm578 = vmand %vm451, %vm515
        %vm579 = vmand %vm452, %vm516
        %vm580 = vmand %vm453, %vm517
        %vm581 = vmand %vm454, %vm518
        %vm582 = vmand %vm455, %vm519
        %vm583 = vmand %vm456, %vm520
        %vm584 = vmand %vm457, %vm521
        %vm585 = vmand %vm458, %vm522
        %vm586 = vmand %vm459, %vm523
        %vm587 = vmand %vm460, %vm524
        %vm588 = vmand %vm461, %vm525
        %vm589 = vmand %vm462, %vm526
        %vm590 = vmand %vm463, %vm527
        %vm591 = vmand %vm464, %vm528
        %vm592 = vmand %vm465, %vm529
        %vm593 = vmand %vm466, %vm530
        %vm594 = vmand %vm467, %vm531
        %vm595 = vmand %vm468, %vm532
        %vm596 = vmand %vm469, %vm533
        %vm597 = vmand %vm470, %vm534
        %vm598 = vmand %vm471, %vm535
        %vm599 = vmand %vm472, %vm536
        %vm600 = vmand %vm473, %vm537
        %vm601 = vmand %vm474, %vm538
        %vm602 = vmand %vm475, %vm539
        %v603 = vperm.slane %v411, 0
        %v604 = vsel %vm540, %v603, 0.0
        %v605 = vsel %vm541, %v603, 0.0
        %v606 = vsel %vm542, %v603, 0.0
        %v607 = vsel %vm543, %v603, 0.0
        %v608 = vsel %vm544, %v603, 0.0
        %v609 = vsel %vm545, %v603, 0.0
        %v610 = vsel %vm546, %v603, 0.0
        %v611 = vsel %vm547, %v603, 0.0
        %v612 = vsel %vm548, %v603, 0.0
        %v613 = vsel %vm549, %v603, 0.0
        %v614 = vsel %vm550, %v603, 0.0
        %v615 = vsel %vm551, %v603, 0.0
        %v616 = vsel %vm552, %v603, 0.0
        %v617 = vsel %vm553, %v603, 0.0
        %v618 = vsel %vm554, %v603, 0.0
        %v619 = vsel %vm555, %v603, 0.0
        %v620 = vsel %vm556, %v603, 0.0
        %v621 = vsel %vm557, %v603, 0.0
        %v622 = vsel %vm558, %v603, 0.0
        %v623 = vsel %vm559, %v603, 0.0
        %v624 = vsel %vm560, %v603, 0.0
        %v625 = vsel %vm561, %v603, 0.0
        %v626 = vsel %vm562, %v603, 0.0
        %v627 = vsel %vm563, %v603, 0.0
        %v628 = vsel %vm564, %v603, 0.0
        %v629 = vsel %vm565, %v603, 0.0
        %v630 = vsel %vm566, %v603, 0.0
        %v631 = vsel %vm567, %v603, 0.0
        %v632 = vsel %vm568, %v603, 0.0
        %v633 = vsel %vm569, %v603, 0.0
        %v634 = vsel %vm570, %v603, 0.0
        %v635 = vsel %vm571, %v603, 0.0
        %v636 = vsel %vm572, %v603, 0.0
        %v637 = vsel %vm573, %v603, 0.0
        %v638 = vsel %vm574, %v603, 0.0
        %v639 = vsel %vm575, %v603, 0.0
        %v640 = vsel %vm576, %v603, 0.0
        %v641 = vsel %vm577, %v603, 0.0
        %v642 = vsel %vm578, %v603, 0.0
        %v643 = vsel %vm579, %v603, 0.0
        %v644 = vsel %vm580, %v603, 0.0
        %v645 = vsel %vm581, %v603, 0.0
        %v646 = vsel %vm582, %v603, 0.0
        %v647 = vsel %vm583, %v603, 0.0
        %v648 = vsel %vm584, %v603, 0.0
        %v649 = vsel %vm585, %v603, 0.0
        %v650 = vsel %vm586, %v603, 0.0
        %v651 = vsel %vm587, %v603, 0.0
        %v652 = vsel %vm588, %v603, 0.0
        %v653 = vsel %vm589, %v603, 0.0
        %v654 = vsel %vm590, %v603, 0.0
        %v655 = vsel %vm591, %v603, 0.0
        %v656 = vsel %vm592, %v603, 0.0
        %v657 = vsel %vm593, %v603, 0.0
        %v658 = vsel %vm594, %v603, 0.0
        %v659 = vsel %vm595, %v603, 0.0
        %v660 = vsel %vm596, %v603, 0.0
        %v661 = vsel %vm597, %v603, 0.0
        %v662 = vsel %vm598, %v603, 0.0
        %v663 = vsel %vm599, %v603, 0.0
        %v664 = vsel %vm600, %v603, 0.0
        %v665 = vsel %vm601, %v603, 0.0
        %v666 = vsel %vm602, %v603, 0.0
        %v667 = vadd.f32 %v604, 0.0
        %v668 = vadd.f32 %v605, 0.0
        %v669 = vadd.f32 %v606, 0.0
        %v670 = vadd.f32 %v607, 0.0
        %v671 = vadd.f32 %v608, 0.0
        %v672 = vadd.f32 %v609, 0.0
        %v673 = vadd.f32 %v610, 0.0
        %v674 = vadd.f32 %v611, 0.0
        %v675 = vadd.f32 %v612, 0.0
        %v676 = vadd.f32 %v613, 0.0
        %v677 = vadd.f32 %v614, 0.0
        %v678 = vadd.f32 %v615, 0.0
        %v679 = vadd.f32 %v616, 0.0
        %v680 = vadd.f32 %v617, 0.0
        %v681 = vadd.f32 %v618, 0.0
        %v682 = vadd.f32 %v619, 0.0
        %v683 = vadd.f32 %v620, 0.0
        %v684 = vadd.f32 %v621, 0.0
        %v685 = vadd.f32 %v622, 0.0
        %v686 = vadd.f32 %v623, 0.0
        %v687 = vadd.f32 %v624, 0.0
        %v688 = vadd.f32 %v625, 0.0
        %v689 = vadd.f32 %v626, 0.0
        %v690 = vadd.f32 %v627, 0.0
        %v691 = vadd.f32 %v628, 0.0
        %v692 = vadd.f32 %v629, 0.0
        %v693 = vadd.f32 %v630, 0.0
        %v694 = vadd.f32 %v631, 0.0
        %v695 = vadd.f32 %v632, 0.0
        %v696 = vadd.f32 %v633, 0.0
        %v697 = vadd.f32 %v634, 0.0
        %v698 = vadd.f32 %v635, 0.0
        %v699 = vadd.f32 %v636, 0.0
        %v700 = vadd.f32 %v637, 0.0
        %v701 = vadd.f32 %v638, 0.0
        %v702 = vadd.f32 %v639, 0.0
        %v703 = vadd.f32 %v640, 0.0
        %v704 = vadd.f32 %v641, 0.0
        %v705 = vadd.f32 %v642, 0.0
        %v706 = vadd.f32 %v643, 0.0
        %v707 = vadd.f32 %v644, 0.0
        %v708 = vadd.f32 %v645, 0.0
        %v709 = vadd.f32 %v646, 0.0
        %v710 = vadd.f32 %v647, 0.0
        %v711 = vadd.f32 %v648, 0.0
        %v712 = vadd.f32 %v649, 0.0
        %v713 = vadd.f32 %v650, 0.0
        %v714 = vadd.f32 %v651, 0.0
        %v715 = vadd.f32 %v652, 0.0
        %v716 = vadd.f32 %v653, 0.0
        %v717 = vadd.f32 %v654, 0.0
        %v718 = vadd.f32 %v655, 0.0
        %v719 = vadd.f32 %v656, 0.0
        %v720 = vadd.f32 %v657, 0.0
        %v721 = vadd.f32 %v658, 0.0
        %v722 = vadd.f32 %v659, 0.0
        %v723 = vadd.f32 %v660, 0.0
        %v724 = vadd.f32 %v661, 0.0
        %v725 = vadd.f32 %v662, 0.0
        %v726 = vadd.f32 %v663, 0.0
        %v727 = vadd.f32 %v664, 0.0
        %v728 = vadd.f32 %v665, 0.0
        %v729 = vadd.f32 %v666, 0.0
        %v730 = vld [vmem:[#allocation6 + $0x1] sm:$0x1]
        %v731 = vld [vmem:[#allocation8 + $0x1] sm:$0x1]
        %v732 = vld [vmem:[#allocation9 + $0x1] sm:$0x1]
        %v733 = vperm.slane %v730, 0
        %vm734 = vcmp.ge.f32.partialorder %v346, %v733
        %vm735 = vcmp.ge.f32.partialorder %v347, %v733
        %vm736 = vcmp.ge.f32.partialorder %v348, %v733
        %vm737 = vcmp.ge.f32.partialorder %v349, %v733
        %vm738 = vcmp.ge.f32.partialorder %v350, %v733
        %vm739 = vcmp.ge.f32.partialorder %v351, %v733
        %vm740 = vcmp.ge.f32.partialorder %v352, %v733
        %vm741 = vcmp.ge.f32.partialorder %v353, %v733
        %vm742 = vcmp.ge.f32.partialorder %v354, %v733
        %vm743 = vcmp.ge.f32.partialorder %v355, %v733
        %vm744 = vcmp.ge.f32.partialorder %v356, %v733
        %vm745 = vcmp.ge.f32.partialorder %v357, %v733
        %vm746 = vcmp.ge.f32.partialorder %v358, %v733
        %vm747 = vcmp.ge.f32.partialorder %v359, %v733
        %vm748 = vcmp.ge.f32.partialorder %v360, %v733
        %vm749 = vcmp.ge.f32.partialorder %v361, %v733
        %vm750 = vcmp.ge.f32.partialorder %v362, %v733
        %vm751 = vcmp.ge.f32.partialorder %v363, %v733
        %vm752 = vcmp.ge.f32.partialorder %v364, %v733
        %vm753 = vcmp.ge.f32.partialorder %v365, %v733
        %vm754 = vcmp.ge.f32.partialorder %v366, %v733
        %vm755 = vcmp.ge.f32.partialorder %v367, %v733
        %vm756 = vcmp.ge.f32.partialorder %v368, %v733
        %vm757 = vcmp.ge.f32.partialorder %v369, %v733
        %vm758 = vcmp.ge.f32.partialorder %v370, %v733
        %vm759 = vcmp.ge.f32.partialorder %v371, %v733
        %vm760 = vcmp.ge.f32.partialorder %v372, %v733
        %vm761 = vcmp.ge.f32.partialorder %v373, %v733
        %vm762 = vcmp.ge.f32.partialorder %v374, %v733
        %vm763 = vcmp.ge.f32.partialorder %v375, %v733
        %vm764 = vcmp.ge.f32.partialorder %v376, %v733
        %vm765 = vcmp.ge.f32.partialorder %v377, %v733
        %vm766 = vcmp.ge.f32.partialorder %v378, %v733
        %vm767 = vcmp.ge.f32.partialorder %v379, %v733
        %vm768 = vcmp.ge.f32.partialorder %v380, %v733
        %vm769 = vcmp.ge.f32.partialorder %v381, %v733
        %vm770 = vcmp.ge.f32.partialorder %v382, %v733
        %vm771 = vcmp.ge.f32.partialorder %v383, %v733
        %vm772 = vcmp.ge.f32.partialorder %v384, %v733
        %vm773 = vcmp.ge.f32.partialorder %v385, %v733
        %vm774 = vcmp.ge.f32.partialorder %v386, %v733
        %vm775 = vcmp.ge.f32.partialorder %v387, %v733
        %vm776 = vcmp.ge.f32.partialorder %v388, %v733
        %vm777 = vcmp.ge.f32.partialorder %v389, %v733
        %vm778 = vcmp.ge.f32.partialorder %v390, %v733
        %vm779 = vcmp.ge.f32.partialorder %v391, %v733
        %vm780 = vcmp.ge.f32.partialorder %v392, %v733
        %vm781 = vcmp.ge.f32.partialorder %v393, %v733
        %vm782 = vcmp.ge.f32.partialorder %v394, %v733
        %vm783 = vcmp.ge.f32.partialorder %v395, %v733
        %vm784 = vcmp.ge.f32.partialorder %v396, %v733
        %vm785 = vcmp.ge.f32.partialorder %v397, %v733
        %vm786 = vcmp.ge.f32.partialorder %v398, %v733
        %vm787 = vcmp.ge.f32.partialorder %v399, %v733
        %vm788 = vcmp.ge.f32.partialorder %v400, %v733
        %vm789 = vcmp.ge.f32.partialorder %v401, %v733
        %vm790 = vcmp.ge.f32.partialorder %v402, %v733
        %vm791 = vcmp.ge.f32.partialorder %v403, %v733
        %vm792 = vcmp.ge.f32.partialorder %v404, %v733
        %vm793 = vcmp.ge.f32.partialorder %v405, %v733
        %vm794 = vcmp.ge.f32.partialorder %v406, %v733
        %vm795 = vcmp.ge.f32.partialorder %v407, %v733
        %vm796 = vcmp.ge.f32.partialorder %v408, %v733
        %v797 = vperm.slane %v731, 0
        %vm798 = vcmp.le.f32.partialorder %v346, %v797
        %vm799 = vcmp.le.f32.partialorder %v347, %v797
        %vm800 = vcmp.le.f32.partialorder %v348, %v797
        %vm801 = vcmp.le.f32.partialorder %v349, %v797
        %vm802 = vcmp.le.f32.partialorder %v350, %v797
        %vm803 = vcmp.le.f32.partialorder %v351, %v797
        %vm804 = vcmp.le.f32.partialorder %v352, %v797
        %vm805 = vcmp.le.f32.partialorder %v353, %v797
        %vm806 = vcmp.le.f32.partialorder %v354, %v797
        %vm807 = vcmp.le.f32.partialorder %v355, %v797
        %vm808 = vcmp.le.f32.partialorder %v356, %v797
        %vm809 = vcmp.le.f32.partialorder %v357, %v797
        %vm810 = vcmp.le.f32.partialorder %v358, %v797
        %vm811 = vcmp.le.f32.partialorder %v359, %v797
        %vm812 = vcmp.le.f32.partialorder %v360, %v797
        %vm813 = vcmp.le.f32.partialorder %v361, %v797
        %vm814 = vcmp.le.f32.partialorder %v362, %v797
        %vm815 = vcmp.le.f32.partialorder %v363, %v797
        %vm816 = vcmp.le.f32.partialorder %v364, %v797
        %vm817 = vcmp.le.f32.partialorder %v365, %v797
        %vm818 = vcmp.le.f32.partialorder %v366, %v797
        %vm819 = vcmp.le.f32.partialorder %v367, %v797
        %vm820 = vcmp.le.f32.partialorder %v368, %v797
        %vm821 = vcmp.le.f32.partialorder %v369, %v797
        %vm822 = vcmp.le.f32.partialorder %v370, %v797
        %vm823 = vcmp.le.f32.partialorder %v371, %v797
        %vm824 = vcmp.le.f32.partialorder %v372, %v797
        %vm825 = vcmp.le.f32.partialorder %v373, %v797
        %vm826 = vcmp.le.f32.partialorder %v374, %v797
        %vm827 = vcmp.le.f32.partialorder %v375, %v797
        %vm828 = vcmp.le.f32.partialorder %v376, %v797
        %vm829 = vcmp.le.f32.partialorder %v377, %v797
        %vm830 = vcmp.le.f32.partialorder %v378, %v797
        %vm831 = vcmp.le.f32.partialorder %v379, %v797
        %vm832 = vcmp.le.f32.partialorder %v380, %v797
        %vm833 = vcmp.le.f32.partialorder %v381, %v797
        %vm834 = vcmp.le.f32.partialorder %v382, %v797
        %vm835 = vcmp.le.f32.partialorder %v383, %v797
        %vm836 = vcmp.le.f32.partialorder %v384, %v797
        %vm837 = vcmp.le.f32.partialorder %v385, %v797
        %vm838 = vcmp.le.f32.partialorder %v386, %v797
        %vm839 = vcmp.le.f32.partialorder %v387, %v797
        %vm840 = vcmp.le.f32.partialorder %v388, %v797
        %vm841 = vcmp.le.f32.partialorder %v389, %v797
        %vm842 = vcmp.le.f32.partialorder %v390, %v797
        %vm843 = vcmp.le.f32.partialorder %v391, %v797
        %vm844 = vcmp.le.f32.partialorder %v392, %v797
        %vm845 = vcmp.le.f32.partialorder %v393, %v797
        %vm846 = vcmp.le.f32.partialorder %v394, %v797
        %vm847 = vcmp.le.f32.partialorder %v395, %v797
        %vm848 = vcmp.le.f32.partialorder %v396, %v797
        %vm849 = vcmp.le.f32.partialorder %v397, %v797
        %vm850 = vcmp.le.f32.partialorder %v398, %v797
        %vm851 = vcmp.le.f32.partialorder %v399, %v797
        %vm852 = vcmp.le.f32.partialorder %v400, %v797
        %vm853 = vcmp.le.f32.partialorder %v401, %v797
        %vm854 = vcmp.le.f32.partialorder %v402, %v797
        %vm855 = vcmp.le.f32.partialorder %v403, %v797
        %vm856 = vcmp.le.f32.partialorder %v404, %v797
        %vm857 = vcmp.le.f32.partialorder %v405, %v797
        %vm858 = vcmp.le.f32.partialorder %v406, %v797
        %vm859 = vcmp.le.f32.partialorder %v407, %v797
        %vm860 = vcmp.le.f32.partialorder %v408, %v797
        %vm861 = vmand %vm734, %vm798
        %vm862 = vmand %vm735, %vm799
        %vm863 = vmand %vm736, %vm800
        %vm864 = vmand %vm737, %vm801
        %vm865 = vmand %vm738, %vm802
        %vm866 = vmand %vm739, %vm803
        %vm867 = vmand %vm740, %vm804
        %vm868 = vmand %vm741, %vm805
        %vm869 = vmand %vm742, %vm806
        %vm870 = vmand %vm743, %vm807
        %vm871 = vmand %vm744, %vm808
        %vm872 = vmand %vm745, %vm809
        %vm873 = vmand %vm746, %vm810
        %vm874 = vmand %vm747, %vm811
        %vm875 = vmand %vm748, %vm812
        %vm876 = vmand %vm749, %vm813
        %vm877 = vmand %vm750, %vm814
        %vm878 = vmand %vm751, %vm815
        %vm879 = vmand %vm752, %vm816
        %vm880 = vmand %vm753, %vm817
        %vm881 = vmand %vm754, %vm818
        %vm882 = vmand %vm755, %vm819
        %vm883 = vmand %vm756, %vm820
        %vm884 = vmand %vm757, %vm821
        %vm885 = vmand %vm758, %vm822
        %vm886 = vmand %vm759, %vm823
        %vm887 = vmand %vm760, %vm824
        %vm888 = vmand %vm761, %vm825
        %vm889 = vmand %vm762, %vm826
        %vm890 = vmand %vm763, %vm827
        %vm891 = vmand %vm764, %vm828
        %vm892 = vmand %vm765, %vm829
        %vm893 = vmand %vm766, %vm830
        %vm894 = vmand %vm767, %vm831
        %vm895 = vmand %vm768, %vm832
        %vm896 = vmand %vm769, %vm833
        %vm897 = vmand %vm770, %vm834
        %vm898 = vmand %vm771, %vm835
        %vm899 = vmand %vm772, %vm836
        %vm900 = vmand %vm773, %vm837
        %vm901 = vmand %vm774, %vm838
        %vm902 = vmand %vm775, %vm839
        %vm903 = vmand %vm776, %vm840
        %vm904 = vmand %vm777, %vm841
        %vm905 = vmand %vm778, %vm842
        %vm906 = vmand %vm779, %vm843
        %vm907 = vmand %vm780, %vm844
        %vm908 = vmand %vm781, %vm845
        %vm909 = vmand %vm782, %vm846
        %vm910 = vmand %vm783, %vm847
        %vm911 = vmand %vm784, %vm848
        %vm912 = vmand %vm785, %vm849
        %vm913 = vmand %vm786, %vm850
        %vm914 = vmand %vm787, %vm851
        %vm915 = vmand %vm788, %vm852
        %vm916 = vmand %vm789, %vm853
        %vm917 = vmand %vm790, %vm854
        %vm918 = vmand %vm791, %vm855
        %vm919 = vmand %vm792, %vm856
        %vm920 = vmand %vm793, %vm857
        %vm921 = vmand %vm794, %vm858
        %vm922 = vmand %vm795, %vm859
        %vm923 = vmand %vm796, %vm860
        %v924 = vperm.slane %v732, 0
        %v925 = vsel %vm861, %v924, 0.0
        %v926 = vsel %vm862, %v924, 0.0
        %v927 = vsel %vm863, %v924, 0.0
        %v928 = vsel %vm864, %v924, 0.0
        %v929 = vsel %vm865, %v924, 0.0
        %v930 = vsel %vm866, %v924, 0.0
        %v931 = vsel %vm867, %v924, 0.0
        %v932 = vsel %vm868, %v924, 0.0
        %v933 = vsel %vm869, %v924, 0.0
        %v934 = vsel %vm870, %v924, 0.0
        %v935 = vsel %vm871, %v924, 0.0
        %v936 = vsel %vm872, %v924, 0.0
        %v937 = vsel %vm873, %v924, 0.0
        %v938 = vsel %vm874, %v924, 0.0
        %v939 = vsel %vm875, %v924, 0.0
        %v940 = vsel %vm876, %v924, 0.0
        %v941 = vsel %vm877, %v924, 0.0
        %v942 = vsel %vm878, %v924, 0.0
        %v943 = vsel %vm879, %v924, 0.0
        %v944 = vsel %vm880, %v924, 0.0
        %v945 = vsel %vm881, %v924, 0.0
        %v946 = vsel %vm882, %v924, 0.0
        %v947 = vsel %vm883, %v924, 0.0
        %v948 = vsel %vm884, %v924, 0.0
        %v949 = vsel %vm885, %v924, 0.0
        %v950 = vsel %vm886, %v924, 0.0
        %v951 = vsel %vm887, %v924, 0.0
        %v952 = vsel %vm888, %v924, 0.0
        %v953 = vsel %vm889, %v924, 0.0
        %v954 = vsel %vm890, %v924, 0.0
        %v955 = vsel %vm891, %v924, 0.0
        %v956 = vsel %vm892, %v924, 0.0
        %v957 = vsel %vm893, %v924, 0.0
        %v958 = vsel %vm894, %v924, 0.0
        %v959 = vsel %vm895, %v924, 0.0
        %v960 = vsel %vm896, %v924, 0.0
        %v961 = vsel %vm897, %v924, 0.0
        %v962 = vsel %vm898, %v924, 0.0
        %v963 = vsel %vm899, %v924, 0.0
        %v964 = vsel %vm900, %v924, 0.0
        %v965 = vsel %vm901, %v924, 0.0
        %v966 = vsel %vm902, %v924, 0.0
        %v967 = vsel %vm903, %v924, 0.0
        %v968 = vsel %vm904, %v924, 0.0
        %v969 = vsel %vm905, %v924, 0.0
        %v970 = vsel %vm906, %v924, 0.0
        %v971 = vsel %vm907, %v924, 0.0
        %v972 = vsel %vm908, %v924, 0.0
        %v973 = vsel %vm909, %v924, 0.0
        %v974 = vsel %vm910, %v924, 0.0
        %v975 = vsel %vm911, %v924, 0.0
        %v976 = vsel %vm912, %v924, 0.0
        %v977 = vsel %vm913, %v924, 0.0
        %v978 = vsel %vm914, %v924, 0.0
        %v979 = vsel %vm915, %v924, 0.0
        %v980 = vsel %vm916, %v924, 0.0
        %v981 = vsel %vm917, %v924, 0.0
        %v982 = vsel %vm918, %v924, 0.0
        %v983 = vsel %vm919, %v924, 0.0
        %v984 = vsel %vm920, %v924, 0.0
        %v985 = vsel %vm921, %v924, 0.0
        %v986 = vsel %vm922, %v924, 0.0
        %v987 = vsel %vm923, %v924, 0.0
        %v988 = vadd.f32 %v667, %v925
        %v989 = vadd.f32 %v668, %v926
        %v990 = vadd.f32 %v669, %v927
        %v991 = vadd.f32 %v670, %v928
        %v992 = vadd.f32 %v671, %v929
        %v993 = vadd.f32 %v672, %v930
        %v994 = vadd.f32 %v673, %v931
        %v995 = vadd.f32 %v674, %v932
        %v996 = vadd.f32 %v675, %v933
        %v997 = vadd.f32 %v676, %v934
        %v998 = vadd.f32 %v677, %v935
        %v999 = vadd.f32 %v678, %v936
        %v1000 = vadd.f32 %v679, %v937
        %v1001 = vadd.f32 %v680, %v938
        %v1002 = vadd.f32 %v681, %v939
        %v1003 = vadd.f32 %v682, %v940
        %v1004 = vadd.f32 %v683, %v941
        %v1005 = vadd.f32 %v684, %v942
        %v1006 = vadd.f32 %v685, %v943
        %v1007 = vadd.f32 %v686, %v944
        %v1008 = vadd.f32 %v687, %v945
        %v1009 = vadd.f32 %v688, %v946
        %v1010 = vadd.f32 %v689, %v947
        %v1011 = vadd.f32 %v690, %v948
        %v1012 = vadd.f32 %v691, %v949
        %v1013 = vadd.f32 %v692, %v950
        %v1014 = vadd.f32 %v693, %v951
        %v1015 = vadd.f32 %v694, %v952
        %v1016 = vadd.f32 %v695, %v953
        %v1017 = vadd.f32 %v696, %v954
        %v1018 = vadd.f32 %v697, %v955
        %v1019 = vadd.f32 %v698, %v956
        %v1020 = vadd.f32 %v699, %v957
        %v1021 = vadd.f32 %v700, %v958
        %v1022 = vadd.f32 %v701, %v959
        %v1023 = vadd.f32 %v702, %v960
        %v1024 = vadd.f32 %v703, %v961
        %v1025 = vadd.f32 %v704, %v962
        %v1026 = vadd.f32 %v705, %v963
        %v1027 = vadd.f32 %v706, %v964
        %v1028 = vadd.f32 %v707, %v965
        %v1029 = vadd.f32 %v708, %v966
        %v1030 = vadd.f32 %v709, %v967
        %v1031 = vadd.f32 %v710, %v968
        %v1032 = vadd.f32 %v711, %v969
        %v1033 = vadd.f32 %v712, %v970
        %v1034 = vadd.f32 %v713, %v971
        %v1035 = vadd.f32 %v714, %v972
        %v1036 = vadd.f32 %v715, %v973
        %v1037 = vadd.f32 %v716, %v974
        %v1038 = vadd.f32 %v717, %v975
        %v1039 = vadd.f32 %v718, %v976
        %v1040 = vadd.f32 %v719, %v977
        %v1041 = vadd.f32 %v720, %v978
        %v1042 = vadd.f32 %v721, %v979
        %v1043 = vadd.f32 %v722, %v980
        %v1044 = vadd.f32 %v723, %v981
        %v1045 = vadd.f32 %v724, %v982
        %v1046 = vadd.f32 %v725, %v983
        %v1047 = vadd.f32 %v726, %v984
        %v1048 = vadd.f32 %v727, %v985
        %v1049 = vadd.f32 %v728, %v986
        %v1050 = vadd.f32 %v729, %v987
        %v1051 = vld [vmem:[#allocation6 + $0x2] sm:$0x1]
        %v1052 = vld [vmem:[#allocation8 + $0x2] sm:$0x1]
        %v1053 = vld [vmem:[#allocation9 + $0x2] sm:$0x1]
        %v1054 = vperm.slane %v1051, 0
        %vm1055 = vcmp.ge.f32.partialorder %v346, %v1054
        %vm1056 = vcmp.ge.f32.partialorder %v347, %v1054
        %vm1057 = vcmp.ge.f32.partialorder %v348, %v1054
        %vm1058 = vcmp.ge.f32.partialorder %v349, %v1054
        %vm1059 = vcmp.ge.f32.partialorder %v350, %v1054
        %vm1060 = vcmp.ge.f32.partialorder %v351, %v1054
        %vm1061 = vcmp.ge.f32.partialorder %v352, %v1054
        %vm1062 = vcmp.ge.f32.partialorder %v353, %v1054
        %vm1063 = vcmp.ge.f32.partialorder %v354, %v1054
        %vm1064 = vcmp.ge.f32.partialorder %v355, %v1054
        %vm1065 = vcmp.ge.f32.partialorder %v356, %v1054
        %vm1066 = vcmp.ge.f32.partialorder %v357, %v1054
        %vm1067 = vcmp.ge.f32.partialorder %v358, %v1054
        %vm1068 = vcmp.ge.f32.partialorder %v359, %v1054
        %vm1069 = vcmp.ge.f32.partialorder %v360, %v1054
        %vm1070 = vcmp.ge.f32.partialorder %v361, %v1054
        %vm1071 = vcmp.ge.f32.partialorder %v362, %v1054
        %vm1072 = vcmp.ge.f32.partialorder %v363, %v1054
        %vm1073 = vcmp.ge.f32.partialorder %v364, %v1054
        %vm1074 = vcmp.ge.f32.partialorder %v365, %v1054
        %vm1075 = vcmp.ge.f32.partialorder %v366, %v1054
        %vm1076 = vcmp.ge.f32.partialorder %v367, %v1054
        %vm1077 = vcmp.ge.f32.partialorder %v368, %v1054
        %vm1078 = vcmp.ge.f32.partialorder %v369, %v1054
        %vm1079 = vcmp.ge.f32.partialorder %v370, %v1054
        %vm1080 = vcmp.ge.f32.partialorder %v371, %v1054
        %vm1081 = vcmp.ge.f32.partialorder %v372, %v1054
        %vm1082 = vcmp.ge.f32.partialorder %v373, %v1054
        %vm1083 = vcmp.ge.f32.partialorder %v374, %v1054
        %vm1084 = vcmp.ge.f32.partialorder %v375, %v1054
        %vm1085 = vcmp.ge.f32.partialorder %v376, %v1054
        %vm1086 = vcmp.ge.f32.partialorder %v377, %v1054
        %vm1087 = vcmp.ge.f32.partialorder %v378, %v1054
        %vm1088 = vcmp.ge.f32.partialorder %v379, %v1054
        %vm1089 = vcmp.ge.f32.partialorder %v380, %v1054
        %vm1090 = vcmp.ge.f32.partialorder %v381, %v1054
        %vm1091 = vcmp.ge.f32.partialorder %v382, %v1054
        %vm1092 = vcmp.ge.f32.partialorder %v383, %v1054
        %vm1093 = vcmp.ge.f32.partialorder %v384, %v1054
        %vm1094 = vcmp.ge.f32.partialorder %v385, %v1054
        %vm1095 = vcmp.ge.f32.partialorder %v386, %v1054
        %vm1096 = vcmp.ge.f32.partialorder %v387, %v1054
        %vm1097 = vcmp.ge.f32.partialorder %v388, %v1054
        %vm1098 = vcmp.ge.f32.partialorder %v389, %v1054
        %vm1099 = vcmp.ge.f32.partialorder %v390, %v1054
        %vm1100 = vcmp.ge.f32.partialorder %v391, %v1054
        %vm1101 = vcmp.ge.f32.partialorder %v392, %v1054
        %vm1102 = vcmp.ge.f32.partialorder %v393, %v1054
        %vm1103 = vcmp.ge.f32.partialorder %v394, %v1054
        %vm1104 = vcmp.ge.f32.partialorder %v395, %v1054
        %vm1105 = vcmp.ge.f32.partialorder %v396, %v1054
        %vm1106 = vcmp.ge.f32.partialorder %v397, %v1054
        %vm1107 = vcmp.ge.f32.partialorder %v398, %v1054
        %vm1108 = vcmp.ge.f32.partialorder %v399, %v1054
        %vm1109 = vcmp.ge.f32.partialorder %v400, %v1054
        %vm1110 = vcmp.ge.f32.partialorder %v401, %v1054
        %vm1111 = vcmp.ge.f32.partialorder %v402, %v1054
        %vm1112 = vcmp.ge.f32.partialorder %v403, %v1054
        %vm1113 = vcmp.ge.f32.partialorder %v404, %v1054
        %vm1114 = vcmp.ge.f32.partialorder %v405, %v1054
        %vm1115 = vcmp.ge.f32.partialorder %v406, %v1054
        %vm1116 = vcmp.ge.f32.partialorder %v407, %v1054
        %vm1117 = vcmp.ge.f32.partialorder %v408, %v1054
        %v1118 = vperm.slane %v1052, 0
        %vm1119 = vcmp.le.f32.partialorder %v346, %v1118
        %vm1120 = vcmp.le.f32.partialorder %v347, %v1118
        %vm1121 = vcmp.le.f32.partialorder %v348, %v1118
        %vm1122 = vcmp.le.f32.partialorder %v349, %v1118
        %vm1123 = vcmp.le.f32.partialorder %v350, %v1118
        %vm1124 = vcmp.le.f32.partialorder %v351, %v1118
        %vm1125 = vcmp.le.f32.partialorder %v352, %v1118
        %vm1126 = vcmp.le.f32.partialorder %v353, %v1118
        %vm1127 = vcmp.le.f32.partialorder %v354, %v1118
        %vm1128 = vcmp.le.f32.partialorder %v355, %v1118
        %vm1129 = vcmp.le.f32.partialorder %v356, %v1118
        %vm1130 = vcmp.le.f32.partialorder %v357, %v1118
        %vm1131 = vcmp.le.f32.partialorder %v358, %v1118
        %vm1132 = vcmp.le.f32.partialorder %v359, %v1118
        %vm1133 = vcmp.le.f32.partialorder %v360, %v1118
        %vm1134 = vcmp.le.f32.partialorder %v361, %v1118
        %vm1135 = vcmp.le.f32.partialorder %v362, %v1118
        %vm1136 = vcmp.le.f32.partialorder %v363, %v1118
        %vm1137 = vcmp.le.f32.partialorder %v364, %v1118
        %vm1138 = vcmp.le.f32.partialorder %v365, %v1118
        %vm1139 = vcmp.le.f32.partialorder %v366, %v1118
        %vm1140 = vcmp.le.f32.partialorder %v367, %v1118
        %vm1141 = vcmp.le.f32.partialorder %v368, %v1118
        %vm1142 = vcmp.le.f32.partialorder %v369, %v1118
        %vm1143 = vcmp.le.f32.partialorder %v370, %v1118
        %vm1144 = vcmp.le.f32.partialorder %v371, %v1118
        %vm1145 = vcmp.le.f32.partialorder %v372, %v1118
        %vm1146 = vcmp.le.f32.partialorder %v373, %v1118
        %vm1147 = vcmp.le.f32.partialorder %v374, %v1118
        %vm1148 = vcmp.le.f32.partialorder %v375, %v1118
        %vm1149 = vcmp.le.f32.partialorder %v376, %v1118
        %vm1150 = vcmp.le.f32.partialorder %v377, %v1118
        %vm1151 = vcmp.le.f32.partialorder %v378, %v1118
        %vm1152 = vcmp.le.f32.partialorder %v379, %v1118
        %vm1153 = vcmp.le.f32.partialorder %v380, %v1118
        %vm1154 = vcmp.le.f32.partialorder %v381, %v1118
        %vm1155 = vcmp.le.f32.partialorder %v382, %v1118
        %vm1156 = vcmp.le.f32.partialorder %v383, %v1118
        %vm1157 = vcmp.le.f32.partialorder %v384, %v1118
        %vm1158 = vcmp.le.f32.partialorder %v385, %v1118
        %vm1159 = vcmp.le.f32.partialorder %v386, %v1118
        %vm1160 = vcmp.le.f32.partialorder %v387, %v1118
        %vm1161 = vcmp.le.f32.partialorder %v388, %v1118
        %vm1162 = vcmp.le.f32.partialorder %v389, %v1118
        %vm1163 = vcmp.le.f32.partialorder %v390, %v1118
        %vm1164 = vcmp.le.f32.partialorder %v391, %v1118
        %vm1165 = vcmp.le.f32.partialorder %v392, %v1118
        %vm1166 = vcmp.le.f32.partialorder %v393, %v1118
        %vm1167 = vcmp.le.f32.partialorder %v394, %v1118
        %vm1168 = vcmp.le.f32.partialorder %v395, %v1118
        %vm1169 = vcmp.le.f32.partialorder %v396, %v1118
        %vm1170 = vcmp.le.f32.partialorder %v397, %v1118
        %vm1171 = vcmp.le.f32.partialorder %v398, %v1118
        %vm1172 = vcmp.le.f32.partialorder %v399, %v1118
        %vm1173 = vcmp.le.f32.partialorder %v400, %v1118
        %vm1174 = vcmp.le.f32.partialorder %v401, %v1118
        %vm1175 = vcmp.le.f32.partialorder %v402, %v1118
        %vm1176 = vcmp.le.f32.partialorder %v403, %v1118
        %vm1177 = vcmp.le.f32.partialorder %v404, %v1118
        %vm1178 = vcmp.le.f32.partialorder %v405, %v1118
        %vm1179 = vcmp.le.f32.partialorder %v406, %v1118
        %vm1180 = vcmp.le.f32.partialorder %v407, %v1118
        %vm1181 = vcmp.le.f32.partialorder %v408, %v1118
        %vm1182 = vmand %vm1055, %vm1119
        %vm1183 = vmand %vm1056, %vm1120
        %vm1184 = vmand %vm1057, %vm1121
        %vm1185 = vmand %vm1058, %vm1122
        %vm1186 = vmand %vm1059, %vm1123
        %vm1187 = vmand %vm1060, %vm1124
        %vm1188 = vmand %vm1061, %vm1125
        %vm1189 = vmand %vm1062, %vm1126
        %vm1190 = vmand %vm1063, %vm1127
        %vm1191 = vmand %vm1064, %vm1128
        %vm1192 = vmand %vm1065, %vm1129
        %vm1193 = vmand %vm1066, %vm1130
        %vm1194 = vmand %vm1067, %vm1131
        %vm1195 = vmand %vm1068, %vm1132
        %vm1196 = vmand %vm1069, %vm1133
        %vm1197 = vmand %vm1070, %vm1134
        %vm1198 = vmand %vm1071, %vm1135
        %vm1199 = vmand %vm1072, %vm1136
        %vm1200 = vmand %vm1073, %vm1137
        %vm1201 = vmand %vm1074, %vm1138
        %vm1202 = vmand %vm1075, %vm1139
        %vm1203 = vmand %vm1076, %vm1140
        %vm1204 = vmand %vm1077, %vm1141
        %vm1205 = vmand %vm1078, %vm1142
        %vm1206 = vmand %vm1079, %vm1143
        %vm1207 = vmand %vm1080, %vm1144
        %vm1208 = vmand %vm1081, %vm1145
        %vm1209 = vmand %vm1082, %vm1146
        %vm1210 = vmand %vm1083, %vm1147
        %vm1211 = vmand %vm1084, %vm1148
        %vm1212 = vmand %vm1085, %vm1149
        %vm1213 = vmand %vm1086, %vm1150
        %vm1214 = vmand %vm1087, %vm1151
        %vm1215 = vmand %vm1088, %vm1152
        %vm1216 = vmand %vm1089, %vm1153
        %vm1217 = vmand %vm1090, %vm1154
        %vm1218 = vmand %vm1091, %vm1155
        %vm1219 = vmand %vm1092, %vm1156
        %vm1220 = vmand %vm1093, %vm1157
        %vm1221 = vmand %vm1094, %vm1158
        %vm1222 = vmand %vm1095, %vm1159
        %vm1223 = vmand %vm1096, %vm1160
        %vm1224 = vmand %vm1097, %vm1161
        %vm1225 = vmand %vm1098, %vm1162
        %vm1226 = vmand %vm1099, %vm1163
        %vm1227 = vmand %vm1100, %vm1164
        %vm1228 = vmand %vm1101, %vm1165
        %vm1229 = vmand %vm1102, %vm1166
        %vm1230 = vmand %vm1103, %vm1167
        %vm1231 = vmand %vm1104, %vm1168
        %vm1232 = vmand %vm1105, %vm1169
        %vm1233 = vmand %vm1106, %vm1170
        %vm1234 = vmand %vm1107, %vm1171
        %vm1235 = vmand %vm1108, %vm1172
        %vm1236 = vmand %vm1109, %vm1173
        %vm1237 = vmand %vm1110, %vm1174
        %vm1238 = vmand %vm1111, %vm1175
        %vm1239 = vmand %vm1112, %vm1176
        %vm1240 = vmand %vm1113, %vm1177
        %vm1241 = vmand %vm1114, %vm1178
        %vm1242 = vmand %vm1115, %vm1179
        %vm1243 = vmand %vm1116, %vm1180
        %vm1244 = vmand %vm1117, %vm1181
        %v1245 = vperm.slane %v1053, 0
        %v1246 = vsel %vm1182, %v1245, 0.0
        %v1247 = vsel %vm1183, %v1245, 0.0
        %v1248 = vsel %vm1184, %v1245, 0.0
        %v1249 = vsel %vm1185, %v1245, 0.0
        %v1250 = vsel %vm1186, %v1245, 0.0
        %v1251 = vsel %vm1187, %v1245, 0.0
        %v1252 = vsel %vm1188, %v1245, 0.0
        %v1253 = vsel %vm1189, %v1245, 0.0
        %v1254 = vsel %vm1190, %v1245, 0.0
        %v1255 = vsel %vm1191, %v1245, 0.0
        %v1256 = vsel %vm1192, %v1245, 0.0
        %v1257 = vsel %vm1193, %v1245, 0.0
        %v1258 = vsel %vm1194, %v1245, 0.0
        %v1259 = vsel %vm1195, %v1245, 0.0
        %v1260 = vsel %vm1196, %v1245, 0.0
        %v1261 = vsel %vm1197, %v1245, 0.0
        %v1262 = vsel %vm1198, %v1245, 0.0
        %v1263 = vsel %vm1199, %v1245, 0.0
        %v1264 = vsel %vm1200, %v1245, 0.0
        %v1265 = vsel %vm1201, %v1245, 0.0
        %v1266 = vsel %vm1202, %v1245, 0.0
        %v1267 = vsel %vm1203, %v1245, 0.0
        %v1268 = vsel %vm1204, %v1245, 0.0
        %v1269 = vsel %vm1205, %v1245, 0.0
        %v1270 = vsel %vm1206, %v1245, 0.0
        %v1271 = vsel %vm1207, %v1245, 0.0
        %v1272 = vsel %vm1208, %v1245, 0.0
        %v1273 = vsel %vm1209, %v1245, 0.0
        %v1274 = vsel %vm1210, %v1245, 0.0
        %v1275 = vsel %vm1211, %v1245, 0.0
        %v1276 = vsel %vm1212, %v1245, 0.0
        %v1277 = vsel %vm1213, %v1245, 0.0
        %v1278 = vsel %vm1214, %v1245, 0.0
        %v1279 = vsel %vm1215, %v1245, 0.0
        %v1280 = vsel %vm1216, %v1245, 0.0
        %v1281 = vsel %vm1217, %v1245, 0.0
        %v1282 = vsel %vm1218, %v1245, 0.0
        %v1283 = vsel %vm1219, %v1245, 0.0
        %v1284 = vsel %vm1220, %v1245, 0.0
        %v1285 = vsel %vm1221, %v1245, 0.0
        %v1286 = vsel %vm1222, %v1245, 0.0
        %v1287 = vsel %vm1223, %v1245, 0.0
        %v1288 = vsel %vm1224, %v1245, 0.0
        %v1289 = vsel %vm1225, %v1245, 0.0
        %v1290 = vsel %vm1226, %v1245, 0.0
        %v1291 = vsel %vm1227, %v1245, 0.0
        %v1292 = vsel %vm1228, %v1245, 0.0
        %v1293 = vsel %vm1229, %v1245, 0.0
        %v1294 = vsel %vm1230, %v1245, 0.0
        %v1295 = vsel %vm1231, %v1245, 0.0
        %v1296 = vsel %vm1232, %v1245, 0.0
        %v1297 = vsel %vm1233, %v1245, 0.0
        %v1298 = vsel %vm1234, %v1245, 0.0
        %v1299 = vsel %vm1235, %v1245, 0.0
        %v1300 = vsel %vm1236, %v1245, 0.0
        %v1301 = vsel %vm1237, %v1245, 0.0
        %v1302 = vsel %vm1238, %v1245, 0.0
        %v1303 = vsel %vm1239, %v1245, 0.0
        %v1304 = vsel %vm1240, %v1245, 0.0
        %v1305 = vsel %vm1241, %v1245, 0.0
        %v1306 = vsel %vm1242, %v1245, 0.0
        %v1307 = vsel %vm1243, %v1245, 0.0
        %v1308 = vsel %vm1244, %v1245, 0.0
        %v1309 = vadd.f32 %v988, %v1246
        %v1310 = vadd.f32 %v989, %v1247
        %v1311 = vadd.f32 %v990, %v1248
        %v1312 = vadd.f32 %v991, %v1249
        %v1313 = vadd.f32 %v992, %v1250
        %v1314 = vadd.f32 %v993, %v1251
        %v1315 = vadd.f32 %v994, %v1252
        %v1316 = vadd.f32 %v995, %v1253
        %v1317 = vadd.f32 %v996, %v1254
        %v1318 = vadd.f32 %v997, %v1255
        %v1319 = vadd.f32 %v998, %v1256
        %v1320 = vadd.f32 %v999, %v1257
        %v1321 = vadd.f32 %v1000, %v1258
        %v1322 = vadd.f32 %v1001, %v1259
        %v1323 = vadd.f32 %v1002, %v1260
        %v1324 = vadd.f32 %v1003, %v1261
        %v1325 = vadd.f32 %v1004, %v1262
        %v1326 = vadd.f32 %v1005, %v1263
        %v1327 = vadd.f32 %v1006, %v1264
        %v1328 = vadd.f32 %v1007, %v1265
        %v1329 = vadd.f32 %v1008, %v1266
        %v1330 = vadd.f32 %v1009, %v1267
        %v1331 = vadd.f32 %v1010, %v1268
        %v1332 = vadd.f32 %v1011, %v1269
        %v1333 = vadd.f32 %v1012, %v1270
        %v1334 = vadd.f32 %v1013, %v1271
        %v1335 = vadd.f32 %v1014, %v1272
        %v1336 = vadd.f32 %v1015, %v1273
        %v1337 = vadd.f32 %v1016, %v1274
        %v1338 = vadd.f32 %v1017, %v1275
        %v1339 = vadd.f32 %v1018, %v1276
        %v1340 = vadd.f32 %v1019, %v1277
        %v1341 = vadd.f32 %v1020, %v1278
        %v1342 = vadd.f32 %v1021, %v1279
        %v1343 = vadd.f32 %v1022, %v1280
        %v1344 = vadd.f32 %v1023, %v1281
        %v1345 = vadd.f32 %v1024, %v1282
        %v1346 = vadd.f32 %v1025, %v1283
        %v1347 = vadd.f32 %v1026, %v1284
        %v1348 = vadd.f32 %v1027, %v1285
        %v1349 = vadd.f32 %v1028, %v1286
        %v1350 = vadd.f32 %v1029, %v1287
        %v1351 = vadd.f32 %v1030, %v1288
        %v1352 = vadd.f32 %v1031, %v1289
        %v1353 = vadd.f32 %v1032, %v1290
        %v1354 = vadd.f32 %v1033, %v1291
        %v1355 = vadd.f32 %v1034, %v1292
        %v1356 = vadd.f32 %v1035, %v1293
        %v1357 = vadd.f32 %v1036, %v1294
        %v1358 = vadd.f32 %v1037, %v1295
        %v1359 = vadd.f32 %v1038, %v1296
        %v1360 = vadd.f32 %v1039, %v1297
        %v1361 = vadd.f32 %v1040, %v1298
        %v1362 = vadd.f32 %v1041, %v1299
        %v1363 = vadd.f32 %v1042, %v1300
        %v1364 = vadd.f32 %v1043, %v1301
        %v1365 = vadd.f32 %v1044, %v1302
        %v1366 = vadd.f32 %v1045, %v1303
        %v1367 = vadd.f32 %v1046, %v1304
        %v1368 = vadd.f32 %v1047, %v1305
        %v1369 = vadd.f32 %v1048, %v1306
        %v1370 = vadd.f32 %v1049, %v1307
        %v1371 = vadd.f32 %v1050, %v1308
        %v1372 = vld [vmem:[#allocation6 + $0x3] sm:$0x1]
        %v1373 = vld [vmem:[#allocation8 + $0x3] sm:$0x1]
        %v1374 = vld [vmem:[#allocation9 + $0x3] sm:$0x1]
        %v1375 = vperm.slane %v1372, 0
        %vm1376 = vcmp.ge.f32.partialorder %v346, %v1375
        %vm1377 = vcmp.ge.f32.partialorder %v347, %v1375
        %vm1378 = vcmp.ge.f32.partialorder %v348, %v1375
        %vm1379 = vcmp.ge.f32.partialorder %v349, %v1375
        %vm1380 = vcmp.ge.f32.partialorder %v350, %v1375
        %vm1381 = vcmp.ge.f32.partialorder %v351, %v1375
        %vm1382 = vcmp.ge.f32.partialorder %v352, %v1375
        %vm1383 = vcmp.ge.f32.partialorder %v353, %v1375
        %vm1384 = vcmp.ge.f32.partialorder %v354, %v1375
        %vm1385 = vcmp.ge.f32.partialorder %v355, %v1375
        %vm1386 = vcmp.ge.f32.partialorder %v356, %v1375
        %vm1387 = vcmp.ge.f32.partialorder %v357, %v1375
        %vm1388 = vcmp.ge.f32.partialorder %v358, %v1375
        %vm1389 = vcmp.ge.f32.partialorder %v359, %v1375
        %vm1390 = vcmp.ge.f32.partialorder %v360, %v1375
        %vm1391 = vcmp.ge.f32.partialorder %v361, %v1375
        %vm1392 = vcmp.ge.f32.partialorder %v362, %v1375
        %vm1393 = vcmp.ge.f32.partialorder %v363, %v1375
        %vm1394 = vcmp.ge.f32.partialorder %v364, %v1375
        %vm1395 = vcmp.ge.f32.partialorder %v365, %v1375
        %vm1396 = vcmp.ge.f32.partialorder %v366, %v1375
        %vm1397 = vcmp.ge.f32.partialorder %v367, %v1375
        %vm1398 = vcmp.ge.f32.partialorder %v368, %v1375
        %vm1399 = vcmp.ge.f32.partialorder %v369, %v1375
        %vm1400 = vcmp.ge.f32.partialorder %v370, %v1375
        %vm1401 = vcmp.ge.f32.partialorder %v371, %v1375
        %vm1402 = vcmp.ge.f32.partialorder %v372, %v1375
        %vm1403 = vcmp.ge.f32.partialorder %v373, %v1375
        %vm1404 = vcmp.ge.f32.partialorder %v374, %v1375
        %vm1405 = vcmp.ge.f32.partialorder %v375, %v1375
        %vm1406 = vcmp.ge.f32.partialorder %v376, %v1375
        %vm1407 = vcmp.ge.f32.partialorder %v377, %v1375
        %vm1408 = vcmp.ge.f32.partialorder %v378, %v1375
        %vm1409 = vcmp.ge.f32.partialorder %v379, %v1375
        %vm1410 = vcmp.ge.f32.partialorder %v380, %v1375
        %vm1411 = vcmp.ge.f32.partialorder %v381, %v1375
        %vm1412 = vcmp.ge.f32.partialorder %v382, %v1375
        %vm1413 = vcmp.ge.f32.partialorder %v383, %v1375
        %vm1414 = vcmp.ge.f32.partialorder %v384, %v1375
        %vm1415 = vcmp.ge.f32.partialorder %v385, %v1375
        %vm1416 = vcmp.ge.f32.partialorder %v386, %v1375
        %vm1417 = vcmp.ge.f32.partialorder %v387, %v1375
        %vm1418 = vcmp.ge.f32.partialorder %v388, %v1375
        %vm1419 = vcmp.ge.f32.partialorder %v389, %v1375
        %vm1420 = vcmp.ge.f32.partialorder %v390, %v1375
        %vm1421 = vcmp.ge.f32.partialorder %v391, %v1375
        %vm1422 = vcmp.ge.f32.partialorder %v392, %v1375
        %vm1423 = vcmp.ge.f32.partialorder %v393, %v1375
        %vm1424 = vcmp.ge.f32.partialorder %v394, %v1375
        %vm1425 = vcmp.ge.f32.partialorder %v395, %v1375
        %vm1426 = vcmp.ge.f32.partialorder %v396, %v1375
        %vm1427 = vcmp.ge.f32.partialorder %v397, %v1375
        %vm1428 = vcmp.ge.f32.partialorder %v398, %v1375
        %vm1429 = vcmp.ge.f32.partialorder %v399, %v1375
        %vm1430 = vcmp.ge.f32.partialorder %v400, %v1375
        %vm1431 = vcmp.ge.f32.partialorder %v401, %v1375
        %vm1432 = vcmp.ge.f32.partialorder %v402, %v1375
        %vm1433 = vcmp.ge.f32.partialorder %v403, %v1375
        %vm1434 = vcmp.ge.f32.partialorder %v404, %v1375
        %vm1435 = vcmp.ge.f32.partialorder %v405, %v1375
        %vm1436 = vcmp.ge.f32.partialorder %v406, %v1375
        %vm1437 = vcmp.ge.f32.partialorder %v407, %v1375
        %vm1438 = vcmp.ge.f32.partialorder %v408, %v1375
        %v1439 = vperm.slane %v1373, 0
        %vm1440 = vcmp.le.f32.partialorder %v346, %v1439
        %vm1441 = vcmp.le.f32.partialorder %v347, %v1439
        %vm1442 = vcmp.le.f32.partialorder %v348, %v1439
        %vm1443 = vcmp.le.f32.partialorder %v349, %v1439
        %vm1444 = vcmp.le.f32.partialorder %v350, %v1439
        %vm1445 = vcmp.le.f32.partialorder %v351, %v1439
        %vm1446 = vcmp.le.f32.partialorder %v352, %v1439
        %vm1447 = vcmp.le.f32.partialorder %v353, %v1439
        %vm1448 = vcmp.le.f32.partialorder %v354, %v1439
        %vm1449 = vcmp.le.f32.partialorder %v355, %v1439
        %vm1450 = vcmp.le.f32.partialorder %v356, %v1439
        %vm1451 = vcmp.le.f32.partialorder %v357, %v1439
        %vm1452 = vcmp.le.f32.partialorder %v358, %v1439
        %vm1453 = vcmp.le.f32.partialorder %v359, %v1439
        %vm1454 = vcmp.le.f32.partialorder %v360, %v1439
        %vm1455 = vcmp.le.f32.partialorder %v361, %v1439
        %vm1456 = vcmp.le.f32.partialorder %v362, %v1439
        %vm1457 = vcmp.le.f32.partialorder %v363, %v1439
        %vm1458 = vcmp.le.f32.partialorder %v364, %v1439
        %vm1459 = vcmp.le.f32.partialorder %v365, %v1439
        %vm1460 = vcmp.le.f32.partialorder %v366, %v1439
        %vm1461 = vcmp.le.f32.partialorder %v367, %v1439
        %vm1462 = vcmp.le.f32.partialorder %v368, %v1439
        %vm1463 = vcmp.le.f32.partialorder %v369, %v1439
        %vm1464 = vcmp.le.f32.partialorder %v370, %v1439
        %vm1465 = vcmp.le.f32.partialorder %v371, %v1439
        %vm1466 = vcmp.le.f32.partialorder %v372, %v1439
        %vm1467 = vcmp.le.f32.partialorder %v373, %v1439
        %vm1468 = vcmp.le.f32.partialorder %v374, %v1439
        %vm1469 = vcmp.le.f32.partialorder %v375, %v1439
        %vm1470 = vcmp.le.f32.partialorder %v376, %v1439
        %vm1471 = vcmp.le.f32.partialorder %v377, %v1439
        %vm1472 = vcmp.le.f32.partialorder %v378, %v1439
        %vm1473 = vcmp.le.f32.partialorder %v379, %v1439
        %vm1474 = vcmp.le.f32.partialorder %v380, %v1439
        %vm1475 = vcmp.le.f32.partialorder %v381, %v1439
        %vm1476 = vcmp.le.f32.partialorder %v382, %v1439
        %vm1477 = vcmp.le.f32.partialorder %v383, %v1439
        %vm1478 = vcmp.le.f32.partialorder %v384, %v1439
        %vm1479 = vcmp.le.f32.partialorder %v385, %v1439
        %vm1480 = vcmp.le.f32.partialorder %v386, %v1439
        %vm1481 = vcmp.le.f32.partialorder %v387, %v1439
        %vm1482 = vcmp.le.f32.partialorder %v388, %v1439
        %vm1483 = vcmp.le.f32.partialorder %v389, %v1439
        %vm1484 = vcmp.le.f32.partialorder %v390, %v1439
        %vm1485 = vcmp.le.f32.partialorder %v391, %v1439
        %vm1486 = vcmp.le.f32.partialorder %v392, %v1439
        %vm1487 = vcmp.le.f32.partialorder %v393, %v1439
        %vm1488 = vcmp.le.f32.partialorder %v394, %v1439
        %vm1489 = vcmp.le.f32.partialorder %v395, %v1439
        %vm1490 = vcmp.le.f32.partialorder %v396, %v1439
        %vm1491 = vcmp.le.f32.partialorder %v397, %v1439
        %vm1492 = vcmp.le.f32.partialorder %v398, %v1439
        %vm1493 = vcmp.le.f32.partialorder %v399, %v1439
        %vm1494 = vcmp.le.f32.partialorder %v400, %v1439
        %vm1495 = vcmp.le.f32.partialorder %v401, %v1439
        %vm1496 = vcmp.le.f32.partialorder %v402, %v1439
        %vm1497 = vcmp.le.f32.partialorder %v403, %v1439
        %vm1498 = vcmp.le.f32.partialorder %v404, %v1439
        %vm1499 = vcmp.le.f32.partialorder %v405, %v1439
        %vm1500 = vcmp.le.f32.partialorder %v406, %v1439
        %vm1501 = vcmp.le.f32.partialorder %v407, %v1439
        %vm1502 = vcmp.le.f32.partialorder %v408, %v1439
        %vm1503 = vmand %vm1376, %vm1440
        %vm1504 = vmand %vm1377, %vm1441
        %vm1505 = vmand %vm1378, %vm1442
        %vm1506 = vmand %vm1379, %vm1443
        %vm1507 = vmand %vm1380, %vm1444
        %vm1508 = vmand %vm1381, %vm1445
        %vm1509 = vmand %vm1382, %vm1446
        %vm1510 = vmand %vm1383, %vm1447
        %vm1511 = vmand %vm1384, %vm1448
        %vm1512 = vmand %vm1385, %vm1449
        %vm1513 = vmand %vm1386, %vm1450
        %vm1514 = vmand %vm1387, %vm1451
        %vm1515 = vmand %vm1388, %vm1452
        %vm1516 = vmand %vm1389, %vm1453
        %vm1517 = vmand %vm1390, %vm1454
        %vm1518 = vmand %vm1391, %vm1455
        %vm1519 = vmand %vm1392, %vm1456
        %vm1520 = vmand %vm1393, %vm1457
        %vm1521 = vmand %vm1394, %vm1458
        %vm1522 = vmand %vm1395, %vm1459
        %vm1523 = vmand %vm1396, %vm1460
        %vm1524 = vmand %vm1397, %vm1461
        %vm1525 = vmand %vm1398, %vm1462
        %vm1526 = vmand %vm1399, %vm1463
        %vm1527 = vmand %vm1400, %vm1464
        %vm1528 = vmand %vm1401, %vm1465
        %vm1529 = vmand %vm1402, %vm1466
        %vm1530 = vmand %vm1403, %vm1467
        %vm1531 = vmand %vm1404, %vm1468
        %vm1532 = vmand %vm1405, %vm1469
        %vm1533 = vmand %vm1406, %vm1470
        %vm1534 = vmand %vm1407, %vm1471
        %vm1535 = vmand %vm1408, %vm1472
        %vm1536 = vmand %vm1409, %vm1473
        %vm1537 = vmand %vm1410, %vm1474
        %vm1538 = vmand %vm1411, %vm1475
        %vm1539 = vmand %vm1412, %vm1476
        %vm1540 = vmand %vm1413, %vm1477
        %vm1541 = vmand %vm1414, %vm1478
        %vm1542 = vmand %vm1415, %vm1479
        %vm1543 = vmand %vm1416, %vm1480
        %vm1544 = vmand %vm1417, %vm1481
        %vm1545 = vmand %vm1418, %vm1482
        %vm1546 = vmand %vm1419, %vm1483
        %vm1547 = vmand %vm1420, %vm1484
        %vm1548 = vmand %vm1421, %vm1485
        %vm1549 = vmand %vm1422, %vm1486
        %vm1550 = vmand %vm1423, %vm1487
        %vm1551 = vmand %vm1424, %vm1488
        %vm1552 = vmand %vm1425, %vm1489
        %vm1553 = vmand %vm1426, %vm1490
        %vm1554 = vmand %vm1427, %vm1491
        %vm1555 = vmand %vm1428, %vm1492
        %vm1556 = vmand %vm1429, %vm1493
        %vm1557 = vmand %vm1430, %vm1494
        %vm1558 = vmand %vm1431, %vm1495
        %vm1559 = vmand %vm1432, %vm1496
        %vm1560 = vmand %vm1433, %vm1497
        %vm1561 = vmand %vm1434, %vm1498
        %vm1562 = vmand %vm1435, %vm1499
        %vm1563 = vmand %vm1436, %vm1500
        %vm1564 = vmand %vm1437, %vm1501
        %vm1565 = vmand %vm1438, %vm1502
        %v1566 = vperm.slane %v1374, 0
        %v1567 = vsel %vm1503, %v1566, 0.0
        %v1568 = vsel %vm1504, %v1566, 0.0
        %v1569 = vsel %vm1505, %v1566, 0.0
        %v1570 = vsel %vm1506, %v1566, 0.0
        %v1571 = vsel %vm1507, %v1566, 0.0
        %v1572 = vsel %vm1508, %v1566, 0.0
        %v1573 = vsel %vm1509, %v1566, 0.0
        %v1574 = vsel %vm1510, %v1566, 0.0
        %v1575 = vsel %vm1511, %v1566, 0.0
        %v1576 = vsel %vm1512, %v1566, 0.0
        %v1577 = vsel %vm1513, %v1566, 0.0
        %v1578 = vsel %vm1514, %v1566, 0.0
        %v1579 = vsel %vm1515, %v1566, 0.0
        %v1580 = vsel %vm1516, %v1566, 0.0
        %v1581 = vsel %vm1517, %v1566, 0.0
        %v1582 = vsel %vm1518, %v1566, 0.0
        %v1583 = vsel %vm1519, %v1566, 0.0
        %v1584 = vsel %vm1520, %v1566, 0.0
        %v1585 = vsel %vm1521, %v1566, 0.0
        %v1586 = vsel %vm1522, %v1566, 0.0
        %v1587 = vsel %vm1523, %v1566, 0.0
        %v1588 = vsel %vm1524, %v1566, 0.0
        %v1589 = vsel %vm1525, %v1566, 0.0
        %v1590 = vsel %vm1526, %v1566, 0.0
        %v1591 = vsel %vm1527, %v1566, 0.0
        %v1592 = vsel %vm1528, %v1566, 0.0
        %v1593 = vsel %vm1529, %v1566, 0.0
        %v1594 = vsel %vm1530, %v1566, 0.0
        %v1595 = vsel %vm1531, %v1566, 0.0
        %v1596 = vsel %vm1532, %v1566, 0.0
        %v1597 = vsel %vm1533, %v1566, 0.0
        %v1598 = vsel %vm1534, %v1566, 0.0
        %v1599 = vsel %vm1535, %v1566, 0.0
        %v1600 = vsel %vm1536, %v1566, 0.0
        %v1601 = vsel %vm1537, %v1566, 0.0
        %v1602 = vsel %vm1538, %v1566, 0.0
        %v1603 = vsel %vm1539, %v1566, 0.0
        %v1604 = vsel %vm1540, %v1566, 0.0
        %v1605 = vsel %vm1541, %v1566, 0.0
        %v1606 = vsel %vm1542, %v1566, 0.0
        %v1607 = vsel %vm1543, %v1566, 0.0
        %v1608 = vsel %vm1544, %v1566, 0.0
        %v1609 = vsel %vm1545, %v1566, 0.0
        %v1610 = vsel %vm1546, %v1566, 0.0
        %v1611 = vsel %vm1547, %v1566, 0.0
        %v1612 = vsel %vm1548, %v1566, 0.0
        %v1613 = vsel %vm1549, %v1566, 0.0
        %v1614 = vsel %vm1550, %v1566, 0.0
        %v1615 = vsel %vm1551, %v1566, 0.0
        %v1616 = vsel %vm1552, %v1566, 0.0
        %v1617 = vsel %vm1553, %v1566, 0.0
        %v1618 = vsel %vm1554, %v1566, 0.0
        %v1619 = vsel %vm1555, %v1566, 0.0
        %v1620 = vsel %vm1556, %v1566, 0.0
        %v1621 = vsel %vm1557, %v1566, 0.0
        %v1622 = vsel %vm1558, %v1566, 0.0
        %v1623 = vsel %vm1559, %v1566, 0.0
        %v1624 = vsel %vm1560, %v1566, 0.0
        %v1625 = vsel %vm1561, %v1566, 0.0
        %v1626 = vsel %vm1562, %v1566, 0.0
        %v1627 = vsel %vm1563, %v1566, 0.0
        %v1628 = vsel %vm1564, %v1566, 0.0
        %v1629 = vsel %vm1565, %v1566, 0.0
        %v1630 = vadd.f32 %v1309, %v1567
        %v1631 = vadd.f32 %v1310, %v1568
        %v1632 = vadd.f32 %v1311, %v1569
        %v1633 = vadd.f32 %v1312, %v1570
        %v1634 = vadd.f32 %v1313, %v1571
        %v1635 = vadd.f32 %v1314, %v1572
        %v1636 = vadd.f32 %v1315, %v1573
        %v1637 = vadd.f32 %v1316, %v1574
        %v1638 = vadd.f32 %v1317, %v1575
        %v1639 = vadd.f32 %v1318, %v1576
        %v1640 = vadd.f32 %v1319, %v1577
        %v1641 = vadd.f32 %v1320, %v1578
        %v1642 = vadd.f32 %v1321, %v1579
        %v1643 = vadd.f32 %v1322, %v1580
        %v1644 = vadd.f32 %v1323, %v1581
        %v1645 = vadd.f32 %v1324, %v1582
        %v1646 = vadd.f32 %v1325, %v1583
        %v1647 = vadd.f32 %v1326, %v1584
        %v1648 = vadd.f32 %v1327, %v1585
        %v1649 = vadd.f32 %v1328, %v1586
        %v1650 = vadd.f32 %v1329, %v1587
        %v1651 = vadd.f32 %v1330, %v1588
        %v1652 = vadd.f32 %v1331, %v1589
        %v1653 = vadd.f32 %v1332, %v1590
        %v1654 = vadd.f32 %v1333, %v1591
        %v1655 = vadd.f32 %v1334, %v1592
        %v1656 = vadd.f32 %v1335, %v1593
        %v1657 = vadd.f32 %v1336, %v1594
        %v1658 = vadd.f32 %v1337, %v1595
        %v1659 = vadd.f32 %v1338, %v1596
        %v1660 = vadd.f32 %v1339, %v1597
        %v1661 = vadd.f32 %v1340, %v1598
        %v1662 = vadd.f32 %v1341, %v1599
        %v1663 = vadd.f32 %v1342, %v1600
        %v1664 = vadd.f32 %v1343, %v1601
        %v1665 = vadd.f32 %v1344, %v1602
        %v1666 = vadd.f32 %v1345, %v1603
        %v1667 = vadd.f32 %v1346, %v1604
        %v1668 = vadd.f32 %v1347, %v1605
        %v1669 = vadd.f32 %v1348, %v1606
        %v1670 = vadd.f32 %v1349, %v1607
        %v1671 = vadd.f32 %v1350, %v1608
        %v1672 = vadd.f32 %v1351, %v1609
        %v1673 = vadd.f32 %v1352, %v1610
        %v1674 = vadd.f32 %v1353, %v1611
        %v1675 = vadd.f32 %v1354, %v1612
        %v1676 = vadd.f32 %v1355, %v1613
        %v1677 = vadd.f32 %v1356, %v1614
        %v1678 = vadd.f32 %v1357, %v1615
        %v1679 = vadd.f32 %v1358, %v1616
        %v1680 = vadd.f32 %v1359, %v1617
        %v1681 = vadd.f32 %v1360, %v1618
        %v1682 = vadd.f32 %v1361, %v1619
        %v1683 = vadd.f32 %v1362, %v1620
        %v1684 = vadd.f32 %v1363, %v1621
        %v1685 = vadd.f32 %v1364, %v1622
        %v1686 = vadd.f32 %v1365, %v1623
        %v1687 = vadd.f32 %v1366, %v1624
        %v1688 = vadd.f32 %v1367, %v1625
        %v1689 = vadd.f32 %v1368, %v1626
        %v1690 = vadd.f32 %v1369, %v1627
        %v1691 = vadd.f32 %v1370, %v1628
        %v1692 = vadd.f32 %v1371, %v1629
        %v1693 = vld [vmem:[#allocation6 + $0x4] sm:$0x1]
        %v1694 = vld [vmem:[#allocation8 + $0x4] sm:$0x1]
        %v1695 = vld [vmem:[#allocation9 + $0x4] sm:$0x1]
        %v1696 = vperm.slane %v1693, 0
        %vm1697 = vcmp.ge.f32.partialorder %v346, %v1696
        %vm1698 = vcmp.ge.f32.partialorder %v347, %v1696
        %vm1699 = vcmp.ge.f32.partialorder %v348, %v1696
        %vm1700 = vcmp.ge.f32.partialorder %v349, %v1696
        %vm1701 = vcmp.ge.f32.partialorder %v350, %v1696
        %vm1702 = vcmp.ge.f32.partialorder %v351, %v1696
        %vm1703 = vcmp.ge.f32.partialorder %v352, %v1696
        %vm1704 = vcmp.ge.f32.partialorder %v353, %v1696
        %vm1705 = vcmp.ge.f32.partialorder %v354, %v1696
        %vm1706 = vcmp.ge.f32.partialorder %v355, %v1696
        %vm1707 = vcmp.ge.f32.partialorder %v356, %v1696
        %vm1708 = vcmp.ge.f32.partialorder %v357, %v1696
        %vm1709 = vcmp.ge.f32.partialorder %v358, %v1696
        %vm1710 = vcmp.ge.f32.partialorder %v359, %v1696
        %vm1711 = vcmp.ge.f32.partialorder %v360, %v1696
        %vm1712 = vcmp.ge.f32.partialorder %v361, %v1696
        %vm1713 = vcmp.ge.f32.partialorder %v362, %v1696
        %vm1714 = vcmp.ge.f32.partialorder %v363, %v1696
        %vm1715 = vcmp.ge.f32.partialorder %v364, %v1696
        %vm1716 = vcmp.ge.f32.partialorder %v365, %v1696
        %vm1717 = vcmp.ge.f32.partialorder %v366, %v1696
        %vm1718 = vcmp.ge.f32.partialorder %v367, %v1696
        %vm1719 = vcmp.ge.f32.partialorder %v368, %v1696
        %vm1720 = vcmp.ge.f32.partialorder %v369, %v1696
        %vm1721 = vcmp.ge.f32.partialorder %v370, %v1696
        %vm1722 = vcmp.ge.f32.partialorder %v371, %v1696
        %vm1723 = vcmp.ge.f32.partialorder %v372, %v1696
        %vm1724 = vcmp.ge.f32.partialorder %v373, %v1696
        %vm1725 = vcmp.ge.f32.partialorder %v374, %v1696
        %vm1726 = vcmp.ge.f32.partialorder %v375, %v1696
        %vm1727 = vcmp.ge.f32.partialorder %v376, %v1696
        %vm1728 = vcmp.ge.f32.partialorder %v377, %v1696
        %vm1729 = vcmp.ge.f32.partialorder %v378, %v1696
        %vm1730 = vcmp.ge.f32.partialorder %v379, %v1696
        %vm1731 = vcmp.ge.f32.partialorder %v380, %v1696
        %vm1732 = vcmp.ge.f32.partialorder %v381, %v1696
        %vm1733 = vcmp.ge.f32.partialorder %v382, %v1696
        %vm1734 = vcmp.ge.f32.partialorder %v383, %v1696
        %vm1735 = vcmp.ge.f32.partialorder %v384, %v1696
        %vm1736 = vcmp.ge.f32.partialorder %v385, %v1696
        %vm1737 = vcmp.ge.f32.partialorder %v386, %v1696
        %vm1738 = vcmp.ge.f32.partialorder %v387, %v1696
        %vm1739 = vcmp.ge.f32.partialorder %v388, %v1696
        %vm1740 = vcmp.ge.f32.partialorder %v389, %v1696
        %vm1741 = vcmp.ge.f32.partialorder %v390, %v1696
        %vm1742 = vcmp.ge.f32.partialorder %v391, %v1696
        %vm1743 = vcmp.ge.f32.partialorder %v392, %v1696
        %vm1744 = vcmp.ge.f32.partialorder %v393, %v1696
        %vm1745 = vcmp.ge.f32.partialorder %v394, %v1696
        %vm1746 = vcmp.ge.f32.partialorder %v395, %v1696
        %vm1747 = vcmp.ge.f32.partialorder %v396, %v1696
        %vm1748 = vcmp.ge.f32.partialorder %v397, %v1696
        %vm1749 = vcmp.ge.f32.partialorder %v398, %v1696
        %vm1750 = vcmp.ge.f32.partialorder %v399, %v1696
        %vm1751 = vcmp.ge.f32.partialorder %v400, %v1696
        %vm1752 = vcmp.ge.f32.partialorder %v401, %v1696
        %vm1753 = vcmp.ge.f32.partialorder %v402, %v1696
        %vm1754 = vcmp.ge.f32.partialorder %v403, %v1696
        %vm1755 = vcmp.ge.f32.partialorder %v404, %v1696
        %vm1756 = vcmp.ge.f32.partialorder %v405, %v1696
        %vm1757 = vcmp.ge.f32.partialorder %v406, %v1696
        %vm1758 = vcmp.ge.f32.partialorder %v407, %v1696
        %vm1759 = vcmp.ge.f32.partialorder %v408, %v1696
        %v1760 = vperm.slane %v1694, 0
        %vm1761 = vcmp.le.f32.partialorder %v346, %v1760
        %vm1762 = vcmp.le.f32.partialorder %v347, %v1760
        %vm1763 = vcmp.le.f32.partialorder %v348, %v1760
        %vm1764 = vcmp.le.f32.partialorder %v349, %v1760
        %vm1765 = vcmp.le.f32.partialorder %v350, %v1760
        %vm1766 = vcmp.le.f32.partialorder %v351, %v1760
        %vm1767 = vcmp.le.f32.partialorder %v352, %v1760
        %vm1768 = vcmp.le.f32.partialorder %v353, %v1760
        %vm1769 = vcmp.le.f32.partialorder %v354, %v1760
        %vm1770 = vcmp.le.f32.partialorder %v355, %v1760
        %vm1771 = vcmp.le.f32.partialorder %v356, %v1760
        %vm1772 = vcmp.le.f32.partialorder %v357, %v1760
        %vm1773 = vcmp.le.f32.partialorder %v358, %v1760
        %vm1774 = vcmp.le.f32.partialorder %v359, %v1760
        %vm1775 = vcmp.le.f32.partialorder %v360, %v1760
        %vm1776 = vcmp.le.f32.partialorder %v361, %v1760
        %vm1777 = vcmp.le.f32.partialorder %v362, %v1760
        %vm1778 = vcmp.le.f32.partialorder %v363, %v1760
        %vm1779 = vcmp.le.f32.partialorder %v364, %v1760
        %vm1780 = vcmp.le.f32.partialorder %v365, %v1760
        %vm1781 = vcmp.le.f32.partialorder %v366, %v1760
        %vm1782 = vcmp.le.f32.partialorder %v367, %v1760
        %vm1783 = vcmp.le.f32.partialorder %v368, %v1760
        %vm1784 = vcmp.le.f32.partialorder %v369, %v1760
        %vm1785 = vcmp.le.f32.partialorder %v370, %v1760
        %vm1786 = vcmp.le.f32.partialorder %v371, %v1760
        %vm1787 = vcmp.le.f32.partialorder %v372, %v1760
        %vm1788 = vcmp.le.f32.partialorder %v373, %v1760
        %vm1789 = vcmp.le.f32.partialorder %v374, %v1760
        %vm1790 = vcmp.le.f32.partialorder %v375, %v1760
        %vm1791 = vcmp.le.f32.partialorder %v376, %v1760
        %vm1792 = vcmp.le.f32.partialorder %v377, %v1760
        %vm1793 = vcmp.le.f32.partialorder %v378, %v1760
        %vm1794 = vcmp.le.f32.partialorder %v379, %v1760
        %vm1795 = vcmp.le.f32.partialorder %v380, %v1760
        %vm1796 = vcmp.le.f32.partialorder %v381, %v1760
        %vm1797 = vcmp.le.f32.partialorder %v382, %v1760
        %vm1798 = vcmp.le.f32.partialorder %v383, %v1760
        %vm1799 = vcmp.le.f32.partialorder %v384, %v1760
        %vm1800 = vcmp.le.f32.partialorder %v385, %v1760
        %vm1801 = vcmp.le.f32.partialorder %v386, %v1760
        %vm1802 = vcmp.le.f32.partialorder %v387, %v1760
        %vm1803 = vcmp.le.f32.partialorder %v388, %v1760
        %vm1804 = vcmp.le.f32.partialorder %v389, %v1760
        %vm1805 = vcmp.le.f32.partialorder %v390, %v1760
        %vm1806 = vcmp.le.f32.partialorder %v391, %v1760
        %vm1807 = vcmp.le.f32.partialorder %v392, %v1760
        %vm1808 = vcmp.le.f32.partialorder %v393, %v1760
        %vm1809 = vcmp.le.f32.partialorder %v394, %v1760
        %vm1810 = vcmp.le.f32.partialorder %v395, %v1760
        %vm1811 = vcmp.le.f32.partialorder %v396, %v1760
        %vm1812 = vcmp.le.f32.partialorder %v397, %v1760
        %vm1813 = vcmp.le.f32.partialorder %v398, %v1760
        %vm1814 = vcmp.le.f32.partialorder %v399, %v1760
        %vm1815 = vcmp.le.f32.partialorder %v400, %v1760
        %vm1816 = vcmp.le.f32.partialorder %v401, %v1760
        %vm1817 = vcmp.le.f32.partialorder %v402, %v1760
        %vm1818 = vcmp.le.f32.partialorder %v403, %v1760
        %vm1819 = vcmp.le.f32.partialorder %v404, %v1760
        %vm1820 = vcmp.le.f32.partialorder %v405, %v1760
        %vm1821 = vcmp.le.f32.partialorder %v406, %v1760
        %vm1822 = vcmp.le.f32.partialorder %v407, %v1760
        %vm1823 = vcmp.le.f32.partialorder %v408, %v1760
        %vm1824 = vmand %vm1697, %vm1761
        %vm1825 = vmand %vm1698, %vm1762
        %vm1826 = vmand %vm1699, %vm1763
        %vm1827 = vmand %vm1700, %vm1764
        %vm1828 = vmand %vm1701, %vm1765
        %vm1829 = vmand %vm1702, %vm1766
        %vm1830 = vmand %vm1703, %vm1767
        %vm1831 = vmand %vm1704, %vm1768
        %vm1832 = vmand %vm1705, %vm1769
        %vm1833 = vmand %vm1706, %vm1770
        %vm1834 = vmand %vm1707, %vm1771
        %vm1835 = vmand %vm1708, %vm1772
        %vm1836 = vmand %vm1709, %vm1773
        %vm1837 = vmand %vm1710, %vm1774
        %vm1838 = vmand %vm1711, %vm1775
        %vm1839 = vmand %vm1712, %vm1776
        %vm1840 = vmand %vm1713, %vm1777
        %vm1841 = vmand %vm1714, %vm1778
        %vm1842 = vmand %vm1715, %vm1779
        %vm1843 = vmand %vm1716, %vm1780
        %vm1844 = vmand %vm1717, %vm1781
        %vm1845 = vmand %vm1718, %vm1782
        %vm1846 = vmand %vm1719, %vm1783
        %vm1847 = vmand %vm1720, %vm1784
        %vm1848 = vmand %vm1721, %vm1785
        %vm1849 = vmand %vm1722, %vm1786
        %vm1850 = vmand %vm1723, %vm1787
        %vm1851 = vmand %vm1724, %vm1788
        %vm1852 = vmand %vm1725, %vm1789
        %vm1853 = vmand %vm1726, %vm1790
        %vm1854 = vmand %vm1727, %vm1791
        %vm1855 = vmand %vm1728, %vm1792
        %vm1856 = vmand %vm1729, %vm1793
        %vm1857 = vmand %vm1730, %vm1794
        %vm1858 = vmand %vm1731, %vm1795
        %vm1859 = vmand %vm1732, %vm1796
        %vm1860 = vmand %vm1733, %vm1797
        %vm1861 = vmand %vm1734, %vm1798
        %vm1862 = vmand %vm1735, %vm1799
        %vm1863 = vmand %vm1736, %vm1800
        %vm1864 = vmand %vm1737, %vm1801
        %vm1865 = vmand %vm1738, %vm1802
        %vm1866 = vmand %vm1739, %vm1803
        %vm1867 = vmand %vm1740, %vm1804
        %vm1868 = vmand %vm1741, %vm1805
        %vm1869 = vmand %vm1742, %vm1806
        %vm1870 = vmand %vm1743, %vm1807
        %vm1871 = vmand %vm1744, %vm1808
        %vm1872 = vmand %vm1745, %vm1809
        %vm1873 = vmand %vm1746, %vm1810
        %vm1874 = vmand %vm1747, %vm1811
        %vm1875 = vmand %vm1748, %vm1812
        %vm1876 = vmand %vm1749, %vm1813
        %vm1877 = vmand %vm1750, %vm1814
        %vm1878 = vmand %vm1751, %vm1815
        %vm1879 = vmand %vm1752, %vm1816
        %vm1880 = vmand %vm1753, %vm1817
        %vm1881 = vmand %vm1754, %vm1818
        %vm1882 = vmand %vm1755, %vm1819
        %vm1883 = vmand %vm1756, %vm1820
        %vm1884 = vmand %vm1757, %vm1821
        %vm1885 = vmand %vm1758, %vm1822
        %vm1886 = vmand %vm1759, %vm1823
        %v1887 = vperm.slane %v1695, 0
        %v1888 = vsel %vm1824, %v1887, 0.0
        %v1889 = vsel %vm1825, %v1887, 0.0
        %v1890 = vsel %vm1826, %v1887, 0.0
        %v1891 = vsel %vm1827, %v1887, 0.0
        %v1892 = vsel %vm1828, %v1887, 0.0
        %v1893 = vsel %vm1829, %v1887, 0.0
        %v1894 = vsel %vm1830, %v1887, 0.0
        %v1895 = vsel %vm1831, %v1887, 0.0
        %v1896 = vsel %vm1832, %v1887, 0.0
        %v1897 = vsel %vm1833, %v1887, 0.0
        %v1898 = vsel %vm1834, %v1887, 0.0
        %v1899 = vsel %vm1835, %v1887, 0.0
        %v1900 = vsel %vm1836, %v1887, 0.0
        %v1901 = vsel %vm1837, %v1887, 0.0
        %v1902 = vsel %vm1838, %v1887, 0.0
        %v1903 = vsel %vm1839, %v1887, 0.0
        %v1904 = vsel %vm1840, %v1887, 0.0
        %v1905 = vsel %vm1841, %v1887, 0.0
        %v1906 = vsel %vm1842, %v1887, 0.0
        %v1907 = vsel %vm1843, %v1887, 0.0
        %v1908 = vsel %vm1844, %v1887, 0.0
        %v1909 = vsel %vm1845, %v1887, 0.0
        %v1910 = vsel %vm1846, %v1887, 0.0
        %v1911 = vsel %vm1847, %v1887, 0.0
        %v1912 = vsel %vm1848, %v1887, 0.0
        %v1913 = vsel %vm1849, %v1887, 0.0
        %v1914 = vsel %vm1850, %v1887, 0.0
        %v1915 = vsel %vm1851, %v1887, 0.0
        %v1916 = vsel %vm1852, %v1887, 0.0
        %v1917 = vsel %vm1853, %v1887, 0.0
        %v1918 = vsel %vm1854, %v1887, 0.0
        %v1919 = vsel %vm1855, %v1887, 0.0
        %v1920 = vsel %vm1856, %v1887, 0.0
        %v1921 = vsel %vm1857, %v1887, 0.0
        %v1922 = vsel %vm1858, %v1887, 0.0
        %v1923 = vsel %vm1859, %v1887, 0.0
        %v1924 = vsel %vm1860, %v1887, 0.0
        %v1925 = vsel %vm1861, %v1887, 0.0
        %v1926 = vsel %vm1862, %v1887, 0.0
        %v1927 = vsel %vm1863, %v1887, 0.0
        %v1928 = vsel %vm1864, %v1887, 0.0
        %v1929 = vsel %vm1865, %v1887, 0.0
        %v1930 = vsel %vm1866, %v1887, 0.0
        %v1931 = vsel %vm1867, %v1887, 0.0
        %v1932 = vsel %vm1868, %v1887, 0.0
        %v1933 = vsel %vm1869, %v1887, 0.0
        %v1934 = vsel %vm1870, %v1887, 0.0
        %v1935 = vsel %vm1871, %v1887, 0.0
        %v1936 = vsel %vm1872, %v1887, 0.0
        %v1937 = vsel %vm1873, %v1887, 0.0
        %v1938 = vsel %vm1874, %v1887, 0.0
        %v1939 = vsel %vm1875, %v1887, 0.0
        %v1940 = vsel %vm1876, %v1887, 0.0
        %v1941 = vsel %vm1877, %v1887, 0.0
        %v1942 = vsel %vm1878, %v1887, 0.0
        %v1943 = vsel %vm1879, %v1887, 0.0
        %v1944 = vsel %vm1880, %v1887, 0.0
        %v1945 = vsel %vm1881, %v1887, 0.0
        %v1946 = vsel %vm1882, %v1887, 0.0
        %v1947 = vsel %vm1883, %v1887, 0.0
        %v1948 = vsel %vm1884, %v1887, 0.0
        %v1949 = vsel %vm1885, %v1887, 0.0
        %v1950 = vsel %vm1886, %v1887, 0.0
        %v1951 = vadd.f32 %v1630, %v1888
        %v1952 = vadd.f32 %v1631, %v1889
        %v1953 = vadd.f32 %v1632, %v1890
        %v1954 = vadd.f32 %v1633, %v1891
        %v1955 = vadd.f32 %v1634, %v1892
        %v1956 = vadd.f32 %v1635, %v1893
        %v1957 = vadd.f32 %v1636, %v1894
        %v1958 = vadd.f32 %v1637, %v1895
        %v1959 = vadd.f32 %v1638, %v1896
        %v1960 = vadd.f32 %v1639, %v1897
        %v1961 = vadd.f32 %v1640, %v1898
        %v1962 = vadd.f32 %v1641, %v1899
        %v1963 = vadd.f32 %v1642, %v1900
        %v1964 = vadd.f32 %v1643, %v1901
        %v1965 = vadd.f32 %v1644, %v1902
        %v1966 = vadd.f32 %v1645, %v1903
        %v1967 = vadd.f32 %v1646, %v1904
        %v1968 = vadd.f32 %v1647, %v1905
        %v1969 = vadd.f32 %v1648, %v1906
        %v1970 = vadd.f32 %v1649, %v1907
        %v1971 = vadd.f32 %v1650, %v1908
        %v1972 = vadd.f32 %v1651, %v1909
        %v1973 = vadd.f32 %v1652, %v1910
        %v1974 = vadd.f32 %v1653, %v1911
        %v1975 = vadd.f32 %v1654, %v1912
        %v1976 = vadd.f32 %v1655, %v1913
        %v1977 = vadd.f32 %v1656, %v1914
        %v1978 = vadd.f32 %v1657, %v1915
        %v1979 = vadd.f32 %v1658, %v1916
        %v1980 = vadd.f32 %v1659, %v1917
        %v1981 = vadd.f32 %v1660, %v1918
        %v1982 = vadd.f32 %v1661, %v1919
        %v1983 = vadd.f32 %v1662, %v1920
        %v1984 = vadd.f32 %v1663, %v1921
        %v1985 = vadd.f32 %v1664, %v1922
        %v1986 = vadd.f32 %v1665, %v1923
        %v1987 = vadd.f32 %v1666, %v1924
        %v1988 = vadd.f32 %v1667, %v1925
        %v1989 = vadd.f32 %v1668, %v1926
        %v1990 = vadd.f32 %v1669, %v1927
        %v1991 = vadd.f32 %v1670, %v1928
        %v1992 = vadd.f32 %v1671, %v1929
        %v1993 = vadd.f32 %v1672, %v1930
        %v1994 = vadd.f32 %v1673, %v1931
        %v1995 = vadd.f32 %v1674, %v1932
        %v1996 = vadd.f32 %v1675, %v1933
        %v1997 = vadd.f32 %v1676, %v1934
        %v1998 = vadd.f32 %v1677, %v1935
        %v1999 = vadd.f32 %v1678, %v1936
        %v2000 = vadd.f32 %v1679, %v1937
        %v2001 = vadd.f32 %v1680, %v1938
        %v2002 = vadd.f32 %v1681, %v1939
        %v2003 = vadd.f32 %v1682, %v1940
        %v2004 = vadd.f32 %v1683, %v1941
        %v2005 = vadd.f32 %v1684, %v1942
        %v2006 = vadd.f32 %v1685, %v1943
        %v2007 = vadd.f32 %v1686, %v1944
        %v2008 = vadd.f32 %v1687, %v1945
        %v2009 = vadd.f32 %v1688, %v1946
        %v2010 = vadd.f32 %v1689, %v1947
        %v2011 = vadd.f32 %v1690, %v1948
        %v2012 = vadd.f32 %v1691, %v1949
        %v2013 = vadd.f32 %v1692, %v1950
        %v2014 = vld [vmem:[#allocation6 + $0x5] sm:$0x1]
        %v2015 = vld [vmem:[#allocation8 + $0x5] sm:$0x1]
        %v2016 = vld [vmem:[#allocation9 + $0x5] sm:$0x1]
        %v2017 = vperm.slane %v2014, 0
        %vm2018 = vcmp.ge.f32.partialorder %v346, %v2017
        %vm2019 = vcmp.ge.f32.partialorder %v347, %v2017
        %vm2020 = vcmp.ge.f32.partialorder %v348, %v2017
        %vm2021 = vcmp.ge.f32.partialorder %v349, %v2017
        %vm2022 = vcmp.ge.f32.partialorder %v350, %v2017
        %vm2023 = vcmp.ge.f32.partialorder %v351, %v2017
        %vm2024 = vcmp.ge.f32.partialorder %v352, %v2017
        %vm2025 = vcmp.ge.f32.partialorder %v353, %v2017
        %vm2026 = vcmp.ge.f32.partialorder %v354, %v2017
        %vm2027 = vcmp.ge.f32.partialorder %v355, %v2017
        %vm2028 = vcmp.ge.f32.partialorder %v356, %v2017
        %vm2029 = vcmp.ge.f32.partialorder %v357, %v2017
        %vm2030 = vcmp.ge.f32.partialorder %v358, %v2017
        %vm2031 = vcmp.ge.f32.partialorder %v359, %v2017
        %vm2032 = vcmp.ge.f32.partialorder %v360, %v2017
        %vm2033 = vcmp.ge.f32.partialorder %v361, %v2017
        %vm2034 = vcmp.ge.f32.partialorder %v362, %v2017
        %vm2035 = vcmp.ge.f32.partialorder %v363, %v2017
        %vm2036 = vcmp.ge.f32.partialorder %v364, %v2017
        %vm2037 = vcmp.ge.f32.partialorder %v365, %v2017
        %vm2038 = vcmp.ge.f32.partialorder %v366, %v2017
        %vm2039 = vcmp.ge.f32.partialorder %v367, %v2017
        %vm2040 = vcmp.ge.f32.partialorder %v368, %v2017
        %vm2041 = vcmp.ge.f32.partialorder %v369, %v2017
        %vm2042 = vcmp.ge.f32.partialorder %v370, %v2017
        %vm2043 = vcmp.ge.f32.partialorder %v371, %v2017
        %vm2044 = vcmp.ge.f32.partialorder %v372, %v2017
        %vm2045 = vcmp.ge.f32.partialorder %v373, %v2017
        %vm2046 = vcmp.ge.f32.partialorder %v374, %v2017
        %vm2047 = vcmp.ge.f32.partialorder %v375, %v2017
        %vm2048 = vcmp.ge.f32.partialorder %v376, %v2017
        %vm2049 = vcmp.ge.f32.partialorder %v377, %v2017
        %vm2050 = vcmp.ge.f32.partialorder %v378, %v2017
        %vm2051 = vcmp.ge.f32.partialorder %v379, %v2017
        %vm2052 = vcmp.ge.f32.partialorder %v380, %v2017
        %vm2053 = vcmp.ge.f32.partialorder %v381, %v2017
        %vm2054 = vcmp.ge.f32.partialorder %v382, %v2017
        %vm2055 = vcmp.ge.f32.partialorder %v383, %v2017
        %vm2056 = vcmp.ge.f32.partialorder %v384, %v2017
        %vm2057 = vcmp.ge.f32.partialorder %v385, %v2017
        %vm2058 = vcmp.ge.f32.partialorder %v386, %v2017
        %vm2059 = vcmp.ge.f32.partialorder %v387, %v2017
        %vm2060 = vcmp.ge.f32.partialorder %v388, %v2017
        %vm2061 = vcmp.ge.f32.partialorder %v389, %v2017
        %vm2062 = vcmp.ge.f32.partialorder %v390, %v2017
        %vm2063 = vcmp.ge.f32.partialorder %v391, %v2017
        %vm2064 = vcmp.ge.f32.partialorder %v392, %v2017
        %vm2065 = vcmp.ge.f32.partialorder %v393, %v2017
        %vm2066 = vcmp.ge.f32.partialorder %v394, %v2017
        %vm2067 = vcmp.ge.f32.partialorder %v395, %v2017
        %vm2068 = vcmp.ge.f32.partialorder %v396, %v2017
        %vm2069 = vcmp.ge.f32.partialorder %v397, %v2017
        %vm2070 = vcmp.ge.f32.partialorder %v398, %v2017
        %vm2071 = vcmp.ge.f32.partialorder %v399, %v2017
        %vm2072 = vcmp.ge.f32.partialorder %v400, %v2017
        %vm2073 = vcmp.ge.f32.partialorder %v401, %v2017
        %vm2074 = vcmp.ge.f32.partialorder %v402, %v2017
        %vm2075 = vcmp.ge.f32.partialorder %v403, %v2017
        %vm2076 = vcmp.ge.f32.partialorder %v404, %v2017
        %vm2077 = vcmp.ge.f32.partialorder %v405, %v2017
        %vm2078 = vcmp.ge.f32.partialorder %v406, %v2017
        %vm2079 = vcmp.ge.f32.partialorder %v407, %v2017
        %vm2080 = vcmp.ge.f32.partialorder %v408, %v2017
        %v2081 = vperm.slane %v2015, 0
        %vm2082 = vcmp.le.f32.partialorder %v346, %v2081
        %vm2083 = vcmp.le.f32.partialorder %v347, %v2081
        %vm2084 = vcmp.le.f32.partialorder %v348, %v2081
        %vm2085 = vcmp.le.f32.partialorder %v349, %v2081
        %vm2086 = vcmp.le.f32.partialorder %v350, %v2081
        %vm2087 = vcmp.le.f32.partialorder %v351, %v2081
        %vm2088 = vcmp.le.f32.partialorder %v352, %v2081
        %vm2089 = vcmp.le.f32.partialorder %v353, %v2081
        %vm2090 = vcmp.le.f32.partialorder %v354, %v2081
        %vm2091 = vcmp.le.f32.partialorder %v355, %v2081
        %vm2092 = vcmp.le.f32.partialorder %v356, %v2081
        %vm2093 = vcmp.le.f32.partialorder %v357, %v2081
        %vm2094 = vcmp.le.f32.partialorder %v358, %v2081
        %vm2095 = vcmp.le.f32.partialorder %v359, %v2081
        %vm2096 = vcmp.le.f32.partialorder %v360, %v2081
        %vm2097 = vcmp.le.f32.partialorder %v361, %v2081
        %vm2098 = vcmp.le.f32.partialorder %v362, %v2081
        %vm2099 = vcmp.le.f32.partialorder %v363, %v2081
        %vm2100 = vcmp.le.f32.partialorder %v364, %v2081
        %vm2101 = vcmp.le.f32.partialorder %v365, %v2081
        %vm2102 = vcmp.le.f32.partialorder %v366, %v2081
        %vm2103 = vcmp.le.f32.partialorder %v367, %v2081
        %vm2104 = vcmp.le.f32.partialorder %v368, %v2081
        %vm2105 = vcmp.le.f32.partialorder %v369, %v2081
        %vm2106 = vcmp.le.f32.partialorder %v370, %v2081
        %vm2107 = vcmp.le.f32.partialorder %v371, %v2081
        %vm2108 = vcmp.le.f32.partialorder %v372, %v2081
        %vm2109 = vcmp.le.f32.partialorder %v373, %v2081
        %vm2110 = vcmp.le.f32.partialorder %v374, %v2081
        %vm2111 = vcmp.le.f32.partialorder %v375, %v2081
        %vm2112 = vcmp.le.f32.partialorder %v376, %v2081
        %vm2113 = vcmp.le.f32.partialorder %v377, %v2081
        %vm2114 = vcmp.le.f32.partialorder %v378, %v2081
        %vm2115 = vcmp.le.f32.partialorder %v379, %v2081
        %vm2116 = vcmp.le.f32.partialorder %v380, %v2081
        %vm2117 = vcmp.le.f32.partialorder %v381, %v2081
        %vm2118 = vcmp.le.f32.partialorder %v382, %v2081
        %vm2119 = vcmp.le.f32.partialorder %v383, %v2081
        %vm2120 = vcmp.le.f32.partialorder %v384, %v2081
        %vm2121 = vcmp.le.f32.partialorder %v385, %v2081
        %vm2122 = vcmp.le.f32.partialorder %v386, %v2081
        %vm2123 = vcmp.le.f32.partialorder %v387, %v2081
        %vm2124 = vcmp.le.f32.partialorder %v388, %v2081
        %vm2125 = vcmp.le.f32.partialorder %v389, %v2081
        %vm2126 = vcmp.le.f32.partialorder %v390, %v2081
        %vm2127 = vcmp.le.f32.partialorder %v391, %v2081
        %vm2128 = vcmp.le.f32.partialorder %v392, %v2081
        %vm2129 = vcmp.le.f32.partialorder %v393, %v2081
        %vm2130 = vcmp.le.f32.partialorder %v394, %v2081
        %vm2131 = vcmp.le.f32.partialorder %v395, %v2081
        %vm2132 = vcmp.le.f32.partialorder %v396, %v2081
        %vm2133 = vcmp.le.f32.partialorder %v397, %v2081
        %vm2134 = vcmp.le.f32.partialorder %v398, %v2081
        %vm2135 = vcmp.le.f32.partialorder %v399, %v2081
        %vm2136 = vcmp.le.f32.partialorder %v400, %v2081
        %vm2137 = vcmp.le.f32.partialorder %v401, %v2081
        %vm2138 = vcmp.le.f32.partialorder %v402, %v2081
        %vm2139 = vcmp.le.f32.partialorder %v403, %v2081
        %vm2140 = vcmp.le.f32.partialorder %v404, %v2081
        %vm2141 = vcmp.le.f32.partialorder %v405, %v2081
        %vm2142 = vcmp.le.f32.partialorder %v406, %v2081
        %vm2143 = vcmp.le.f32.partialorder %v407, %v2081
        %vm2144 = vcmp.le.f32.partialorder %v408, %v2081
        %vm2145 = vmand %vm2018, %vm2082
        %vm2146 = vmand %vm2019, %vm2083
        %vm2147 = vmand %vm2020, %vm2084
        %vm2148 = vmand %vm2021, %vm2085
        %vm2149 = vmand %vm2022, %vm2086
        %vm2150 = vmand %vm2023, %vm2087
        %vm2151 = vmand %vm2024, %vm2088
        %vm2152 = vmand %vm2025, %vm2089
        %vm2153 = vmand %vm2026, %vm2090
        %vm2154 = vmand %vm2027, %vm2091
        %vm2155 = vmand %vm2028, %vm2092
        %vm2156 = vmand %vm2029, %vm2093
        %vm2157 = vmand %vm2030, %vm2094
        %vm2158 = vmand %vm2031, %vm2095
        %vm2159 = vmand %vm2032, %vm2096
        %vm2160 = vmand %vm2033, %vm2097
        %vm2161 = vmand %vm2034, %vm2098
        %vm2162 = vmand %vm2035, %vm2099
        %vm2163 = vmand %vm2036, %vm2100
        %vm2164 = vmand %vm2037, %vm2101
        %vm2165 = vmand %vm2038, %vm2102
        %vm2166 = vmand %vm2039, %vm2103
        %vm2167 = vmand %vm2040, %vm2104
        %vm2168 = vmand %vm2041, %vm2105
        %vm2169 = vmand %vm2042, %vm2106
        %vm2170 = vmand %vm2043, %vm2107
        %vm2171 = vmand %vm2044, %vm2108
        %vm2172 = vmand %vm2045, %vm2109
        %vm2173 = vmand %vm2046, %vm2110
        %vm2174 = vmand %vm2047, %vm2111
        %vm2175 = vmand %vm2048, %vm2112
        %vm2176 = vmand %vm2049, %vm2113
        %vm2177 = vmand %vm2050, %vm2114
        %vm2178 = vmand %vm2051, %vm2115
        %vm2179 = vmand %vm2052, %vm2116
        %vm2180 = vmand %vm2053, %vm2117
        %vm2181 = vmand %vm2054, %vm2118
        %vm2182 = vmand %vm2055, %vm2119
        %vm2183 = vmand %vm2056, %vm2120
        %vm2184 = vmand %vm2057, %vm2121
        %vm2185 = vmand %vm2058, %vm2122
        %vm2186 = vmand %vm2059, %vm2123
        %vm2187 = vmand %vm2060, %vm2124
        %vm2188 = vmand %vm2061, %vm2125
        %vm2189 = vmand %vm2062, %vm2126
        %vm2190 = vmand %vm2063, %vm2127
        %vm2191 = vmand %vm2064, %vm2128
        %vm2192 = vmand %vm2065, %vm2129
        %vm2193 = vmand %vm2066, %vm2130
        %vm2194 = vmand %vm2067, %vm2131
        %vm2195 = vmand %vm2068, %vm2132
        %vm2196 = vmand %vm2069, %vm2133
        %vm2197 = vmand %vm2070, %vm2134
        %vm2198 = vmand %vm2071, %vm2135
        %vm2199 = vmand %vm2072, %vm2136
        %vm2200 = vmand %vm2073, %vm2137
        %vm2201 = vmand %vm2074, %vm2138
        %vm2202 = vmand %vm2075, %vm2139
        %vm2203 = vmand %vm2076, %vm2140
        %vm2204 = vmand %vm2077, %vm2141
        %vm2205 = vmand %vm2078, %vm2142
        %vm2206 = vmand %vm2079, %vm2143
        %vm2207 = vmand %vm2080, %vm2144
        %v2208 = vperm.slane %v2016, 0
        %v2209 = vsel %vm2145, %v2208, 0.0
        %v2210 = vsel %vm2146, %v2208, 0.0
        %v2211 = vsel %vm2147, %v2208, 0.0
        %v2212 = vsel %vm2148, %v2208, 0.0
        %v2213 = vsel %vm2149, %v2208, 0.0
        %v2214 = vsel %vm2150, %v2208, 0.0
        %v2215 = vsel %vm2151, %v2208, 0.0
        %v2216 = vsel %vm2152, %v2208, 0.0
        %v2217 = vsel %vm2153, %v2208, 0.0
        %v2218 = vsel %vm2154, %v2208, 0.0
        %v2219 = vsel %vm2155, %v2208, 0.0
        %v2220 = vsel %vm2156, %v2208, 0.0
        %v2221 = vsel %vm2157, %v2208, 0.0
        %v2222 = vsel %vm2158, %v2208, 0.0
        %v2223 = vsel %vm2159, %v2208, 0.0
        %v2224 = vsel %vm2160, %v2208, 0.0
        %v2225 = vsel %vm2161, %v2208, 0.0
        %v2226 = vsel %vm2162, %v2208, 0.0
        %v2227 = vsel %vm2163, %v2208, 0.0
        %v2228 = vsel %vm2164, %v2208, 0.0
        %v2229 = vsel %vm2165, %v2208, 0.0
        %v2230 = vsel %vm2166, %v2208, 0.0
        %v2231 = vsel %vm2167, %v2208, 0.0
        %v2232 = vsel %vm2168, %v2208, 0.0
        %v2233 = vsel %vm2169, %v2208, 0.0
        %v2234 = vsel %vm2170, %v2208, 0.0
        %v2235 = vsel %vm2171, %v2208, 0.0
        %v2236 = vsel %vm2172, %v2208, 0.0
        %v2237 = vsel %vm2173, %v2208, 0.0
        %v2238 = vsel %vm2174, %v2208, 0.0
        %v2239 = vsel %vm2175, %v2208, 0.0
        %v2240 = vsel %vm2176, %v2208, 0.0
        %v2241 = vsel %vm2177, %v2208, 0.0
        %v2242 = vsel %vm2178, %v2208, 0.0
        %v2243 = vsel %vm2179, %v2208, 0.0
        %v2244 = vsel %vm2180, %v2208, 0.0
        %v2245 = vsel %vm2181, %v2208, 0.0
        %v2246 = vsel %vm2182, %v2208, 0.0
        %v2247 = vsel %vm2183, %v2208, 0.0
        %v2248 = vsel %vm2184, %v2208, 0.0
        %v2249 = vsel %vm2185, %v2208, 0.0
        %v2250 = vsel %vm2186, %v2208, 0.0
        %v2251 = vsel %vm2187, %v2208, 0.0
        %v2252 = vsel %vm2188, %v2208, 0.0
        %v2253 = vsel %vm2189, %v2208, 0.0
        %v2254 = vsel %vm2190, %v2208, 0.0
        %v2255 = vsel %vm2191, %v2208, 0.0
        %v2256 = vsel %vm2192, %v2208, 0.0
        %v2257 = vsel %vm2193, %v2208, 0.0
        %v2258 = vsel %vm2194, %v2208, 0.0
        %v2259 = vsel %vm2195, %v2208, 0.0
        %v2260 = vsel %vm2196, %v2208, 0.0
        %v2261 = vsel %vm2197, %v2208, 0.0
        %v2262 = vsel %vm2198, %v2208, 0.0
        %v2263 = vsel %vm2199, %v2208, 0.0
        %v2264 = vsel %vm2200, %v2208, 0.0
        %v2265 = vsel %vm2201, %v2208, 0.0
        %v2266 = vsel %vm2202, %v2208, 0.0
        %v2267 = vsel %vm2203, %v2208, 0.0
        %v2268 = vsel %vm2204, %v2208, 0.0
        %v2269 = vsel %vm2205, %v2208, 0.0
        %v2270 = vsel %vm2206, %v2208, 0.0
        %v2271 = vsel %vm2207, %v2208, 0.0
        %v2272 = vadd.f32 %v1951, %v2209
        %v2273 = vadd.f32 %v1952, %v2210
        %v2274 = vadd.f32 %v1953, %v2211
        %v2275 = vadd.f32 %v1954, %v2212
        %v2276 = vadd.f32 %v1955, %v2213
        %v2277 = vadd.f32 %v1956, %v2214
        %v2278 = vadd.f32 %v1957, %v2215
        %v2279 = vadd.f32 %v1958, %v2216
        %v2280 = vadd.f32 %v1959, %v2217
        %v2281 = vadd.f32 %v1960, %v2218
        %v2282 = vadd.f32 %v1961, %v2219
        %v2283 = vadd.f32 %v1962, %v2220
        %v2284 = vadd.f32 %v1963, %v2221
        %v2285 = vadd.f32 %v1964, %v2222
        %v2286 = vadd.f32 %v1965, %v2223
        %v2287 = vadd.f32 %v1966, %v2224
        %v2288 = vadd.f32 %v1967, %v2225
        %v2289 = vadd.f32 %v1968, %v2226
        %v2290 = vadd.f32 %v1969, %v2227
        %v2291 = vadd.f32 %v1970, %v2228
        %v2292 = vadd.f32 %v1971, %v2229
        %v2293 = vadd.f32 %v1972, %v2230
        %v2294 = vadd.f32 %v1973, %v2231
        %v2295 = vadd.f32 %v1974, %v2232
        %v2296 = vadd.f32 %v1975, %v2233
        %v2297 = vadd.f32 %v1976, %v2234
        %v2298 = vadd.f32 %v1977, %v2235
        %v2299 = vadd.f32 %v1978, %v2236
        %v2300 = vadd.f32 %v1979, %v2237
        %v2301 = vadd.f32 %v1980, %v2238
        %v2302 = vadd.f32 %v1981, %v2239
        %v2303 = vadd.f32 %v1982, %v2240
        %v2304 = vadd.f32 %v1983, %v2241
        %v2305 = vadd.f32 %v1984, %v2242
        %v2306 = vadd.f32 %v1985, %v2243
        %v2307 = vadd.f32 %v1986, %v2244
        %v2308 = vadd.f32 %v1987, %v2245
        %v2309 = vadd.f32 %v1988, %v2246
        %v2310 = vadd.f32 %v1989, %v2247
        %v2311 = vadd.f32 %v1990, %v2248
        %v2312 = vadd.f32 %v1991, %v2249
        %v2313 = vadd.f32 %v1992, %v2250
        %v2314 = vadd.f32 %v1993, %v2251
        %v2315 = vadd.f32 %v1994, %v2252
        %v2316 = vadd.f32 %v1995, %v2253
        %v2317 = vadd.f32 %v1996, %v2254
        %v2318 = vadd.f32 %v1997, %v2255
        %v2319 = vadd.f32 %v1998, %v2256
        %v2320 = vadd.f32 %v1999, %v2257
        %v2321 = vadd.f32 %v2000, %v2258
        %v2322 = vadd.f32 %v2001, %v2259
        %v2323 = vadd.f32 %v2002, %v2260
        %v2324 = vadd.f32 %v2003, %v2261
        %v2325 = vadd.f32 %v2004, %v2262
        %v2326 = vadd.f32 %v2005, %v2263
        %v2327 = vadd.f32 %v2006, %v2264
        %v2328 = vadd.f32 %v2007, %v2265
        %v2329 = vadd.f32 %v2008, %v2266
        %v2330 = vadd.f32 %v2009, %v2267
        %v2331 = vadd.f32 %v2010, %v2268
        %v2332 = vadd.f32 %v2011, %v2269
        %v2333 = vadd.f32 %v2012, %v2270
        %v2334 = vadd.f32 %v2013, %v2271
        %v2335 = vld [vmem:[#allocation6 + $0x6] sm:$0x1]
        %v2336 = vld [vmem:[#allocation8 + $0x6] sm:$0x1]
        %v2337 = vld [vmem:[#allocation9 + $0x6] sm:$0x1]
        %v2338 = vperm.slane %v2335, 0
        %vm2339 = vcmp.ge.f32.partialorder %v346, %v2338
        %vm2340 = vcmp.ge.f32.partialorder %v347, %v2338
        %vm2341 = vcmp.ge.f32.partialorder %v348, %v2338
        %vm2342 = vcmp.ge.f32.partialorder %v349, %v2338
        %vm2343 = vcmp.ge.f32.partialorder %v350, %v2338
        %vm2344 = vcmp.ge.f32.partialorder %v351, %v2338
        %vm2345 = vcmp.ge.f32.partialorder %v352, %v2338
        %vm2346 = vcmp.ge.f32.partialorder %v353, %v2338
        %vm2347 = vcmp.ge.f32.partialorder %v354, %v2338
        %vm2348 = vcmp.ge.f32.partialorder %v355, %v2338
        %vm2349 = vcmp.ge.f32.partialorder %v356, %v2338
        %vm2350 = vcmp.ge.f32.partialorder %v357, %v2338
        %vm2351 = vcmp.ge.f32.partialorder %v358, %v2338
        %vm2352 = vcmp.ge.f32.partialorder %v359, %v2338
        %vm2353 = vcmp.ge.f32.partialorder %v360, %v2338
        %vm2354 = vcmp.ge.f32.partialorder %v361, %v2338
        %vm2355 = vcmp.ge.f32.partialorder %v362, %v2338
        %vm2356 = vcmp.ge.f32.partialorder %v363, %v2338
        %vm2357 = vcmp.ge.f32.partialorder %v364, %v2338
        %vm2358 = vcmp.ge.f32.partialorder %v365, %v2338
        %vm2359 = vcmp.ge.f32.partialorder %v366, %v2338
        %vm2360 = vcmp.ge.f32.partialorder %v367, %v2338
        %vm2361 = vcmp.ge.f32.partialorder %v368, %v2338
        %vm2362 = vcmp.ge.f32.partialorder %v369, %v2338
        %vm2363 = vcmp.ge.f32.partialorder %v370, %v2338
        %vm2364 = vcmp.ge.f32.partialorder %v371, %v2338
        %vm2365 = vcmp.ge.f32.partialorder %v372, %v2338
        %vm2366 = vcmp.ge.f32.partialorder %v373, %v2338
        %vm2367 = vcmp.ge.f32.partialorder %v374, %v2338
        %vm2368 = vcmp.ge.f32.partialorder %v375, %v2338
        %vm2369 = vcmp.ge.f32.partialorder %v376, %v2338
        %vm2370 = vcmp.ge.f32.partialorder %v377, %v2338
        %vm2371 = vcmp.ge.f32.partialorder %v378, %v2338
        %vm2372 = vcmp.ge.f32.partialorder %v379, %v2338
        %vm2373 = vcmp.ge.f32.partialorder %v380, %v2338
        %vm2374 = vcmp.ge.f32.partialorder %v381, %v2338
        %vm2375 = vcmp.ge.f32.partialorder %v382, %v2338
        %vm2376 = vcmp.ge.f32.partialorder %v383, %v2338
        %vm2377 = vcmp.ge.f32.partialorder %v384, %v2338
        %vm2378 = vcmp.ge.f32.partialorder %v385, %v2338
        %vm2379 = vcmp.ge.f32.partialorder %v386, %v2338
        %vm2380 = vcmp.ge.f32.partialorder %v387, %v2338
        %vm2381 = vcmp.ge.f32.partialorder %v388, %v2338
        %vm2382 = vcmp.ge.f32.partialorder %v389, %v2338
        %vm2383 = vcmp.ge.f32.partialorder %v390, %v2338
        %vm2384 = vcmp.ge.f32.partialorder %v391, %v2338
        %vm2385 = vcmp.ge.f32.partialorder %v392, %v2338
        %vm2386 = vcmp.ge.f32.partialorder %v393, %v2338
        %vm2387 = vcmp.ge.f32.partialorder %v394, %v2338
        %vm2388 = vcmp.ge.f32.partialorder %v395, %v2338
        %vm2389 = vcmp.ge.f32.partialorder %v396, %v2338
        %vm2390 = vcmp.ge.f32.partialorder %v397, %v2338
        %vm2391 = vcmp.ge.f32.partialorder %v398, %v2338
        %vm2392 = vcmp.ge.f32.partialorder %v399, %v2338
        %vm2393 = vcmp.ge.f32.partialorder %v400, %v2338
        %vm2394 = vcmp.ge.f32.partialorder %v401, %v2338
        %vm2395 = vcmp.ge.f32.partialorder %v402, %v2338
        %vm2396 = vcmp.ge.f32.partialorder %v403, %v2338
        %vm2397 = vcmp.ge.f32.partialorder %v404, %v2338
        %vm2398 = vcmp.ge.f32.partialorder %v405, %v2338
        %vm2399 = vcmp.ge.f32.partialorder %v406, %v2338
        %vm2400 = vcmp.ge.f32.partialorder %v407, %v2338
        %vm2401 = vcmp.ge.f32.partialorder %v408, %v2338
        %v2402 = vperm.slane %v2336, 0
        %vm2403 = vcmp.le.f32.partialorder %v346, %v2402
        %vm2404 = vcmp.le.f32.partialorder %v347, %v2402
        %vm2405 = vcmp.le.f32.partialorder %v348, %v2402
        %vm2406 = vcmp.le.f32.partialorder %v349, %v2402
        %vm2407 = vcmp.le.f32.partialorder %v350, %v2402
        %vm2408 = vcmp.le.f32.partialorder %v351, %v2402
        %vm2409 = vcmp.le.f32.partialorder %v352, %v2402
        %vm2410 = vcmp.le.f32.partialorder %v353, %v2402
        %vm2411 = vcmp.le.f32.partialorder %v354, %v2402
        %vm2412 = vcmp.le.f32.partialorder %v355, %v2402
        %vm2413 = vcmp.le.f32.partialorder %v356, %v2402
        %vm2414 = vcmp.le.f32.partialorder %v357, %v2402
        %vm2415 = vcmp.le.f32.partialorder %v358, %v2402
        %vm2416 = vcmp.le.f32.partialorder %v359, %v2402
        %vm2417 = vcmp.le.f32.partialorder %v360, %v2402
        %vm2418 = vcmp.le.f32.partialorder %v361, %v2402
        %vm2419 = vcmp.le.f32.partialorder %v362, %v2402
        %vm2420 = vcmp.le.f32.partialorder %v363, %v2402
        %vm2421 = vcmp.le.f32.partialorder %v364, %v2402
        %vm2422 = vcmp.le.f32.partialorder %v365, %v2402
        %vm2423 = vcmp.le.f32.partialorder %v366, %v2402
        %vm2424 = vcmp.le.f32.partialorder %v367, %v2402
        %vm2425 = vcmp.le.f32.partialorder %v368, %v2402
        %vm2426 = vcmp.le.f32.partialorder %v369, %v2402
        %vm2427 = vcmp.le.f32.partialorder %v370, %v2402
        %vm2428 = vcmp.le.f32.partialorder %v371, %v2402
        %vm2429 = vcmp.le.f32.partialorder %v372, %v2402
        %vm2430 = vcmp.le.f32.partialorder %v373, %v2402
        %vm2431 = vcmp.le.f32.partialorder %v374, %v2402
        %vm2432 = vcmp.le.f32.partialorder %v375, %v2402
        %vm2433 = vcmp.le.f32.partialorder %v376, %v2402
        %vm2434 = vcmp.le.f32.partialorder %v377, %v2402
        %vm2435 = vcmp.le.f32.partialorder %v378, %v2402
        %vm2436 = vcmp.le.f32.partialorder %v379, %v2402
        %vm2437 = vcmp.le.f32.partialorder %v380, %v2402
        %vm2438 = vcmp.le.f32.partialorder %v381, %v2402
        %vm2439 = vcmp.le.f32.partialorder %v382, %v2402
        %vm2440 = vcmp.le.f32.partialorder %v383, %v2402
        %vm2441 = vcmp.le.f32.partialorder %v384, %v2402
        %vm2442 = vcmp.le.f32.partialorder %v385, %v2402
        %vm2443 = vcmp.le.f32.partialorder %v386, %v2402
        %vm2444 = vcmp.le.f32.partialorder %v387, %v2402
        %vm2445 = vcmp.le.f32.partialorder %v388, %v2402
        %vm2446 = vcmp.le.f32.partialorder %v389, %v2402
        %vm2447 = vcmp.le.f32.partialorder %v390, %v2402
        %vm2448 = vcmp.le.f32.partialorder %v391, %v2402
        %vm2449 = vcmp.le.f32.partialorder %v392, %v2402
        %vm2450 = vcmp.le.f32.partialorder %v393, %v2402
        %vm2451 = vcmp.le.f32.partialorder %v394, %v2402
        %vm2452 = vcmp.le.f32.partialorder %v395, %v2402
        %vm2453 = vcmp.le.f32.partialorder %v396, %v2402
        %vm2454 = vcmp.le.f32.partialorder %v397, %v2402
        %vm2455 = vcmp.le.f32.partialorder %v398, %v2402
        %vm2456 = vcmp.le.f32.partialorder %v399, %v2402
        %vm2457 = vcmp.le.f32.partialorder %v400, %v2402
        %vm2458 = vcmp.le.f32.partialorder %v401, %v2402
        %vm2459 = vcmp.le.f32.partialorder %v402, %v2402
        %vm2460 = vcmp.le.f32.partialorder %v403, %v2402
        %vm2461 = vcmp.le.f32.partialorder %v404, %v2402
        %vm2462 = vcmp.le.f32.partialorder %v405, %v2402
        %vm2463 = vcmp.le.f32.partialorder %v406, %v2402
        %vm2464 = vcmp.le.f32.partialorder %v407, %v2402
        %vm2465 = vcmp.le.f32.partialorder %v408, %v2402
        %vm2466 = vmand %vm2339, %vm2403
        %vm2467 = vmand %vm2340, %vm2404
        %vm2468 = vmand %vm2341, %vm2405
        %vm2469 = vmand %vm2342, %vm2406
        %vm2470 = vmand %vm2343, %vm2407
        %vm2471 = vmand %vm2344, %vm2408
        %vm2472 = vmand %vm2345, %vm2409
        %vm2473 = vmand %vm2346, %vm2410
        %vm2474 = vmand %vm2347, %vm2411
        %vm2475 = vmand %vm2348, %vm2412
        %vm2476 = vmand %vm2349, %vm2413
        %vm2477 = vmand %vm2350, %vm2414
        %vm2478 = vmand %vm2351, %vm2415
        %vm2479 = vmand %vm2352, %vm2416
        %vm2480 = vmand %vm2353, %vm2417
        %vm2481 = vmand %vm2354, %vm2418
        %vm2482 = vmand %vm2355, %vm2419
        %vm2483 = vmand %vm2356, %vm2420
        %vm2484 = vmand %vm2357, %vm2421
        %vm2485 = vmand %vm2358, %vm2422
        %vm2486 = vmand %vm2359, %vm2423
        %vm2487 = vmand %vm2360, %vm2424
        %vm2488 = vmand %vm2361, %vm2425
        %vm2489 = vmand %vm2362, %vm2426
        %vm2490 = vmand %vm2363, %vm2427
        %vm2491 = vmand %vm2364, %vm2428
        %vm2492 = vmand %vm2365, %vm2429
        %vm2493 = vmand %vm2366, %vm2430
        %vm2494 = vmand %vm2367, %vm2431
        %vm2495 = vmand %vm2368, %vm2432
        %vm2496 = vmand %vm2369, %vm2433
        %vm2497 = vmand %vm2370, %vm2434
        %vm2498 = vmand %vm2371, %vm2435
        %vm2499 = vmand %vm2372, %vm2436
        %vm2500 = vmand %vm2373, %vm2437
        %vm2501 = vmand %vm2374, %vm2438
        %vm2502 = vmand %vm2375, %vm2439
        %vm2503 = vmand %vm2376, %vm2440
        %vm2504 = vmand %vm2377, %vm2441
        %vm2505 = vmand %vm2378, %vm2442
        %vm2506 = vmand %vm2379, %vm2443
        %vm2507 = vmand %vm2380, %vm2444
        %vm2508 = vmand %vm2381, %vm2445
        %vm2509 = vmand %vm2382, %vm2446
        %vm2510 = vmand %vm2383, %vm2447
        %vm2511 = vmand %vm2384, %vm2448
        %vm2512 = vmand %vm2385, %vm2449
        %vm2513 = vmand %vm2386, %vm2450
        %vm2514 = vmand %vm2387, %vm2451
        %vm2515 = vmand %vm2388, %vm2452
        %vm2516 = vmand %vm2389, %vm2453
        %vm2517 = vmand %vm2390, %vm2454
        %vm2518 = vmand %vm2391, %vm2455
        %vm2519 = vmand %vm2392, %vm2456
        %vm2520 = vmand %vm2393, %vm2457
        %vm2521 = vmand %vm2394, %vm2458
        %vm2522 = vmand %vm2395, %vm2459
        %vm2523 = vmand %vm2396, %vm2460
        %vm2524 = vmand %vm2397, %vm2461
        %vm2525 = vmand %vm2398, %vm2462
        %vm2526 = vmand %vm2399, %vm2463
        %vm2527 = vmand %vm2400, %vm2464
        %vm2528 = vmand %vm2401, %vm2465
        %v2529 = vperm.slane %v2337, 0
        %v2530 = vsel %vm2466, %v2529, 0.0
        %v2531 = vsel %vm2467, %v2529, 0.0
        %v2532 = vsel %vm2468, %v2529, 0.0
        %v2533 = vsel %vm2469, %v2529, 0.0
        %v2534 = vsel %vm2470, %v2529, 0.0
        %v2535 = vsel %vm2471, %v2529, 0.0
        %v2536 = vsel %vm2472, %v2529, 0.0
        %v2537 = vsel %vm2473, %v2529, 0.0
        %v2538 = vsel %vm2474, %v2529, 0.0
        %v2539 = vsel %vm2475, %v2529, 0.0
        %v2540 = vsel %vm2476, %v2529, 0.0
        %v2541 = vsel %vm2477, %v2529, 0.0
        %v2542 = vsel %vm2478, %v2529, 0.0
        %v2543 = vsel %vm2479, %v2529, 0.0
        %v2544 = vsel %vm2480, %v2529, 0.0
        %v2545 = vsel %vm2481, %v2529, 0.0
        %v2546 = vsel %vm2482, %v2529, 0.0
        %v2547 = vsel %vm2483, %v2529, 0.0
        %v2548 = vsel %vm2484, %v2529, 0.0
        %v2549 = vsel %vm2485, %v2529, 0.0
        %v2550 = vsel %vm2486, %v2529, 0.0
        %v2551 = vsel %vm2487, %v2529, 0.0
        %v2552 = vsel %vm2488, %v2529, 0.0
        %v2553 = vsel %vm2489, %v2529, 0.0
        %v2554 = vsel %vm2490, %v2529, 0.0
        %v2555 = vsel %vm2491, %v2529, 0.0
        %v2556 = vsel %vm2492, %v2529, 0.0
        %v2557 = vsel %vm2493, %v2529, 0.0
        %v2558 = vsel %vm2494, %v2529, 0.0
        %v2559 = vsel %vm2495, %v2529, 0.0
        %v2560 = vsel %vm2496, %v2529, 0.0
        %v2561 = vsel %vm2497, %v2529, 0.0
        %v2562 = vsel %vm2498, %v2529, 0.0
        %v2563 = vsel %vm2499, %v2529, 0.0
        %v2564 = vsel %vm2500, %v2529, 0.0
        %v2565 = vsel %vm2501, %v2529, 0.0
        %v2566 = vsel %vm2502, %v2529, 0.0
        %v2567 = vsel %vm2503, %v2529, 0.0
        %v2568 = vsel %vm2504, %v2529, 0.0
        %v2569 = vsel %vm2505, %v2529, 0.0
        %v2570 = vsel %vm2506, %v2529, 0.0
        %v2571 = vsel %vm2507, %v2529, 0.0
        %v2572 = vsel %vm2508, %v2529, 0.0
        %v2573 = vsel %vm2509, %v2529, 0.0
        %v2574 = vsel %vm2510, %v2529, 0.0
        %v2575 = vsel %vm2511, %v2529, 0.0
        %v2576 = vsel %vm2512, %v2529, 0.0
        %v2577 = vsel %vm2513, %v2529, 0.0
        %v2578 = vsel %vm2514, %v2529, 0.0
        %v2579 = vsel %vm2515, %v2529, 0.0
        %v2580 = vsel %vm2516, %v2529, 0.0
        %v2581 = vsel %vm2517, %v2529, 0.0
        %v2582 = vsel %vm2518, %v2529, 0.0
        %v2583 = vsel %vm2519, %v2529, 0.0
        %v2584 = vsel %vm2520, %v2529, 0.0
        %v2585 = vsel %vm2521, %v2529, 0.0
        %v2586 = vsel %vm2522, %v2529, 0.0
        %v2587 = vsel %vm2523, %v2529, 0.0
        %v2588 = vsel %vm2524, %v2529, 0.0
        %v2589 = vsel %vm2525, %v2529, 0.0
        %v2590 = vsel %vm2526, %v2529, 0.0
        %v2591 = vsel %vm2527, %v2529, 0.0
        %v2592 = vsel %vm2528, %v2529, 0.0
        %v2593 = vadd.f32 %v2272, %v2530
        %v2594 = vadd.f32 %v2273, %v2531
        %v2595 = vadd.f32 %v2274, %v2532
        %v2596 = vadd.f32 %v2275, %v2533
        %v2597 = vadd.f32 %v2276, %v2534
        %v2598 = vadd.f32 %v2277, %v2535
        %v2599 = vadd.f32 %v2278, %v2536
        %v2600 = vadd.f32 %v2279, %v2537
        %v2601 = vadd.f32 %v2280, %v2538
        %v2602 = vadd.f32 %v2281, %v2539
        %v2603 = vadd.f32 %v2282, %v2540
        %v2604 = vadd.f32 %v2283, %v2541
        %v2605 = vadd.f32 %v2284, %v2542
        %v2606 = vadd.f32 %v2285, %v2543
        %v2607 = vadd.f32 %v2286, %v2544
        %v2608 = vadd.f32 %v2287, %v2545
        %v2609 = vadd.f32 %v2288, %v2546
        %v2610 = vadd.f32 %v2289, %v2547
        %v2611 = vadd.f32 %v2290, %v2548
        %v2612 = vadd.f32 %v2291, %v2549
        %v2613 = vadd.f32 %v2292, %v2550
        %v2614 = vadd.f32 %v2293, %v2551
        %v2615 = vadd.f32 %v2294, %v2552
        %v2616 = vadd.f32 %v2295, %v2553
        %v2617 = vadd.f32 %v2296, %v2554
        %v2618 = vadd.f32 %v2297, %v2555
        %v2619 = vadd.f32 %v2298, %v2556
        %v2620 = vadd.f32 %v2299, %v2557
        %v2621 = vadd.f32 %v2300, %v2558
        %v2622 = vadd.f32 %v2301, %v2559
        %v2623 = vadd.f32 %v2302, %v2560
        %v2624 = vadd.f32 %v2303, %v2561
        %v2625 = vadd.f32 %v2304, %v2562
        %v2626 = vadd.f32 %v2305, %v2563
        %v2627 = vadd.f32 %v2306, %v2564
        %v2628 = vadd.f32 %v2307, %v2565
        %v2629 = vadd.f32 %v2308, %v2566
        %v2630 = vadd.f32 %v2309, %v2567
        %v2631 = vadd.f32 %v2310, %v2568
        %v2632 = vadd.f32 %v2311, %v2569
        %v2633 = vadd.f32 %v2312, %v2570
        %v2634 = vadd.f32 %v2313, %v2571
        %v2635 = vadd.f32 %v2314, %v2572
        %v2636 = vadd.f32 %v2315, %v2573
        %v2637 = vadd.f32 %v2316, %v2574
        %v2638 = vadd.f32 %v2317, %v2575
        %v2639 = vadd.f32 %v2318, %v2576
        %v2640 = vadd.f32 %v2319, %v2577
        %v2641 = vadd.f32 %v2320, %v2578
        %v2642 = vadd.f32 %v2321, %v2579
        %v2643 = vadd.f32 %v2322, %v2580
        %v2644 = vadd.f32 %v2323, %v2581
        %v2645 = vadd.f32 %v2324, %v2582
        %v2646 = vadd.f32 %v2325, %v2583
        %v2647 = vadd.f32 %v2326, %v2584
        %v2648 = vadd.f32 %v2327, %v2585
        %v2649 = vadd.f32 %v2328, %v2586
        %v2650 = vadd.f32 %v2329, %v2587
        %v2651 = vadd.f32 %v2330, %v2588
        %v2652 = vadd.f32 %v2331, %v2589
        %v2653 = vadd.f32 %v2332, %v2590
        %v2654 = vadd.f32 %v2333, %v2591
        %v2655 = vadd.f32 %v2334, %v2592
        %v2656 = vld [vmem:[#allocation2] sm:$0xff]
        %v2657 = vld [vmem:[#allocation2 + $0x8] sm:$0xff]
        %v2658 = vld [vmem:[#allocation2 + $0x10] sm:$0xff]
        %v2659 = vld [vmem:[#allocation2 + $0x18] sm:$0xff]
        %v2660 = vld [vmem:[#allocation2 + $0x20] sm:$0xff]
        %v2661 = vld [vmem:[#allocation2 + $0x28] sm:$0xff]
        %v2662 = vld [vmem:[#allocation2 + $0x30] sm:$0xff]
        %v2663 = vld [vmem:[#allocation2 + $0x38] sm:$0xff]
        %v2664 = vld [vmem:[#allocation2 + $0x40] sm:$0xff]
        %v2665 = vld [vmem:[#allocation2 + $0x48] sm:$0xff]
        %v2666 = vld [vmem:[#allocation2 + $0x50] sm:$0xff]
        %v2667 = vld [vmem:[#allocation2 + $0x58] sm:$0xff]
        %v2668 = vld [vmem:[#allocation2 + $0x60] sm:$0xff]
        %v2669 = vld [vmem:[#allocation2 + $0x68] sm:$0xff]
        %v2670 = vld [vmem:[#allocation2 + $0x70] sm:$0xff]
        %v2671 = vld [vmem:[#allocation2 + $0x78] sm:$0xff]
        %v2672 = vld [vmem:[#allocation2 + $0x80] sm:$0xff]
        %v2673 = vld [vmem:[#allocation2 + $0x88] sm:$0xff]
        %v2674 = vld [vmem:[#allocation2 + $0x90] sm:$0xff]
        %v2675 = vld [vmem:[#allocation2 + $0x98] sm:$0xff]
        %v2676 = vld [vmem:[#allocation2 + $0xa0] sm:$0xff]
        %v2677 = vld [vmem:[#allocation2 + $0xa8] sm:$0xff]
        %v2678 = vld [vmem:[#allocation2 + $0xb0] sm:$0xff]
        %v2679 = vld [vmem:[#allocation2 + $0xb8] sm:$0xff]
        %v2680 = vld [vmem:[#allocation2 + $0xc0] sm:$0xff]
        %v2681 = vld [vmem:[#allocation2 + $0xc8] sm:$0xff]
        %v2682 = vld [vmem:[#allocation2 + $0xd0] sm:$0xff]
        %v2683 = vld [vmem:[#allocation2 + $0xd8] sm:$0xff]
        %v2684 = vld [vmem:[#allocation2 + $0xe0] sm:$0xff]
        %v2685 = vld [vmem:[#allocation2 + $0xe8] sm:$0xff]
        %v2686 = vld [vmem:[#allocation2 + $0xf0] sm:$0xff]
        %v2687 = vld [vmem:[#allocation2 + $0xf8] sm:$0xff]
        %v2688 = vld [vmem:[#allocation2 + $0x100] sm:$0xff]
        %v2689 = vld [vmem:[#allocation2 + $0x108] sm:$0xff]
        %v2690 = vld [vmem:[#allocation2 + $0x110] sm:$0xff]
        %v2691 = vld [vmem:[#allocation2 + $0x118] sm:$0xff]
        %v2692 = vld [vmem:[#allocation2 + $0x120] sm:$0xff]
        %v2693 = vld [vmem:[#allocation2 + $0x128] sm:$0xff]
        %v2694 = vld [vmem:[#allocation2 + $0x130] sm:$0xff]
        %v2695 = vld [vmem:[#allocation2 + $0x138] sm:$0xff]
        %v2696 = vld [vmem:[#allocation2 + $0x140] sm:$0xff]
        %v2697 = vld [vmem:[#allocation2 + $0x148] sm:$0xff]
        %v2698 = vld [vmem:[#allocation2 + $0x150] sm:$0xff]
        %v2699 = vld [vmem:[#allocation2 + $0x158] sm:$0xff]
        %v2700 = vld [vmem:[#allocation2 + $0x160] sm:$0xff]
        %v2701 = vld [vmem:[#allocation2 + $0x168] sm:$0xff]
        %v2702 = vld [vmem:[#allocation2 + $0x170] sm:$0xff]
        %v2703 = vld [vmem:[#allocation2 + $0x178] sm:$0xff]
        %v2704 = vld [vmem:[#allocation2 + $0x180] sm:$0xff]
        %v2705 = vld [vmem:[#allocation2 + $0x188] sm:$0xff]
        %v2706 = vld [vmem:[#allocation2 + $0x190] sm:$0xff]
        %v2707 = vld [vmem:[#allocation2 + $0x198] sm:$0xff]
        %v2708 = vld [vmem:[#allocation2 + $0x1a0] sm:$0xff]
        %v2709 = vld [vmem:[#allocation2 + $0x1a8] sm:$0xff]
        %v2710 = vld [vmem:[#allocation2 + $0x1b0] sm:$0xff]
        %v2711 = vld [vmem:[#allocation2 + $0x1b8] sm:$0xff]
        %v2712 = vld [vmem:[#allocation2 + $0x1c0] sm:$0xff]
        %v2713 = vld [vmem:[#allocation2 + $0x1c8] sm:$0xff]
        %v2714 = vld [vmem:[#allocation2 + $0x1d0] sm:$0xff]
        %v2715 = vld [vmem:[#allocation2 + $0x1d8] sm:$0xff]
        %v2716 = vld [vmem:[#allocation2 + $0x1e0] sm:$0xff]
        %v2717 = vld [vmem:[#allocation2 + $0x1e8] sm:$0xff]
        %v2718 = vld [vmem:[#allocation2 + $0x1f0] sm:$0xff]
        %v2719 = vadd.f32 %v2656, %v2593
        %v2720 = vadd.f32 %v2657, %v2594
        %v2721 = vadd.f32 %v2658, %v2595
        %v2722 = vadd.f32 %v2659, %v2596
        %v2723 = vadd.f32 %v2660, %v2597
        %v2724 = vadd.f32 %v2661, %v2598
        %v2725 = vadd.f32 %v2662, %v2599
        %v2726 = vadd.f32 %v2663, %v2600
        %v2727 = vadd.f32 %v2664, %v2601
        %v2728 = vadd.f32 %v2665, %v2602
        %v2729 = vadd.f32 %v2666, %v2603
        %v2730 = vadd.f32 %v2667, %v2604
        %v2731 = vadd.f32 %v2668, %v2605
        %v2732 = vadd.f32 %v2669, %v2606
        %v2733 = vadd.f32 %v2670, %v2607
        %v2734 = vadd.f32 %v2671, %v2608
        %v2735 = vadd.f32 %v2672, %v2609
        %v2736 = vadd.f32 %v2673, %v2610
        %v2737 = vadd.f32 %v2674, %v2611
        %v2738 = vadd.f32 %v2675, %v2612
        %v2739 = vadd.f32 %v2676, %v2613
        %v2740 = vadd.f32 %v2677, %v2614
        %v2741 = vadd.f32 %v2678, %v2615
        %v2742 = vadd.f32 %v2679, %v2616
        %v2743 = vadd.f32 %v2680, %v2617
        %v2744 = vadd.f32 %v2681, %v2618
        %v2745 = vadd.f32 %v2682, %v2619
        %v2746 = vadd.f32 %v2683, %v2620
        %v2747 = vadd.f32 %v2684, %v2621
        %v2748 = vadd.f32 %v2685, %v2622
        %v2749 = vadd.f32 %v2686, %v2623
        %v2750 = vadd.f32 %v2687, %v2624
        %v2751 = vadd.f32 %v2688, %v2625
        %v2752 = vadd.f32 %v2689, %v2626
        %v2753 = vadd.f32 %v2690, %v2627
        %v2754 = vadd.f32 %v2691, %v2628
        %v2755 = vadd.f32 %v2692, %v2629
        %v2756 = vadd.f32 %v2693, %v2630
        %v2757 = vadd.f32 %v2694, %v2631
        %v2758 = vadd.f32 %v2695, %v2632
        %v2759 = vadd.f32 %v2696, %v2633
        %v2760 = vadd.f32 %v2697, %v2634
        %v2761 = vadd.f32 %v2698, %v2635
        %v2762 = vadd.f32 %v2699, %v2636
        %v2763 = vadd.f32 %v2700, %v2637
        %v2764 = vadd.f32 %v2701, %v2638
        %v2765 = vadd.f32 %v2702, %v2639
        %v2766 = vadd.f32 %v2703, %v2640
        %v2767 = vadd.f32 %v2704, %v2641
        %v2768 = vadd.f32 %v2705, %v2642
        %v2769 = vadd.f32 %v2706, %v2643
        %v2770 = vadd.f32 %v2707, %v2644
        %v2771 = vadd.f32 %v2708, %v2645
        %v2772 = vadd.f32 %v2709, %v2646
        %v2773 = vadd.f32 %v2710, %v2647
        %v2774 = vadd.f32 %v2711, %v2648
        %v2775 = vadd.f32 %v2712, %v2649
        %v2776 = vadd.f32 %v2713, %v2650
        %v2777 = vadd.f32 %v2714, %v2651
        %v2778 = vadd.f32 %v2715, %v2652
        %v2779 = vadd.f32 %v2716, %v2653
        %v2780 = vadd.f32 %v2717, %v2654
        %v2781 = vadd.f32 %v2718, %v2655
        %2782 = vst [vmem:[#allocation2] sm:$0xff] %v2719
        %2783 = vst [vmem:[#allocation2 + $0x8] sm:$0xff] %v2720
        %2784 = vst [vmem:[#allocation2 + $0x10] sm:$0xff] %v2721
        %2785 = vst [vmem:[#allocation2 + $0x18] sm:$0xff] %v2722
        %2786 = vst [vmem:[#allocation2 + $0x20] sm:$0xff] %v2723
        %2787 = vst [vmem:[#allocation2 + $0x28] sm:$0xff] %v2724
        %2788 = vst [vmem:[#allocation2 + $0x30] sm:$0xff] %v2725
        %2789 = vst [vmem:[#allocation2 + $0x38] sm:$0xff] %v2726
        %2790 = vst [vmem:[#allocation2 + $0x40] sm:$0xff] %v2727
        %2791 = vst [vmem:[#allocation2 + $0x48] sm:$0xff] %v2728
        %2792 = vst [vmem:[#allocation2 + $0x50] sm:$0xff] %v2729
        %2793 = vst [vmem:[#allocation2 + $0x58] sm:$0xff] %v2730
        %2794 = vst [vmem:[#allocation2 + $0x60] sm:$0xff] %v2731
        %2795 = vst [vmem:[#allocation2 + $0x68] sm:$0xff] %v2732
        %2796 = vst [vmem:[#allocation2 + $0x70] sm:$0xff] %v2733
        %2797 = vst [vmem:[#allocation2 + $0x78] sm:$0xff] %v2734
        %2798 = vst [vmem:[#allocation2 + $0x80] sm:$0xff] %v2735
        %2799 = vst [vmem:[#allocation2 + $0x88] sm:$0xff] %v2736
        %2800 = vst [vmem:[#allocation2 + $0x90] sm:$0xff] %v2737
        %2801 = vst [vmem:[#allocation2 + $0x98] sm:$0xff] %v2738
        %2802 = vst [vmem:[#allocation2 + $0xa0] sm:$0xff] %v2739
        %2803 = vst [vmem:[#allocation2 + $0xa8] sm:$0xff] %v2740
        %2804 = vst [vmem:[#allocation2 + $0xb0] sm:$0xff] %v2741
        %2805 = vst [vmem:[#allocation2 + $0xb8] sm:$0xff] %v2742
        %2806 = vst [vmem:[#allocation2 + $0xc0] sm:$0xff] %v2743
        %2807 = vst [vmem:[#allocation2 + $0xc8] sm:$0xff] %v2744
        %2808 = vst [vmem:[#allocation2 + $0xd0] sm:$0xff] %v2745
        %2809 = vst [vmem:[#allocation2 + $0xd8] sm:$0xff] %v2746
        %2810 = vst [vmem:[#allocation2 + $0xe0] sm:$0xff] %v2747
        %2811 = vst [vmem:[#allocation2 + $0xe8] sm:$0xff] %v2748
        %2812 = vst [vmem:[#allocation2 + $0xf0] sm:$0xff] %v2749
        %2813 = vst [vmem:[#allocation2 + $0xf8] sm:$0xff] %v2750
        %2814 = vst [vmem:[#allocation2 + $0x100] sm:$0xff] %v2751
        %2815 = vst [vmem:[#allocation2 + $0x108] sm:$0xff] %v2752
        %2816 = vst [vmem:[#allocation2 + $0x110] sm:$0xff] %v2753
        %2817 = vst [vmem:[#allocation2 + $0x118] sm:$0xff] %v2754
        %2818 = vst [vmem:[#allocation2 + $0x120] sm:$0xff] %v2755
        %2819 = vst [vmem:[#allocation2 + $0x128] sm:$0xff] %v2756
        %2820 = vst [vmem:[#allocation2 + $0x130] sm:$0xff] %v2757
        %2821 = vst [vmem:[#allocation2 + $0x138] sm:$0xff] %v2758
        %2822 = vst [vmem:[#allocation2 + $0x140] sm:$0xff] %v2759
        %2823 = vst [vmem:[#allocation2 + $0x148] sm:$0xff] %v2760
        %2824 = vst [vmem:[#allocation2 + $0x150] sm:$0xff] %v2761
        %2825 = vst [vmem:[#allocation2 + $0x158] sm:$0xff] %v2762
        %2826 = vst [vmem:[#allocation2 + $0x160] sm:$0xff] %v2763
        %2827 = vst [vmem:[#allocation2 + $0x168] sm:$0xff] %v2764
        %2828 = vst [vmem:[#allocation2 + $0x170] sm:$0xff] %v2765
        %2829 = vst [vmem:[#allocation2 + $0x178] sm:$0xff] %v2766
        %2830 = vst [vmem:[#allocation2 + $0x180] sm:$0xff] %v2767
        %2831 = vst [vmem:[#allocation2 + $0x188] sm:$0xff] %v2768
        %2832 = vst [vmem:[#allocation2 + $0x190] sm:$0xff] %v2769
        %2833 = vst [vmem:[#allocation2 + $0x198] sm:$0xff] %v2770
        %2834 = vst [vmem:[#allocation2 + $0x1a0] sm:$0xff] %v2771
        %2835 = vst [vmem:[#allocation2 + $0x1a8] sm:$0xff] %v2772
        %2836 = vst [vmem:[#allocation2 + $0x1b0] sm:$0xff] %v2773
        %2837 = vst [vmem:[#allocation2 + $0x1b8] sm:$0xff] %v2774
        %2838 = vst [vmem:[#allocation2 + $0x1c0] sm:$0xff] %v2775
        %2839 = vst [vmem:[#allocation2 + $0x1c8] sm:$0xff] %v2776
        %2840 = vst [vmem:[#allocation2 + $0x1d0] sm:$0xff] %v2777
        %2841 = vst [vmem:[#allocation2 + $0x1d8] sm:$0xff] %v2778
        %2842 = vst [vmem:[#allocation2 + $0x1e0] sm:$0xff] %v2779
        %2843 = vst [vmem:[#allocation2 + $0x1e8] sm:$0xff] %v2780
        %2844 = vst [vmem:[#allocation2 + $0x1f0] sm:$0xff] %v2781
        // Predicated region
        $region57: #{tpu_custom_call.1} parent=35 // pred_check
          %p2845 = pneg %p279
        $region58: #{tpu_custom_call.1} parent=35 // pred_check_branch
          %2847 = sbr.rel (%p2845) target = $region60
        $region59: #{tpu_custom_call.1} parent=35 // pred_region
          %v2848 = vld [vmem:[#allocation2] sm:$0xff]
          %v2849 = vadd.f32 %v2848, 0.0
          %v2850 = vld [vmem:[#allocation2 + $0x8] sm:$0xff]
          %v2851 = vadd.f32 %v2849, %v2850
          %v2852 = vld [vmem:[#allocation2 + $0x10] sm:$0xff]
          %v2853 = vadd.f32 %v2851, %v2852
          %v2854 = vld [vmem:[#allocation2 + $0x18] sm:$0xff]
          %v2855 = vadd.f32 %v2853, %v2854
          %v2856 = vld [vmem:[#allocation2 + $0x20] sm:$0xff]
          %v2857 = vadd.f32 %v2855, %v2856
          %v2858 = vld [vmem:[#allocation2 + $0x28] sm:$0xff]
          %v2859 = vadd.f32 %v2857, %v2858
          %v2860 = vld [vmem:[#allocation2 + $0x30] sm:$0xff]
          %v2861 = vadd.f32 %v2859, %v2860
          %v2862 = vld [vmem:[#allocation2 + $0x38] sm:$0xff]
          %v2863 = vadd.f32 %v2861, %v2862
          %v2864 = vld [vmem:[#allocation2 + $0x40] sm:$0xff]
          %v2865 = vadd.f32 %v2863, %v2864
          %v2866 = vld [vmem:[#allocation2 + $0x48] sm:$0xff]
          %v2867 = vadd.f32 %v2865, %v2866
          %v2868 = vld [vmem:[#allocation2 + $0x50] sm:$0xff]
          %v2869 = vadd.f32 %v2867, %v2868
          %v2870 = vld [vmem:[#allocation2 + $0x58] sm:$0xff]
          %v2871 = vadd.f32 %v2869, %v2870
          %v2872 = vld [vmem:[#allocation2 + $0x60] sm:$0xff]
          %v2873 = vadd.f32 %v2871, %v2872
          %v2874 = vld [vmem:[#allocation2 + $0x68] sm:$0xff]
          %v2875 = vadd.f32 %v2873, %v2874
          %v2876 = vld [vmem:[#allocation2 + $0x70] sm:$0xff]
          %v2877 = vadd.f32 %v2875, %v2876
          %v2878 = vld [vmem:[#allocation2 + $0x78] sm:$0xff]
          %v2879 = vadd.f32 %v2877, %v2878
          %v2880 = vld [vmem:[#allocation2 + $0x80] sm:$0xff]
          %v2881 = vadd.f32 %v2879, %v2880
          %v2882 = vld [vmem:[#allocation2 + $0x88] sm:$0xff]
          %v2883 = vadd.f32 %v2881, %v2882
          %v2884 = vld [vmem:[#allocation2 + $0x90] sm:$0xff]
          %v2885 = vadd.f32 %v2883, %v2884
          %v2886 = vld [vmem:[#allocation2 + $0x98] sm:$0xff]
          %v2887 = vadd.f32 %v2885, %v2886
          %v2888 = vld [vmem:[#allocation2 + $0xa0] sm:$0xff]
          %v2889 = vadd.f32 %v2887, %v2888
          %v2890 = vld [vmem:[#allocation2 + $0xa8] sm:$0xff]
          %v2891 = vadd.f32 %v2889, %v2890
          %v2892 = vld [vmem:[#allocation2 + $0xb0] sm:$0xff]
          %v2893 = vadd.f32 %v2891, %v2892
          %v2894 = vld [vmem:[#allocation2 + $0xb8] sm:$0xff]
          %v2895 = vadd.f32 %v2893, %v2894
          %v2896 = vld [vmem:[#allocation2 + $0xc0] sm:$0xff]
          %v2897 = vadd.f32 %v2895, %v2896
          %v2898 = vld [vmem:[#allocation2 + $0xc8] sm:$0xff]
          %v2899 = vadd.f32 %v2897, %v2898
          %v2900 = vld [vmem:[#allocation2 + $0xd0] sm:$0xff]
          %v2901 = vadd.f32 %v2899, %v2900
          %v2902 = vld [vmem:[#allocation2 + $0xd8] sm:$0xff]
          %v2903 = vadd.f32 %v2901, %v2902
          %v2904 = vld [vmem:[#allocation2 + $0xe0] sm:$0xff]
          %v2905 = vadd.f32 %v2903, %v2904
          %v2906 = vld [vmem:[#allocation2 + $0xe8] sm:$0xff]
          %v2907 = vadd.f32 %v2905, %v2906
          %v2908 = vld [vmem:[#allocation2 + $0xf0] sm:$0xff]
          %v2909 = vadd.f32 %v2907, %v2908
          %v2910 = vld [vmem:[#allocation2 + $0xf8] sm:$0xff]
          %v2911 = vadd.f32 %v2909, %v2910
          %v2912 = vld [vmem:[#allocation2 + $0x100] sm:$0xff]
          %v2913 = vadd.f32 %v2911, %v2912
          %v2914 = vld [vmem:[#allocation2 + $0x108] sm:$0xff]
          %v2915 = vadd.f32 %v2913, %v2914
          %v2916 = vld [vmem:[#allocation2 + $0x110] sm:$0xff]
          %v2917 = vadd.f32 %v2915, %v2916
          %v2918 = vld [vmem:[#allocation2 + $0x118] sm:$0xff]
          %v2919 = vadd.f32 %v2917, %v2918
          %v2920 = vld [vmem:[#allocation2 + $0x120] sm:$0xff]
          %v2921 = vadd.f32 %v2919, %v2920
          %v2922 = vld [vmem:[#allocation2 + $0x128] sm:$0xff]
          %v2923 = vadd.f32 %v2921, %v2922
          %v2924 = vld [vmem:[#allocation2 + $0x130] sm:$0xff]
          %v2925 = vadd.f32 %v2923, %v2924
          %v2926 = vld [vmem:[#allocation2 + $0x138] sm:$0xff]
          %v2927 = vadd.f32 %v2925, %v2926
          %v2928 = vld [vmem:[#allocation2 + $0x140] sm:$0xff]
          %v2929 = vadd.f32 %v2927, %v2928
          %v2930 = vld [vmem:[#allocation2 + $0x148] sm:$0xff]
          %v2931 = vadd.f32 %v2929, %v2930
          %v2932 = vld [vmem:[#allocation2 + $0x150] sm:$0xff]
          %v2933 = vadd.f32 %v2931, %v2932
          %v2934 = vld [vmem:[#allocation2 + $0x158] sm:$0xff]
          %v2935 = vadd.f32 %v2933, %v2934
          %v2936 = vld [vmem:[#allocation2 + $0x160] sm:$0xff]
          %v2937 = vadd.f32 %v2935, %v2936
          %v2938 = vld [vmem:[#allocation2 + $0x168] sm:$0xff]
          %v2939 = vadd.f32 %v2937, %v2938
          %v2940 = vld [vmem:[#allocation2 + $0x170] sm:$0xff]
          %v2941 = vadd.f32 %v2939, %v2940
          %v2942 = vld [vmem:[#allocation2 + $0x178] sm:$0xff]
          %v2943 = vadd.f32 %v2941, %v2942
          %v2944 = vld [vmem:[#allocation2 + $0x180] sm:$0xff]
          %v2945 = vadd.f32 %v2943, %v2944
          %v2946 = vld [vmem:[#allocation2 + $0x188] sm:$0xff]
          %v2947 = vadd.f32 %v2945, %v2946
          %v2948 = vld [vmem:[#allocation2 + $0x190] sm:$0xff]
          %v2949 = vadd.f32 %v2947, %v2948
          %v2950 = vld [vmem:[#allocation2 + $0x198] sm:$0xff]
          %v2951 = vadd.f32 %v2949, %v2950
          %v2952 = vld [vmem:[#allocation2 + $0x1a0] sm:$0xff]
          %v2953 = vadd.f32 %v2951, %v2952
          %v2954 = vld [vmem:[#allocation2 + $0x1a8] sm:$0xff]
          %v2955 = vadd.f32 %v2953, %v2954
          %v2956 = vld [vmem:[#allocation2 + $0x1b0] sm:$0xff]
          %v2957 = vadd.f32 %v2955, %v2956
          %v2958 = vld [vmem:[#allocation2 + $0x1b8] sm:$0xff]
          %v2959 = vadd.f32 %v2957, %v2958
          %v2960 = vld [vmem:[#allocation2 + $0x1c0] sm:$0xff]
          %v2961 = vadd.f32 %v2959, %v2960
          %v2962 = vld [vmem:[#allocation2 + $0x1c8] sm:$0xff]
          %v2963 = vadd.f32 %v2961, %v2962
          %v2964 = vld [vmem:[#allocation2 + $0x1d0] sm:$0xff]
          %v2965 = vadd.f32 %v2963, %v2964
          %v2966 = vld [vmem:[#allocation2 + $0x1d8] sm:$0xff]
          %v2967 = vadd.f32 %v2965, %v2966
          %v2968 = vld [vmem:[#allocation2 + $0x1e0] sm:$0xff]
          %v2969 = vadd.f32 %v2967, %v2968
          %v2970 = vld [vmem:[#allocation2 + $0x1e8] sm:$0xff]
          %v2971 = vadd.f32 %v2969, %v2970
          %v2972 = vld [vmem:[#allocation2 + $0x1f0] sm:$0xff]
          %v2973 = vadd.f32 %v2971, %v2972
          %2974 = vst [vmem:[%s276] sm:$0xff] %v2973
        $region60: #{tpu_custom_call.1} parent=35 // pred_fallthru
          _
        %s2975 = sand.u32 %s134, 1
        %s2976 = scalar_lea.sflag [#allocation5], %s2975
        %s2977 = sand.u32 %s134, 1
        %s2978 = smul.addr %s2977, 8
        %s2979 = scalar_lea.vmem [#allocation11], %s2978
        // Predicated region
        $region61: #{tpu_custom_call.1} parent=35 // pred_check
          %p2980 = pneg %p144
        $region62: #{tpu_custom_call.1} parent=35 // pred_check_branch
          %2982 = sbr.rel (%p2980) target = $region64
        $region63: #{tpu_custom_call.1} parent=35 // pred_region
          %2984 = vsyncadd %s2976, 0
          %s2985 = smul.addr %s27, 8
          %s2986 = scalar_lea.hbm %s4, %s2985
          %s2988 = sshll.u32 %s2979, 4
          %s2989 = int_to_ptr.vmem [resolvable:$true] %s2988
          %s2990 = sshll.u32 %s2986, 4
          %s2991 = int_to_ptr.hbm [resolvable:$true] %s2990
          %2993 = dma.vmem_to_hbm [thread:$0]  %s2989, 128, %s2991, %s2976
        $region64: #{tpu_custom_call.1} parent=35 // pred_fallthru
          _
      $region36: #{tpu_custom_call.1} parent=5 // pred_fallthru
        _
      %p2994 = scmp.le.s32.totalorder 2, %s18
      // Predicated region
      $region65: #{tpu_custom_call.1} parent=5 // pred_check
        %p2995 = pneg %p2994
      $region66: #{tpu_custom_call.1} parent=5 // pred_check_branch
        %2997 = sbr.rel (%p2995) target = $region68
      $region67: #{tpu_custom_call.1} parent=5 // pred_region
        %s2998 = ssub.s32 %s18, 2
        // Predicated region
        $region69: #{tpu_custom_call.1} parent=67 // pred_check
          %p2999 = pneg %p150
        $region70: #{tpu_custom_call.1} parent=67 // pred_check_branch
          %3001 = sbr.rel (%p2999) target = $region72
        $region71: #{tpu_custom_call.1} parent=67 // pred_region
          %s3002 = sand.u32 %s135, 1
          %s3003 = scalar_lea.sflag [#allocation5], %s3002
          %s3004 = sand.u32 %s135, 1
          %s3005 = smul.addr %s3004, 8
          %s3006 = scalar_lea.vmem [#allocation11], %s3005
          %3008 = dma.done %s3003, 128
        $region72: #{tpu_custom_call.1} parent=67 // pred_fallthru
          _
      $region68: #{tpu_custom_call.1} parent=5 // pred_fallthru
        _
    $region6: #{tpu_custom_call.1} parent=1 // loop_footer
      %s22 = sadd.s32 1, %s18
    $region7: #{tpu_custom_call.1} parent=1 // loop_footer_branch
      %17 = sbr.rel target = $region3
    $region8: #{tpu_custom_call.1} parent=1 // loop_exit
      _
    %3009 = vsyncpa [#allocation4], 1
    %s3010 = scalar_lea.sflag [#allocation4], 1
    %3011 = vsyncpa %s3010, 1
    %3012 = vsyncpa [#allocation7], 1
    %3013 = vsyncpa [#allocation10], 1
    %3014 = vsyncpa [#allocation5], 1
    %s3015 = scalar_lea.sflag [#allocation5], 1
    %3016 = vsyncpa %s3015, 1

</llo_original>
